<compile_context>
chip_gen: v7x
topology: tpu7x:2x2x1
jax: 0.10.0
libtpu: 0.0.40
codegen_flags: <defaults>
</compile_context>

<pallas_src>
import functools
import math

import jax
import jax.numpy as jnp
import numpy as np
from jax.experimental import pallas as pl
from jax.experimental.pallas import tpu as pltpu

# ---------------- static model configuration (default_args not provided) ----------
ACTION_SIZE = 2
HIDDEN = 32                 # args.hidden_size
IMAGE = 8                   # args.image_size  -> exactly 2 conv/pool stages
C_IN, C_MID = 4, 16
EPISODES, STEPS = 8, 2      # demo batch
STD_MIN, STD_MAX = 0.01, 2.0        # assumed args.std_min / args.std_max
MIN_SPEED, MAX_SPEED = 0.0, 1.0     # assumed args.min_speed / args.max_speed

LANE = 128                  # TPU lane width; every packed block is 128-lane aligned
EB = 8                      # episodes per grid tile (multiple of 8 sublanes)
HEAD_W = 2 * LANE           # fused mu|std head output width
GATES_W = 2 * LANE          # GRU gate slab: block A = [r|_|n|_], block B = [z|...]
SPEED_LANE = 64             # aux block: noise@[0:2], speed@64, prev_action@[65:67]

HW1 = IMAGE * IMAGE                     # 64
F_RGBD = C_IN * HW1                     # 256   flattened CHW frame
F_C1 = C_MID * HW1                      # 1024  conv1 output
HP1 = (IMAGE - 1) // 2 + 1              # 4
F_P1 = C_MID * HP1 * HP1                # 256   pool1 output (= conv2 in/out)
HP2 = (HP1 - 1) // 2 + 1                # 2
LATENT = C_MID * HP2 * HP2              # 64    pool2 output (torch .flatten(2))
X_WIDTH = F_RGBD + LANE                 # 384   packed per-frame input slab

assert int(math.log2(IMAGE)) - 2 == 1   # kernel is specialised to 2 conv/pool stages
assert F_RGBD == F_P1                   # conv1 and the fused pool2-linear share rows

# packed weight slab (128, W_TOT) lane offsets
W_AUX = 0
W_IH = W_AUX + LANE
W_HH = W_IH + GATES_W
W_HD = W_HH + GATES_W
W_TOT = W_HD + HEAD_W                   # 896

# packed bias slab (1, B_TOT) lane offsets
B_C1 = 0
B_C2 = B_C1 + F_C1
B_FEAT = B_C2 + F_P1
B_IH = B_FEAT + LANE
B_HH = B_IH + GATES_W
B_HD = B_HH + GATES_W
B_TOT = B_HD + HEAD_W                   # 2176

_HALF_LOG_2PI = 0.5 * float(np.log(2.0 * np.pi))


# ------------------------------- the kernel ---------------------------------------
def _actor_kernel(T, scal_ref, x_ref, h0_ref, opsA_ref, opsB_ref, w_ref, b_ref,
                  al_ref, h_ref):
    f32 = jnp.float32
    bf16 = jnp.bfloat16

    # PReLU alphas + misc scalars in SMEM -> scalar (sreg) reads.
    a_c1, a_c2 = scal_ref[0], scal_ref[1]
    a_rl, a_sp, a_ac, a_h = scal_ref[2], scal_ref[3], scal_ref[4], scal_ref[5]
    std_min, std_max = scal_ref[6], scal_ref[7]
    min_spd, inv_rng = scal_ref[8], scal_ref[9]

    def prelu(v, a):
        return jnp.where(v >= 0.0, v, a * v)

    def softplus(v):                     # numerically stable Softplus
        return jnp.maximum(v, 0.0) + jnp.log1p(jnp.exp(-jnp.abs(v)))

    def sigmoid(v):                      # EUP exp + EUP approx reciprocal (no VPU divide)
        return pl.reciprocal(1.0 + jnp.exp(-v), approx=True)

    lane = jax.lax.broadcasted_iota(jnp.int32, (1, LANE), 1)

    x_all = x_ref[...]                                        # (T*EB, 384) f32
    rgbd = (x_all[:, 0:F_RGBD] * 2.0 - 1.0).astype(bf16)      # torch: rgbd * 2 - 1
    aux = x_all[:, F_RGBD:F_RGBD + LANE]                      # noise@[0:2], speed@64,
                                                              # prev_action@[65:67]

    # ---- RGBD_IN: conv1 -> PReLU -> (pool1∘conv2) -> PReLU -> (pool2∘rgbd_in_lin) ----
    c1 = prelu(jnp.dot(rgbd, opsA_ref[:, 0:F_C1], preferred_element_type=f32)
               + b_ref[0:1, B_C1:B_C1 + F_C1], a_c1)                   # (T*EB, 1024)
    c2 = prelu(jnp.dot(c1.astype(bf16), opsB_ref[...], preferred_element_type=f32)
               + b_ref[0:1, B_C2:B_C2 + F_P1], a_c2)                   # (T*EB, 256)
    feat_rl = jnp.dot(c2.astype(bf16), opsA_ref[:, F_C1:F_C1 + LANE],
                      preferred_element_type=f32)                      # lanes [0:32] real

    # ---- spe_in | action_in fused via one aux matmul; speed normalisation ----------
    aux_n = jnp.where(lane == SPEED_LANE, (aux - min_spd) * inv_rng, aux)
    feat = (feat_rl
            + jnp.dot(aux_n.astype(bf16), w_ref[:, W_AUX:W_AUX + LANE],
                      preferred_element_type=f32)
            + b_ref[0:1, B_FEAT:B_FEAT + LANE])
    alpha_vec = jnp.where(lane < HIDDEN, a_rl,
                          jnp.where(lane < 2 * HIDDEN, a_sp, a_ac))
    gru_in = jnp.where(feat >= 0.0, feat, alpha_vec * feat)   # == cat(rgbd,spe,act) feats

    # ---- GRU x-gates for all steps in one matmul ------------------------------------
    xg = (jnp.dot(gru_in.astype(bf16), w_ref[:, W_IH:W_IH + GATES_W],
                  preferred_element_type=f32)
          + b_ref[0:1, B_IH:B_IH + GATES_W])                  # (T*EB, 256)
    w_hh = w_ref[:, W_HH:W_HH + GATES_W]
    b_hh = b_ref[0:1, B_HH:B_HH + GATES_W]

    # ---- GRU over time (rows are tile/time-major: row = t*EB + ep) -------------------
    # Gate slab: block A = r@[0:32], n@[64:96]; block B = z@[0:32].  All realignments
    # are 64-lane rotations of a 128-lane block (self-inverse -> direction agnostic).
    # TODO(synk): for large T switch to lax.fori_loop(unroll=k) and stream xg per step.
    h = h0_ref[...]                                           # (EB, 128), zero-padded
    for t in range(T):                                        # T static -> unrolled
        r0, r1 = t * EB, (t + 1) * EB
        hg = jnp.dot(h.astype(bf16), w_hh, preferred_element_type=f32) + b_hh
        xgA, xgB = xg[r0:r1, 0:LANE], xg[r0:r1, LANE:GATES_W]
        hgA, hgB = hg[:, 0:LANE], hg[:, LANE:GATES_W]
        sA = sigmoid(xgA + hgA)                               # r valid @[0:32]
        z = sigmoid(xgB + hgB)                                # z valid @[0:32]
        r_on_n = pltpu.roll(sA, 2 * HIDDEN, axis=1)           # r -> lanes [64:96]
        nA = jnp.tanh(xgA + r_on_n * hgA)                     # n valid @[64:96]
        n = pltpu.roll(nA, 2 * HIDDEN, axis=1)                # n -> lanes [0:32]
        h = jnp.where(lane < HIDDEN, (1.0 - z) * n + z * h, 0.0)
        h_ref[r0:r1, :] = h                                   # GRU output sequence

    # ---- h_in PReLU, fused mu|std head, sample, squash, log-prob -------------------
    relu_h = prelu(h_ref[...], a_h)
    heads = (jnp.dot(relu_h.astype(bf16), w_ref[:, W_HD:W_HD + HEAD_W],
                     preferred_element_type=f32)
             + b_ref[0:1, B_HD:B_HD + HEAD_W])                # [mu | std_pre] (T*EB, 256)
    mu = heads[:, 0:LANE]
    std = jnp.clip(softplus(heads[:, LANE:2 * LANE]), std_min, std_max)
    e = aux                                                   # lanes [0:A) = N(0,1) noise
    xs = mu + e * std                                         # reparameterised sample
    action = jnp.tanh(xs)
    # Normal(mu, std).log_prob(xs): (xs - mu) / std == e exactly -> no divide needed.
    # The 1e-6 epsilon form is kept to match the PyTorch reference exactly.
    lp = (-0.5 * e * e - jnp.log(std) - _HALF_LOG_2PI
          - jnp.log(1.0 - action * action + 1e-6))
    lp_mean = jnp.sum(jnp.where(lane < ACTION_SIZE, lp, 0.0), axis=-1,
                      keepdims=True) * (1.0 / ACTION_SIZE)    # torch.mean over actions
    # one lane-dense output slab: lanes [0, A) = action, lanes [A, 128) = log_prob
    al_ref[...] = jnp.where(lane < ACTION_SIZE, action, lp_mean)


# ------------------------------- wrapper -------------------------------------------
def actor_forward(params, rgbd, spe, prev_action, noise, h0=None):
    """Faithful port of Actor.forward -> (action, log_prob, h)."""
    if rgbd.ndim == 4:
        rgbd = rgbd[:, None]
    if spe.ndim == 2:
        spe = spe[:, None]
    if prev_action.ndim == 2:
        prev_action = prev_action[:, None]
    B, T = rgbd.shape[0], rgbd.shape[1]
    assert B % EB == 0, "episode count must be a multiple of the 8-row episode tile"
    n_tiles = B // EB
    rows = T * EB

    # wrapper-side layout plumbing only: NHWC->NCHW flatten + tile/time-major row order.
    rgbd_flat = jnp.transpose(rgbd, (0, 1, 4, 2, 3)).reshape(B, T, F_RGBD)
    aux = jnp.zeros((B, T, LANE), jnp.float32)
    aux = aux.at[..., 0:ACTION_SIZE].set(noise.astype(jnp.float32))
    aux = aux.at[..., SPEED_LANE:SPEED_LANE + 1].set(spe.astype(jnp.float32))
    aux = aux.at[..., SPEED_LANE + 1:SPEED_LANE + 1 + ACTION_SIZE].set(
        prev_action.astype(jnp.float32))
    # TODO(synk): noise could be drawn in-kernel with pltpu.prng_seed/prng_random_bits;
    # it is kept host-side so the sampling semantics stay explicit.

    def to_tiles(v):       # (B, T, F) -> (B*T, F), row = tile*(T*EB) + t*EB + ep_in_tile
        return jnp.transpose(v.reshape(n_tiles, EB, T, v.shape[-1]),
                             (0, 2, 1, 3)).reshape(B * T, v.shape[-1])

    def from_tiles(v):     # inverse of to_tiles
        return jnp.transpose(v.reshape(n_tiles, T, EB, v.shape[-1]),
                             (0, 2, 1, 3)).reshape(B, T, v.shape[-1])

    x_in = to_tiles(jnp.concatenate([rgbd_flat.astype(jnp.float32), aux], axis=-1))

    h0p = jnp.zeros((B, LANE), jnp.float32)
    if h0 is not None:
        h0p = h0p.at[:, 0:HIDDEN].set(h0.reshape(B, HIDDEN).astype(jnp.float32))

    resident = lambda shape: pl.BlockSpec(shape, lambda i: (0, 0))  # fetched once

    out_al, out_h = pl.pallas_call(
        functools.partial(_actor_kernel, T),
        out_shape=(jax.ShapeDtypeStruct((B * T, LANE), jnp.float32),  # [action | log_prob]
                   jax.ShapeDtypeStruct((B * T, LANE), jnp.float32)), # GRU h sequence
        grid=(n_tiles,),
        in_specs=[
            pl.BlockSpec((16,), lambda i: (0,),
                         memory_space=pltpu.MemorySpace.SMEM),        # scalars
            pl.BlockSpec((rows, X_WIDTH), lambda i: (i, 0)),          # per-frame inputs
            pl.BlockSpec((EB, LANE), lambda i: (i, 0)),               # h0
            resident((F_RGBD, F_C1 + LANE)),                          # [conv1 | pool2∘lin]
            resident((F_C1, F_P1)),                                   # pool1∘conv2
            resident((LANE, W_TOT)),                                  # packed weights
            resident((1, B_TOT)),                                     # packed biases
        ],
        out_specs=(pl.BlockSpec((rows, LANE), lambda i: (i, 0)),
                   pl.BlockSpec((rows, LANE), lambda i: (i, 0))),
        compiler_params=pltpu.CompilerParams(
            dimension_semantics=("parallel",)),   # episode tiles shard over TCs on v7x
    )(params["scal"], x_in, h0p, params["opsA"], params["opsB"],
      params["w128"], params["bias"])

    action = from_tiles(out_al)[..., 0:ACTION_SIZE]
    log_prob = from_tiles(out_al)[..., ACTION_SIZE:ACTION_SIZE + 1]
    h_seq = from_tiles(out_h)[..., 0:HIDDEN]
    return action, log_prob, h_seq


actor_forward = jax.jit(actor_forward)


# ------------------- parameter construction (host side, deterministic) -------------
def _reflect(i, n):
    if i < 0:
        return -i
    if i >= n:
        return 2 * n - 2 - i
    return i


def _conv3x3_reflect_dense(w, b, H, W):
    """Exact dense operator of Conv2d(3x3, padding=1, padding_mode='reflect')."""
    cout, cin = w.shape[0], w.shape[1]
    M = np.zeros((cin * H * W, cout * H * W), np.float32)
    for co in range(cout):
        for ci in range(cin):
            for dy in range(3):
                for dx in range(3):
                    wv = float(w[co, ci, dy, dx])
                    for oy in range(H):
                        iy = _reflect(oy + dy - 1, H)
                        for ox in range(W):
                            ix = _reflect(ox + dx - 1, W)
                            M[ci * H * W + iy * W + ix,
                              co * H * W + oy * W + ox] += wv
    b_full = np.repeat(np.asarray(b, np.float32), H * W)
    return M, b_full


def _avgpool3x3s2p1_dense(C, H, W):
    """Exact dense operator of AvgPool2d(3, stride=2, padding=1) (count_include_pad)."""
    Ho, Wo = (H - 1) // 2 + 1, (W - 1) // 2 + 1
    M = np.zeros((C * H * W, C * Ho * Wo), np.float32)
    for c in range(C):
        for oy in range(Ho):
            for ox in range(Wo):
                for dy in range(3):
                    iy = 2 * oy + dy - 1
                    if iy < 0 or iy >= H:
                        continue
                    for dx in range(3):
                        ix = 2 * ox + dx - 1
                        if ix < 0 or ix >= W:
                            continue
                        M[c * H * W + iy * W + ix,
                          c * Ho * Wo + oy * Wo + ox] += 1.0 / 9.0
    return M, Ho, Wo


def build_params(key):
    ks = jax.random.split(key, 32)
    it = iter(range(32))

    def u(shape, bound):
        return np.asarray(jax.random.uniform(ks[next(it)], shape, jnp.float32,
                                             -bound, bound))

    # --- RGBD_IN conv stack -> exact dense operators, adjacent linear stages fused ---
    kb = 1.0 / math.sqrt(C_IN * 9)
    wc1, bc1 = u((C_MID, C_IN, 3, 3), kb), u((C_MID,), kb)
    kb = 1.0 / math.sqrt(C_MID * 9)
    wc2, bc2 = u((C_MID, C_MID, 3, 3), kb), u((C_MID,), kb)
    M1, b1f = _conv3x3_reflect_dense(wc1, bc1, IMAGE, IMAGE)          # (256,1024)
    P1, h1, w1 = _avgpool3x3s2p1_dense(C_MID, IMAGE, IMAGE)           # (1024,256)
    M2, b2f = _conv3x3_reflect_dense(wc2, bc2, h1, w1)                # (256,256)
    P2, h2, w2 = _avgpool3x3s2p1_dense(C_MID, h1, w1)                 # (256,64)
    assert C_MID * h2 * w2 == LATENT

    lb = 1.0 / math.sqrt(LATENT)
    w_rl, b_rl = u((LATENT, HIDDEN), lb), u((HIDDEN,), lb)            # rgbd_in_lin
    PC = P1 @ M2                                                      # pool1∘conv2
    PR = np.zeros((F_P1, LANE), np.float32)
    PR[:, 0:HIDDEN] = P2 @ w_rl                                       # pool2∘rgbd_in_lin
    opsA = np.concatenate([M1, PR], axis=1)                           # (256, 1152)
    opsB = PC                                                         # (1024, 256)
    assert opsA.shape == (F_RGBD, F_C1 + LANE) and opsB.shape == (F_C1, F_P1)

    # --- spe_in / action_in mapped from the aux block --------------------------------
    w_sp, b_sp = u((1, HIDDEN), 1.0), u((HIDDEN,), 1.0)
    ab = 1.0 / math.sqrt(ACTION_SIZE)
    w_ac, b_ac = u((ACTION_SIZE, HIDDEN), ab), u((HIDDEN,), ab)
    W_aux = np.zeros((LANE, LANE), np.float32)
    W_aux[SPEED_LANE, HIDDEN:2 * HIDDEN] = w_sp[0]                    # spe  -> lanes [32,64)
    W_aux[SPEED_LANE + 1:SPEED_LANE + 1 + ACTION_SIZE,
          2 * HIDDEN:3 * HIDDEN] = w_ac                               # act  -> lanes [64,96)
    b_feat = np.zeros((LANE,), np.float32)
    b_feat[0:HIDDEN] = b_rl
    b_feat[HIDDEN:2 * HIDDEN] = b_sp
    b_feat[2 * HIDDEN:3 * HIDDEN] = b_ac

    # --- GRU (gate order r, z, n); slab A = r@[0:32], n@[64:96]; slab B = z@[0:32] ----
    gb = 1.0 / math.sqrt(HIDDEN)
    IN3 = 3 * HIDDEN
    W_ih_s = np.zeros((LANE, GATES_W), np.float32)
    W_hh_s = np.zeros((LANE, GATES_W), np.float32)
    b_ih_s = np.zeros((GATES_W,), np.float32)
    b_hh_s = np.zeros((GATES_W,), np.float32)
    gate_col = {"r": 0, "z": LANE, "n": 2 * HIDDEN}
    for g in ("r", "z", "n"):
        c0 = gate_col[g]
        W_ih_s[0:IN3, c0:c0 + HIDDEN] = u((IN3, HIDDEN), gb)
        W_hh_s[0:HIDDEN, c0:c0 + HIDDEN] = u((HIDDEN, HIDDEN), gb)
        b_ih_s[c0:c0 + HIDDEN] = u((HIDDEN,), gb)
        b_hh_s[c0:c0 + HIDDEN] = u((HIDDEN,), gb)

    # --- fused mu|std heads -----------------------------------------------------------
    W_hd = np.zeros((LANE, HEAD_W), np.float32)
    b_hd = np.zeros((HEAD_W,), np.float32)
    W_hd[0:HIDDEN, 0:ACTION_SIZE] = u((HIDDEN, ACTION_SIZE), gb)             # mu
    b_hd[0:ACTION_SIZE] = u((ACTION_SIZE,), gb)
    W_hd[0:HIDDEN, LANE:LANE + ACTION_SIZE] = u((HIDDEN, ACTION_SIZE), gb)   # std (pre-softplus)
    b_hd[LANE:LANE + ACTION_SIZE] = u((ACTION_SIZE,), gb)

    w128 = np.concatenate([W_aux, W_ih_s, W_hh_s, W_hd], axis=1)
    assert w128.shape == (LANE, W_TOT)
    bias = np.concatenate([b1f, b2f, b_feat, b_ih_s, b_hh_s, b_hd])[None, :]
    assert bias.shape == (1, B_TOT)

    scal = np.zeros((16,), np.float32)
    scal[0:6] = 0.25                         # nn.PReLU() default init (6 PReLUs)
    scal[6], scal[7] = STD_MIN, STD_MAX
    scal[8], scal[9] = MIN_SPEED, 1.0 / (MAX_SPEED - MIN_SPEED)

    # weight slabs in bf16 (MXU operands); biases/scalars stay f32 (f32 accumulate).
    return dict(scal=jnp.asarray(scal),
                opsA=jnp.asarray(opsA, jnp.bfloat16),
                opsB=jnp.asarray(opsB, jnp.bfloat16),
                w128=jnp.asarray(w128, jnp.bfloat16),
                bias=jnp.asarray(bias, jnp.float32))


# ------------------------------------- demo ----------------------------------------
if __name__ == "__main__":
    key = jax.random.PRNGKey(0)
    kp, kr, ksp, ka, kn = jax.random.split(key, 5)

    params = build_params(kp)
    rgbd = jax.random.uniform(kr, (EPISODES, STEPS, IMAGE, IMAGE, C_IN), jnp.float32)
    spe = jax.random.uniform(ksp, (EPISODES, STEPS, 1), jnp.float32,
                             MIN_SPEED, MAX_SPEED)
    prev_action = jax.random.uniform(ka, (EPISODES, STEPS, ACTION_SIZE),
                                     jnp.float32, -1.0, 1.0)
    noise = jax.random.normal(kn, (EPISODES, STEPS, ACTION_SIZE), jnp.float32)

    action, log_prob, h = actor_forward(params, rgbd, spe, prev_action, noise)
    jax.block_until_ready((action, log_prob, h))

    assert action.shape == (EPISODES, STEPS, ACTION_SIZE)
    assert log_prob.shape == (EPISODES, STEPS, 1)
    assert h.shape == (EPISODES, STEPS, HIDDEN)
    assert bool(jnp.all(jnp.isfinite(action)))
    assert bool(jnp.all(jnp.abs(action) <= 1.0))
    assert bool(jnp.all(jnp.isfinite(log_prob)))
    assert bool(jnp.all(jnp.isfinite(h)))
    print("KERNEL_OK")
</pallas_src>

<mosaic_0001>
module attributes {stable_mosaic.version = 11 : i64} {
  func.func @_actor_kernel(%arg0: i32, %arg1: memref<16xf32, #tpu.memory_space<smem>>, %arg2: memref<16x384xf32, #tpu.memory_space<vmem>>, %arg3: memref<8x128xf32, #tpu.memory_space<vmem>>, %arg4: memref<256x1152xbf16, #tpu.memory_space<vmem>>, %arg5: memref<1024x256xbf16, #tpu.memory_space<vmem>>, %arg6: memref<128x896xbf16, #tpu.memory_space<vmem>>, %arg7: memref<1x2176xf32, #tpu.memory_space<vmem>>, %arg8: memref<16x128xf32, #tpu.memory_space<vmem>>, %arg9: memref<16x128xf32, #tpu.memory_space<vmem>>) attributes {dimension_semantics = [#tpu.dimension_semantics<parallel>], iteration_bounds = array<i64: 1>, scalar_prefetch = 0 : i64, scratch_operands = 0 : i64, tpu.core_type = #tpu.core_type<tc>, window_params = [{transform_indices = @transform_0, window_bounds = array<i64: 16>}, {transform_indices = @transform_1, window_bounds = array<i64: 16, 384>}, {transform_indices = @transform_2, window_bounds = array<i64: 8, 128>}, {pipeline_mode = #tpu.pipeline_mode<synchronous>, transform_indices = @transform_3, window_bounds = array<i64: 256, 1152>}, {pipeline_mode = #tpu.pipeline_mode<synchronous>, transform_indices = @transform_4, window_bounds = array<i64: 1024, 256>}, {pipeline_mode = #tpu.pipeline_mode<synchronous>, transform_indices = @transform_5, window_bounds = array<i64: 128, 896>}, {pipeline_mode = #tpu.pipeline_mode<synchronous>, transform_indices = @transform_6, window_bounds = array<i64: 1, 2176>}, {transform_indices = @transform_7, window_bounds = array<i64: 16, 128>}, {transform_indices = @transform_8, window_bounds = array<i64: 16, 128>}]} {
    %c0 = arith.constant 0 : index
    %0 = memref.load %arg1[%c0] : memref<16xf32, #tpu.memory_space<smem>>
    %c1 = arith.constant 1 : index
    %1 = memref.load %arg1[%c1] : memref<16xf32, #tpu.memory_space<smem>>
    %c2 = arith.constant 2 : index
    %2 = memref.load %arg1[%c2] : memref<16xf32, #tpu.memory_space<smem>>
    %c3 = arith.constant 3 : index
    %3 = memref.load %arg1[%c3] : memref<16xf32, #tpu.memory_space<smem>>
    %c4 = arith.constant 4 : index
    %4 = memref.load %arg1[%c4] : memref<16xf32, #tpu.memory_space<smem>>
    %c5 = arith.constant 5 : index
    %5 = memref.load %arg1[%c5] : memref<16xf32, #tpu.memory_space<smem>>
    %c6 = arith.constant 6 : index
    %6 = memref.load %arg1[%c6] : memref<16xf32, #tpu.memory_space<smem>>
    %c7 = arith.constant 7 : index
    %7 = memref.load %arg1[%c7] : memref<16xf32, #tpu.memory_space<smem>>
    %c8 = arith.constant 8 : index
    %8 = memref.load %arg1[%c8] : memref<16xf32, #tpu.memory_space<smem>>
    %c9 = arith.constant 9 : index
    %9 = memref.load %arg1[%c9] : memref<16xf32, #tpu.memory_space<smem>>
    %10 = tpu.iota {dimensions = array<i32: 1>} : vector<1x128xi32>
    %c0_0 = arith.constant 0 : index
    %c0_1 = arith.constant 0 : index
    %11 = vector.load %arg2[%c0_0, %c0_1] : memref<16x384xf32, #tpu.memory_space<vmem>>, vector<16x384xf32>
    %12 = vector.extract_strided_slice %11 {offsets = [0, 0], sizes = [16, 256], strides = [1, 1]} : vector<16x384xf32> to vector<16x256xf32>
    %cst = arith.constant 2.000000e+00 : f32
    %13 = vector.broadcast %cst : f32 to vector<16x256xf32>
    %14 = arith.mulf %12, %13 : vector<16x256xf32>
    %cst_2 = arith.constant 1.000000e+00 : f32
    %15 = vector.broadcast %cst_2 : f32 to vector<16x256xf32>
    %16 = arith.subf %14, %15 : vector<16x256xf32>
    %17 = arith.truncf %16 : vector<16x256xf32> to vector<16x256xbf16>
    %18 = vector.extract_strided_slice %11 {offsets = [0, 256], sizes = [16, 128], strides = [1, 1]} : vector<16x384xf32> to vector<16x128xf32>
    %c0_3 = arith.constant 0 : index
    %c0_4 = arith.constant 0 : index
    %19 = vector.load %arg4[%c0_3, %c0_4] : memref<256x1152xbf16, #tpu.memory_space<vmem>>, vector<256x1024xbf16>
    %cst_5 = arith.constant dense<0.000000e+00> : vector<16x1024xf32>
    %20 = tpu.matmul %17, %19, %cst_5 {dimension_numbers = #tpu.dot_dimension_numbers<[1], [0], [0], [1], [0, 0, 1, 1], [], []>} : vector<16x256xbf16>, vector<256x1024xbf16>, vector<16x1024xf32> -> vector<16x1024xf32>
    %c0_6 = arith.constant 0 : index
    %c0_7 = arith.constant 0 : index
    %21 = vector.load %arg7[%c0_6, %c0_7] : memref<1x2176xf32, #tpu.memory_space<vmem>>, vector<1x1024xf32>
    %22 = vector.broadcast %21 : vector<1x1024xf32> to vector<16x1024xf32>
    %23 = arith.addf %20, %22 : vector<16x1024xf32>
    %cst_8 = arith.constant 0.000000e+00 : f32
    %24 = vector.broadcast %cst_8 : f32 to vector<16x1024xf32>
    %25 = arith.cmpf oge, %23, %24 : vector<16x1024xf32>
    %26 = vector.broadcast %0 : f32 to vector<16x1024xf32>
    %27 = arith.mulf %26, %23 : vector<16x1024xf32>
    %28 = arith.select %25, %23, %27 : vector<16x1024xi1>, vector<16x1024xf32>
    %29 = arith.truncf %28 : vector<16x1024xf32> to vector<16x1024xbf16>
    %c0_9 = arith.constant 0 : index
    %c0_10 = arith.constant 0 : index
    %30 = vector.load %arg5[%c0_9, %c0_10] : memref<1024x256xbf16, #tpu.memory_space<vmem>>, vector<1024x256xbf16>
    %cst_11 = arith.constant dense<0.000000e+00> : vector<16x256xf32>
    %31 = tpu.matmul %29, %30, %cst_11 {dimension_numbers = #tpu.dot_dimension_numbers<[1], [0], [0], [1], [0, 0, 1, 1], [], []>} : vector<16x1024xbf16>, vector<1024x256xbf16>, vector<16x256xf32> -> vector<16x256xf32>
    %c0_12 = arith.constant 0 : index
    %c1024 = arith.constant 1024 : index
    %32 = vector.load %arg7[%c0_12, %c1024] : memref<1x2176xf32, #tpu.memory_space<vmem>>, vector<1x256xf32>
    %33 = vector.broadcast %32 : vector<1x256xf32> to vector<16x256xf32>
    %34 = arith.addf %31, %33 : vector<16x256xf32>
    %cst_13 = arith.constant 0.000000e+00 : f32
    %35 = vector.broadcast %cst_13 : f32 to vector<16x256xf32>
    %36 = arith.cmpf oge, %34, %35 : vector<16x256xf32>
    %37 = vector.broadcast %1 : f32 to vector<16x256xf32>
    %38 = arith.mulf %37, %34 : vector<16x256xf32>
    %39 = arith.select %36, %34, %38 : vector<16x256xi1>, vector<16x256xf32>
    %40 = arith.truncf %39 : vector<16x256xf32> to vector<16x256xbf16>
    %c0_14 = arith.constant 0 : index
    %c1024_15 = arith.constant 1024 : index
    %41 = vector.load %arg4[%c0_14, %c1024_15] : memref<256x1152xbf16, #tpu.memory_space<vmem>>, vector<256x128xbf16>
    %cst_16 = arith.constant dense<0.000000e+00> : vector<16x128xf32>
    %42 = tpu.matmul %40, %41, %cst_16 {dimension_numbers = #tpu.dot_dimension_numbers<[1], [0], [0], [1], [0, 0, 1, 1], [], []>} : vector<16x256xbf16>, vector<256x128xbf16>, vector<16x128xf32> -> vector<16x128xf32>
    %c64_i32 = arith.constant 64 : i32
    %43 = vector.broadcast %c64_i32 : i32 to vector<1x128xi32>
    %44 = arith.cmpi eq, %10, %43 : vector<1x128xi32>
    %45 = vector.broadcast %8 : f32 to vector<16x128xf32>
    %46 = arith.subf %18, %45 : vector<16x128xf32>
    %47 = vector.broadcast %9 : f32 to vector<16x128xf32>
    %48 = arith.mulf %46, %47 : vector<16x128xf32>
    %49 = vector.shape_cast %44 : vector<1x128xi1> to vector<1x128xi1>
    %50 = vector.broadcast %49 : vector<1x128xi1> to vector<16x128xi1>
    %51 = arith.select %50, %48, %18 : vector<16x128xi1>, vector<16x128xf32>
    %52 = arith.truncf %51 : vector<16x128xf32> to vector<16x128xbf16>
    %c0_17 = arith.constant 0 : index
    %c0_18 = arith.constant 0 : index
    %53 = vector.load %arg6[%c0_17, %c0_18] : memref<128x896xbf16, #tpu.memory_space<vmem>>, vector<128x128xbf16>
    %cst_19 = arith.constant dense<0.000000e+00> : vector<16x128xf32>
    %54 = tpu.matmul %52, %53, %cst_19 {dimension_numbers = #tpu.dot_dimension_numbers<[1], [0], [0], [1], [0, 0, 1, 1], [], []>} : vector<16x128xbf16>, vector<128x128xbf16>, vector<16x128xf32> -> vector<16x128xf32>
    %55 = arith.addf %42, %54 : vector<16x128xf32>
    %c0_20 = arith.constant 0 : index
    %c1280 = arith.constant 1280 : index
    %56 = vector.load %arg7[%c0_20, %c1280] : memref<1x2176xf32, #tpu.memory_space<vmem>>, vector<1x128xf32>
    %57 = vector.broadcast %56 : vector<1x128xf32> to vector<16x128xf32>
    %58 = arith.addf %55, %57 : vector<16x128xf32>
    %c32_i32 = arith.constant 32 : i32
    %59 = vector.broadcast %c32_i32 : i32 to vector<1x128xi32>
    %60 = arith.cmpi slt, %10, %59 : vector<1x128xi32>
    %c64_i32_21 = arith.constant 64 : i32
    %61 = vector.broadcast %c64_i32_21 : i32 to vector<1x128xi32>
    %62 = arith.cmpi slt, %10, %61 : vector<1x128xi32>
    %63 = vector.broadcast %3 : f32 to vector<1x128xf32>
    %64 = vector.broadcast %4 : f32 to vector<1x128xf32>
    %65 = arith.select %62, %63, %64 : vector<1x128xi1>, vector<1x128xf32>
    %66 = vector.broadcast %2 : f32 to vector<1x128xf32>
    %67 = arith.select %60, %66, %65 : vector<1x128xi1>, vector<1x128xf32>
    %cst_22 = arith.constant 0.000000e+00 : f32
    %68 = vector.broadcast %cst_22 : f32 to vector<16x128xf32>
    %69 = arith.cmpf oge, %58, %68 : vector<16x128xf32>
    %70 = vector.broadcast %67 : vector<1x128xf32> to vector<16x128xf32>
    %71 = arith.mulf %70, %58 : vector<16x128xf32>
    %72 = arith.select %69, %58, %71 : vector<16x128xi1>, vector<16x128xf32>
    %73 = arith.truncf %72 : vector<16x128xf32> to vector<16x128xbf16>
    %c0_23 = arith.constant 0 : index
    %c128 = arith.constant 128 : index
    %74 = vector.load %arg6[%c0_23, %c128] : memref<128x896xbf16, #tpu.memory_space<vmem>>, vector<128x256xbf16>
    %cst_24 = arith.constant dense<0.000000e+00> : vector<16x256xf32>
    %75 = tpu.matmul %73, %74, %cst_24 {dimension_numbers = #tpu.dot_dimension_numbers<[1], [0], [0], [1], [0, 0, 1, 1], [], []>} : vector<16x128xbf16>, vector<128x256xbf16>, vector<16x256xf32> -> vector<16x256xf32>
    %c0_25 = arith.constant 0 : index
    %c1408 = arith.constant 1408 : index
    %76 = vector.load %arg7[%c0_25, %c1408] : memref<1x2176xf32, #tpu.memory_space<vmem>>, vector<1x256xf32>
    %77 = vector.broadcast %76 : vector<1x256xf32> to vector<16x256xf32>
    %78 = arith.addf %75, %77 : vector<16x256xf32>
    %c0_26 = arith.constant 0 : index
    %c384 = arith.constant 384 : index
    %79 = vector.load %arg6[%c0_26, %c384] : memref<128x896xbf16, #tpu.memory_space<vmem>>, vector<128x256xbf16>
    %c0_27 = arith.constant 0 : index
    %c1664 = arith.constant 1664 : index
    %80 = vector.load %arg7[%c0_27, %c1664] : memref<1x2176xf32, #tpu.memory_space<vmem>>, vector<1x256xf32>
    %c0_28 = arith.constant 0 : index
    %c0_29 = arith.constant 0 : index
    %81 = vector.load %arg3[%c0_28, %c0_29] : memref<8x128xf32, #tpu.memory_space<vmem>>, vector<8x128xf32>
    %82 = arith.truncf %81 : vector<8x128xf32> to vector<8x128xbf16>
    %cst_30 = arith.constant dense<0.000000e+00> : vector<8x256xf32>
    %83 = tpu.matmul %82, %79, %cst_30 {dimension_numbers = #tpu.dot_dimension_numbers<[1], [0], [0], [1], [0, 0, 1, 1], [], []>} : vector<8x128xbf16>, vector<128x256xbf16>, vector<8x256xf32> -> vector<8x256xf32>
    %84 = vector.broadcast %80 : vector<1x256xf32> to vector<8x256xf32>
    %85 = arith.addf %83, %84 : vector<8x256xf32>
    %86 = vector.extract_strided_slice %78 {offsets = [0, 0], sizes = [8, 128], strides = [1, 1]} : vector<16x256xf32> to vector<8x128xf32>
    %87 = vector.extract_strided_slice %78 {offsets = [0, 128], sizes = [8, 128], strides = [1, 1]} : vector<16x256xf32> to vector<8x128xf32>
    %88 = vector.extract_strided_slice %85 {offsets = [0, 0], sizes = [8, 128], strides = [1, 1]} : vector<8x256xf32> to vector<8x128xf32>
    %89 = vector.extract_strided_slice %85 {offsets = [0, 128], sizes = [8, 128], strides = [1, 1]} : vector<8x256xf32> to vector<8x128xf32>
    %90 = arith.addf %86, %88 : vector<8x128xf32>
    %cst_31 = arith.constant 0.000000e+00 : f32
    %91 = vector.broadcast %cst_31 : f32 to vector<8x128xf32>
    %92 = arith.subf %91, %90 : vector<8x128xf32>
    %93 = math.exp %92 : vector<8x128xf32>
    %cst_32 = arith.constant 1.000000e+00 : f32
    %94 = vector.broadcast %cst_32 : f32 to vector<8x128xf32>
    %95 = arith.addf %94, %93 : vector<8x128xf32>
    %96 = tpu.reciprocal %95 {approx = true} : vector<8x128xf32> -> vector<8x128xf32>
    %97 = arith.addf %87, %89 : vector<8x128xf32>
    %cst_33 = arith.constant 0.000000e+00 : f32
    %98 = vector.broadcast %cst_33 : f32 to vector<8x128xf32>
    %99 = arith.subf %98, %97 : vector<8x128xf32>
    %100 = math.exp %99 : vector<8x128xf32>
    %cst_34 = arith.constant 1.000000e+00 : f32
    %101 = vector.broadcast %cst_34 : f32 to vector<8x128xf32>
    %102 = arith.addf %101, %100 : vector<8x128xf32>
    %103 = tpu.reciprocal %102 {approx = true} : vector<8x128xf32> -> vector<8x128xf32>
    %c64_i32_35 = arith.constant 64 : i32
    %104 = tpu.dynamic_rotate %96 by %c64_i32_35 dim 1 : vector<8x128xf32>, i32 -> vector<8x128xf32>
    %105 = arith.mulf %104, %88 : vector<8x128xf32>
    %106 = arith.addf %86, %105 : vector<8x128xf32>
    %107 = math.tanh %106 : vector<8x128xf32>
    %c64_i32_36 = arith.constant 64 : i32
    %108 = tpu.dynamic_rotate %107 by %c64_i32_36 dim 1 : vector<8x128xf32>, i32 -> vector<8x128xf32>
    %c32_i32_37 = arith.constant 32 : i32
    %109 = vector.broadcast %c32_i32_37 : i32 to vector<1x128xi32>
    %110 = arith.cmpi slt, %10, %109 : vector<1x128xi32>
    %cst_38 = arith.constant 1.000000e+00 : f32
    %111 = vector.broadcast %cst_38 : f32 to vector<8x128xf32>
    %112 = arith.subf %111, %103 : vector<8x128xf32>
    %113 = arith.mulf %112, %108 : vector<8x128xf32>
    %114 = arith.mulf %103, %81 : vector<8x128xf32>
    %115 = arith.addf %113, %114 : vector<8x128xf32>
    %cst_39 = arith.constant 0.000000e+00 : f32
    %116 = vector.shape_cast %110 : vector<1x128xi1> to vector<1x128xi1>
    %117 = vector.broadcast %116 : vector<1x128xi1> to vector<8x128xi1>
    %118 = vector.broadcast %cst_39 : f32 to vector<8x128xf32>
    %119 = arith.select %117, %115, %118 : vector<8x128xi1>, vector<8x128xf32>
    %c0_40 = arith.constant 0 : index
    %c0_41 = arith.constant 0 : index
    %120 = vector.load %arg9[%c0_40, %c0_41] : memref<16x128xf32, #tpu.memory_space<vmem>>, vector<8x128xf32>
    tpu.vector_store %arg9[%c0_40, %c0_41], %119 {strides = array<i32>} : memref<16x128xf32, #tpu.memory_space<vmem>>, vector<8x128xf32>,
    %121 = arith.truncf %119 : vector<8x128xf32> to vector<8x128xbf16>
    %cst_42 = arith.constant dense<0.000000e+00> : vector<8x256xf32>
    %122 = tpu.matmul %121, %79, %cst_42 {dimension_numbers = #tpu.dot_dimension_numbers<[1], [0], [0], [1], [0, 0, 1, 1], [], []>} : vector<8x128xbf16>, vector<128x256xbf16>, vector<8x256xf32> -> vector<8x256xf32>
    %123 = vector.broadcast %80 : vector<1x256xf32> to vector<8x256xf32>
    %124 = arith.addf %122, %123 : vector<8x256xf32>
    %125 = vector.extract_strided_slice %78 {offsets = [8, 0], sizes = [8, 128], strides = [1, 1]} : vector<16x256xf32> to vector<8x128xf32>
    %126 = vector.extract_strided_slice %78 {offsets = [8, 128], sizes = [8, 128], strides = [1, 1]} : vector<16x256xf32> to vector<8x128xf32>
    %127 = vector.extract_strided_slice %124 {offsets = [0, 0], sizes = [8, 128], strides = [1, 1]} : vector<8x256xf32> to vector<8x128xf32>
    %128 = vector.extract_strided_slice %124 {offsets = [0, 128], sizes = [8, 128], strides = [1, 1]} : vector<8x256xf32> to vector<8x128xf32>
    %129 = arith.addf %125, %127 : vector<8x128xf32>
    %cst_43 = arith.constant 0.000000e+00 : f32
    %130 = vector.broadcast %cst_43 : f32 to vector<8x128xf32>
    %131 = arith.subf %130, %129 : vector<8x128xf32>
    %132 = math.exp %131 : vector<8x128xf32>
    %cst_44 = arith.constant 1.000000e+00 : f32
    %133 = vector.broadcast %cst_44 : f32 to vector<8x128xf32>
    %134 = arith.addf %133, %132 : vector<8x128xf32>
    %135 = tpu.reciprocal %134 {approx = true} : vector<8x128xf32> -> vector<8x128xf32>
    %136 = arith.addf %126, %128 : vector<8x128xf32>
    %cst_45 = arith.constant 0.000000e+00 : f32
    %137 = vector.broadcast %cst_45 : f32 to vector<8x128xf32>
    %138 = arith.subf %137, %136 : vector<8x128xf32>
    %139 = math.exp %138 : vector<8x128xf32>
    %cst_46 = arith.constant 1.000000e+00 : f32
    %140 = vector.broadcast %cst_46 : f32 to vector<8x128xf32>
    %141 = arith.addf %140, %139 : vector<8x128xf32>
    %142 = tpu.reciprocal %141 {approx = true} : vector<8x128xf32> -> vector<8x128xf32>
    %c64_i32_47 = arith.constant 64 : i32
    %143 = tpu.dynamic_rotate %135 by %c64_i32_47 dim 1 : vector<8x128xf32>, i32 -> vector<8x128xf32>
    %144 = arith.mulf %143, %127 : vector<8x128xf32>
    %145 = arith.addf %125, %144 : vector<8x128xf32>
    %146 = math.tanh %145 : vector<8x128xf32>
    %c64_i32_48 = arith.constant 64 : i32
    %147 = tpu.dynamic_rotate %146 by %c64_i32_48 dim 1 : vector<8x128xf32>, i32 -> vector<8x128xf32>
    %c32_i32_49 = arith.constant 32 : i32
    %148 = vector.broadcast %c32_i32_49 : i32 to vector<1x128xi32>
    %149 = arith.cmpi slt, %10, %148 : vector<1x128xi32>
    %cst_50 = arith.constant 1.000000e+00 : f32
    %150 = vector.broadcast %cst_50 : f32 to vector<8x128xf32>
    %151 = arith.subf %150, %142 : vector<8x128xf32>
    %152 = arith.mulf %151, %147 : vector<8x128xf32>
    %153 = arith.mulf %142, %119 : vector<8x128xf32>
    %154 = arith.addf %152, %153 : vector<8x128xf32>
    %cst_51 = arith.constant 0.000000e+00 : f32
    %155 = vector.shape_cast %149 : vector<1x128xi1> to vector<1x128xi1>
    %156 = vector.broadcast %155 : vector<1x128xi1> to vector<8x128xi1>
    %157 = vector.broadcast %cst_51 : f32 to vector<8x128xf32>
    %158 = arith.select %156, %154, %157 : vector<8x128xi1>, vector<8x128xf32>
    %c8_52 = arith.constant 8 : index
    %c0_53 = arith.constant 0 : index
    %159 = vector.load %arg9[%c8_52, %c0_53] : memref<16x128xf32, #tpu.memory_space<vmem>>, vector<8x128xf32>
    tpu.vector_store %arg9[%c8_52, %c0_53], %158 {strides = array<i32>} : memref<16x128xf32, #tpu.memory_space<vmem>>, vector<8x128xf32>,
    %c0_54 = arith.constant 0 : index
    %c0_55 = arith.constant 0 : index
    %160 = vector.load %arg9[%c0_54, %c0_55] : memref<16x128xf32, #tpu.memory_space<vmem>>, vector<16x128xf32>
    %cst_56 = arith.constant 0.000000e+00 : f32
    %161 = vector.broadcast %cst_56 : f32 to vector<16x128xf32>
    %162 = arith.cmpf oge, %160, %161 : vector<16x128xf32>
    %163 = vector.broadcast %5 : f32 to vector<16x128xf32>
    %164 = arith.mulf %163, %160 : vector<16x128xf32>
    %165 = arith.select %162, %160, %164 : vector<16x128xi1>, vector<16x128xf32>
    %166 = arith.truncf %165 : vector<16x128xf32> to vector<16x128xbf16>
    %c0_57 = arith.constant 0 : index
    %c640 = arith.constant 640 : index
    %167 = vector.load %arg6[%c0_57, %c640] : memref<128x896xbf16, #tpu.memory_space<vmem>>, vector<128x256xbf16>
    %cst_58 = arith.constant dense<0.000000e+00> : vector<16x256xf32>
    %168 = tpu.matmul %166, %167, %cst_58 {dimension_numbers = #tpu.dot_dimension_numbers<[1], [0], [0], [1], [0, 0, 1, 1], [], []>} : vector<16x128xbf16>, vector<128x256xbf16>, vector<16x256xf32> -> vector<16x256xf32>
    %c0_59 = arith.constant 0 : index
    %c1920 = arith.constant 1920 : index
    %169 = vector.load %arg7[%c0_59, %c1920] : memref<1x2176xf32, #tpu.memory_space<vmem>>, vector<1x256xf32>
    %170 = vector.broadcast %169 : vector<1x256xf32> to vector<16x256xf32>
    %171 = arith.addf %168, %170 : vector<16x256xf32>
    %172 = vector.extract_strided_slice %171 {offsets = [0, 0], sizes = [16, 128], strides = [1, 1]} : vector<16x256xf32> to vector<16x128xf32>
    %173 = vector.extract_strided_slice %171 {offsets = [0, 128], sizes = [16, 128], strides = [1, 1]} : vector<16x256xf32> to vector<16x128xf32>
    %cst_60 = arith.constant 0.000000e+00 : f32
    %174 = vector.broadcast %cst_60 : f32 to vector<16x128xf32>
    %175 = arith.maximumf %173, %174 : vector<16x128xf32>
    %176 = math.absf %173 : vector<16x128xf32>
    %cst_61 = arith.constant 0.000000e+00 : f32
    %177 = vector.broadcast %cst_61 : f32 to vector<16x128xf32>
    %178 = arith.subf %177, %176 : vector<16x128xf32>
    %179 = math.exp %178 : vector<16x128xf32>
    %180 = math.log1p %179 : vector<16x128xf32>
    %181 = arith.addf %175, %180 : vector<16x128xf32>
    %182 = vector.broadcast %6 : f32 to vector<16x128xf32>
    %183 = arith.maximumf %182, %181 : vector<16x128xf32>
    %184 = vector.broadcast %7 : f32 to vector<16x128xf32>
    %185 = arith.minimumf %184, %183 : vector<16x128xf32>
    %186 = arith.mulf %18, %185 : vector<16x128xf32>
    %187 = arith.addf %172, %186 : vector<16x128xf32>
    %188 = math.tanh %187 : vector<16x128xf32>
    %cst_62 = arith.constant -5.000000e-01 : f32
    %189 = vector.broadcast %cst_62 : f32 to vector<16x128xf32>
    %190 = arith.mulf %189, %18 : vector<16x128xf32>
    %191 = arith.mulf %190, %18 : vector<16x128xf32>
    %192 = math.log %185 : vector<16x128xf32>
    %193 = arith.subf %191, %192 : vector<16x128xf32>
    %cst_63 = arith.constant 0.918938517 : f32
    %194 = vector.broadcast %cst_63 : f32 to vector<16x128xf32>
    %195 = arith.subf %193, %194 : vector<16x128xf32>
    %196 = arith.mulf %188, %188 : vector<16x128xf32>
    %cst_64 = arith.constant 1.000000e+00 : f32
    %197 = vector.broadcast %cst_64 : f32 to vector<16x128xf32>
    %198 = arith.subf %197, %196 : vector<16x128xf32>
    %cst_65 = arith.constant 9.99999997E-7 : f32
    %199 = vector.broadcast %cst_65 : f32 to vector<16x128xf32>
    %200 = arith.addf %198, %199 : vector<16x128xf32>
    %201 = math.log %200 : vector<16x128xf32>
    %202 = arith.subf %195, %201 : vector<16x128xf32>
    %c2_i32 = arith.constant 2 : i32
    %203 = vector.broadcast %c2_i32 : i32 to vector<1x128xi32>
    %204 = arith.cmpi slt, %10, %203 : vector<1x128xi32>
    %cst_66 = arith.constant 0.000000e+00 : f32
    %205 = vector.shape_cast %204 : vector<1x128xi1> to vector<1x128xi1>
    %206 = vector.broadcast %205 : vector<1x128xi1> to vector<16x128xi1>
    %207 = vector.broadcast %cst_66 : f32 to vector<16x128xf32>
    %208 = arith.select %206, %202, %207 : vector<16x128xi1>, vector<16x128xf32>
    %cst_67 = arith.constant dense<0.000000e+00> : vector<16xf32>
    %209 = vector.multi_reduction <add>, %208, %cst_67 [1] : vector<16x128xf32> to vector<16xf32>
    %210 = vector.shape_cast %209 : vector<16xf32> to vector<16x1xf32>
    %cst_68 = arith.constant 5.000000e-01 : f32
    %211 = vector.broadcast %cst_68 : f32 to vector<16x1xf32>
    %212 = arith.mulf %210, %211 : vector<16x1xf32>
    %c2_i32_69 = arith.constant 2 : i32
    %213 = vector.broadcast %c2_i32_69 : i32 to vector<1x128xi32>
    %214 = arith.cmpi slt, %10, %213 : vector<1x128xi32>
    %215 = vector.shape_cast %214 : vector<1x128xi1> to vector<1x128xi1>
    %216 = vector.broadcast %215 : vector<1x128xi1> to vector<16x128xi1>
    %217 = vector.shape_cast %212 : vector<16x1xf32> to vector<16x1xf32>
    %218 = vector.broadcast %217 : vector<16x1xf32> to vector<16x128xf32>
    %219 = arith.select %216, %188, %218 : vector<16x128xi1>, vector<16x128xf32>
    %c0_70 = arith.constant 0 : index
    %c0_71 = arith.constant 0 : index
    %220 = vector.load %arg8[%c0_70, %c0_71] : memref<16x128xf32, #tpu.memory_space<vmem>>, vector<16x128xf32>
    tpu.vector_store %arg8[%c0_70, %c0_71], %219 {strides = array<i32>} : memref<16x128xf32, #tpu.memory_space<vmem>>, vector<16x128xf32>,
    return
  }
  func.func @transform_0(%arg0: i32) -> i32 {
    %c0_i32 = arith.constant 0 : i32
    %c0_i32_0 = arith.constant 0 : i32
    return %c0_i32 : i32
  }
  func.func @transform_1(%arg0: i32) -> (i32, i32) {
    %c0_i32 = arith.constant 0 : i32
    %c0_i32_0 = arith.constant 0 : i32
    return %arg0, %c0_i32 : i32, i32
  }
  func.func @transform_2(%arg0: i32) -> (i32, i32) {
    %c0_i32 = arith.constant 0 : i32
    %c0_i32_0 = arith.constant 0 : i32
    return %arg0, %c0_i32 : i32, i32
  }
  func.func @transform_3(%arg0: i32) -> (i32, i32) {
    %c0_i32 = arith.constant 0 : i32
    %c0_i32_0 = arith.constant 0 : i32
    %c0_i32_1 = arith.constant 0 : i32
    return %c0_i32, %c0_i32_0 : i32, i32
  }
  func.func @transform_4(%arg0: i32) -> (i32, i32) {
    %c0_i32 = arith.constant 0 : i32
    %c0_i32_0 = arith.constant 0 : i32
    %c0_i32_1 = arith.constant 0 : i32
    return %c0_i32, %c0_i32_0 : i32, i32
  }
  func.func @transform_5(%arg0: i32) -> (i32, i32) {
    %c0_i32 = arith.constant 0 : i32
    %c0_i32_0 = arith.constant 0 : i32
    %c0_i32_1 = arith.constant 0 : i32
    return %c0_i32, %c0_i32_0 : i32, i32
  }
  func.func @transform_6(%arg0: i32) -> (i32, i32) {
    %c0_i32 = arith.constant 0 : i32
    %c0_i32_0 = arith.constant 0 : i32
    %c0_i32_1 = arith.constant 0 : i32
    return %c0_i32, %c0_i32_0 : i32, i32
  }
  func.func @transform_7(%arg0: i32) -> (i32, i32) {
    %c0_i32 = arith.constant 0 : i32
    %c0_i32_0 = arith.constant 0 : i32
    return %arg0, %c0_i32 : i32, i32
  }
  func.func @transform_8(%arg0: i32) -> (i32, i32) {
    %c0_i32 = arith.constant 0 : i32
    %c0_i32_0 = arith.constant 0 : i32
    return %arg0, %c0_i32 : i32, i32
  }
}

</mosaic_0001>

<llo_original>
// kernel: actor_forward.1
$region0: #{actor_forward.1}
  #allocation0 [shape = 'u32[]', space=smem, size = 0x4, offset = 0x4, fixed_abs, tag = 'smem constant byte address 0x4 - core index']
  #allocation1 [shape = 'u32[144,128]{1,0:T(1,128)}', space=vmem, size = 0x12000, scoped, tag = 'internal scratch']
  %s0 = inlined_call_operand.vmem [shape: f32[16], index: 0, kind: input, shape index: {}]
  %s1 = inlined_call_operand.vmem [shape: f32[16,384], index: 1, kind: input, shape index: {}]
  %s2 = inlined_call_operand.vmem [shape: f32[8,128], index: 2, kind: input, shape index: {}]
  %s3 = inlined_call_operand.vmem [shape: bf16[256,1152], index: 3, kind: input, shape index: {}]
  %s4 = inlined_call_operand.hbm [shape: bf16[1024,256], index: 4, kind: input, shape index: {}]
  %s5 = inlined_call_operand.vmem [shape: bf16[128,896], index: 5, kind: input, shape index: {}]
  %s6 = inlined_call_operand.vmem [shape: f32[1,2176], index: 6, kind: input, shape index: {}]
  %s7 = inlined_call_operand.vmem [shape: f32[16,128], index: 7, kind: output, shape index: {0}]
  %s8 = inlined_call_operand.vmem [shape: f32[16,128], index: 8, kind: output, shape index: {1}]
  %9 = xla_tuple %s7, %s8
  %s10 = sld [smem:[#allocation0]]
  $region54: #{actor_forward.1} parent=0
    _
  %s12 = ssub.s32 1, %s10
  %s13 = scalar_select 0, %s12, %s10
  $region1: #{actor_forward.1} parent=0
    #allocation2 [shape = 'u8[512]{0}', space=smem, size = 0x200, scoped, tag = 'input window, operand 0, single buffered']
    #allocation3 [shape = 's32[1]{0}', space=sflag, size = 0x4, scoped, tag = 'scoped memory for actor_forward.1']
    #allocation4 [shape = 's32[1]{0}', space=sflag, size = 0x4, scoped, tag = 'scoped memory for actor_forward.1']
    #allocation5 [shape = 'u8[524288]{0}', space=vmem, size = 0x80000, scoped, tag = 'input window, operand 4, single buffered']
    %14 = vsyncpa [#allocation4], 0
    %15 = vsyncpa [#allocation3], 0
    // Predicated region
    $region2: #{actor_forward.1} parent=1 // pred_check
      _
    $region3: #{actor_forward.1} parent=1 // pred_check_branch
      %17 = sbr.rel (0) target = $region5
    $region4: #{actor_forward.1} parent=1 // pred_region
      %s19 = ssub.s32 16, 16
      %20 = vsyncadd [#allocation4], %s19
      %s22 = sshll.u32 %s0, 4
      %s23 = int_to_ptr.vmem [resolvable:$true] %s22
      %25 = dma.vmem_to_smem %s23, 16, [#allocation2], [#allocation4]
    $region5: #{actor_forward.1} parent=1 // pred_fallthru
      _
    // Predicated region
    $region6: #{actor_forward.1} parent=1 // pred_check
      _
    $region7: #{actor_forward.1} parent=1 // pred_check_branch
      %27 = sbr.rel (0) target = $region9
    $region8: #{actor_forward.1} parent=1 // pred_region
      _
    $region9: #{actor_forward.1} parent=1 // pred_fallthru
      _
    // Predicated region
    $region10: #{actor_forward.1} parent=1 // pred_check
      _
    $region11: #{actor_forward.1} parent=1 // pred_check_branch
      %29 = sbr.rel (0) target = $region13
    $region12: #{actor_forward.1} parent=1 // pred_region
      _
    $region13: #{actor_forward.1} parent=1 // pred_fallthru
      _
    // Predicated region
    $region14: #{actor_forward.1} parent=1 // pred_check
      _
    $region15: #{actor_forward.1} parent=1 // pred_check_branch
      %31 = sbr.rel (0) target = $region17
    $region16: #{actor_forward.1} parent=1 // pred_region
      _
    $region17: #{actor_forward.1} parent=1 // pred_fallthru
      _
    // Predicated region
    $region18: #{actor_forward.1} parent=1 // pred_check
      _
    $region19: #{actor_forward.1} parent=1 // pred_check_branch
      %33 = sbr.rel (0) target = $region21
    $region20: #{actor_forward.1} parent=1 // pred_region
      %s35 = ssub.s32 16384, 16384
      %36 = vsyncadd [#allocation3], %s35
      %s37 = sshll.u32 [#allocation5], 4
      %s38 = int_to_ptr.vmem [resolvable:$true] %s37
      %43 = dma.hbm_to_vmem [thread:$0]  %s4, 16384, %s38, [#allocation3], 128, 128, 8
    $region21: #{actor_forward.1} parent=1 // pred_fallthru
      _
    // Predicated region
    $region22: #{actor_forward.1} parent=1 // pred_check
      _
    $region23: #{actor_forward.1} parent=1 // pred_check_branch
      %45 = sbr.rel (0) target = $region25
    $region24: #{actor_forward.1} parent=1 // pred_region
      _
    $region25: #{actor_forward.1} parent=1 // pred_fallthru
      _
    // Predicated region
    $region26: #{actor_forward.1} parent=1 // pred_check
      _
    $region27: #{actor_forward.1} parent=1 // pred_check_branch
      %47 = sbr.rel (0) target = $region29
    $region28: #{actor_forward.1} parent=1 // pred_region
      _
    $region29: #{actor_forward.1} parent=1 // pred_fallthru
      _
    // Predicated region
    $region30: #{actor_forward.1} parent=1 // pred_check
      _
    $region31: #{actor_forward.1} parent=1 // pred_check_branch
      %49 = sbr.rel (0) target = $region33
    $region32: #{actor_forward.1} parent=1 // pred_region
      %50 = dma.done [#allocation4], 16
    $region33: #{actor_forward.1} parent=1 // pred_fallthru
      _
    // Predicated region
    $region34: #{actor_forward.1} parent=1 // pred_check
      _
    $region35: #{actor_forward.1} parent=1 // pred_check_branch
      %52 = sbr.rel (0) target = $region37
    $region36: #{actor_forward.1} parent=1 // pred_region
      %53 = dma.done [#allocation3], 16384
    $region37: #{actor_forward.1} parent=1 // pred_fallthru
      _
    %54 = sfence
    %s56 = sld [smem:[#allocation2]]
    %s57 = sld [smem:[#allocation2 + $0x1]]
    %s58 = sld [smem:[#allocation2 + $0x2]]
    %s59 = sld [smem:[#allocation2 + $0x3]]
    %s60 = sld [smem:[#allocation2 + $0x4]]
    %s61 = sld [smem:[#allocation2 + $0x5]]
    %s62 = sld [smem:[#allocation2 + $0x6]]
    %s63 = sld [smem:[#allocation2 + $0x7]]
    %s64 = sld [smem:[#allocation2 + $0x8]]
    %s65 = sld [smem:[#allocation2 + $0x9]]
    %v66 = vlaneseq
    %v67 = vand.u32 %v66, 127
    %v68 = vld [vmem:[%s1] sm:$0xff]
    %v69 = vld [vmem:[%s1 + $0x8] sm:$0xff]
    %v70 = vld [vmem:[%s1 + $0x10] sm:$0xff]
    %v71 = vld [vmem:[%s1 + $0x18] sm:$0xff]
    %v72 = vld [vmem:[%s1 + $0x20] sm:$0xff]
    %v73 = vld [vmem:[%s1 + $0x28] sm:$0xff]
    %v74 = vmul.f32 %v68, 2.0
    %v75 = vmul.f32 %v69, 2.0
    %v76 = vmul.f32 %v71, 2.0
    %v77 = vmul.f32 %v72, 2.0
    %v78 = vsub.f32 %v74, 1.0
    %v79 = vsub.f32 %v75, 1.0
    %v80 = vsub.f32 %v76, 1.0
    %v81 = vsub.f32 %v77, 1.0
    %v82 = vpack.c.bf16 %v80, %v78
    %v83 = vpack.c.bf16 %v81, %v79
    %v84 = vld [vmem:[%s3] sm:$0xff]
    %v85 = vld [vmem:[%s3 + $0x8] sm:$0xff]
    %v86 = vld [vmem:[%s3 + $0x10] sm:$0xff]
    %v87 = vld [vmem:[%s3 + $0x18] sm:$0xff]
    %v88 = vld [vmem:[%s3 + $0x24] sm:$0xff]
    %v89 = vld [vmem:[%s3 + $0x2c] sm:$0xff]
    %v90 = vld [vmem:[%s3 + $0x34] sm:$0xff]
    %v91 = vld [vmem:[%s3 + $0x3c] sm:$0xff]
    %v92 = vld [vmem:[%s3 + $0x48] sm:$0xff]
    %v93 = vld [vmem:[%s3 + $0x50] sm:$0xff]
    %v94 = vld [vmem:[%s3 + $0x58] sm:$0xff]
    %v95 = vld [vmem:[%s3 + $0x60] sm:$0xff]
    %v96 = vld [vmem:[%s3 + $0x6c] sm:$0xff]
    %v97 = vld [vmem:[%s3 + $0x74] sm:$0xff]
    %v98 = vld [vmem:[%s3 + $0x7c] sm:$0xff]
    %v99 = vld [vmem:[%s3 + $0x84] sm:$0xff]
    %v100 = vld [vmem:[%s3 + $0x90] sm:$0xff]
    %v101 = vld [vmem:[%s3 + $0x98] sm:$0xff]
    %v102 = vld [vmem:[%s3 + $0xa0] sm:$0xff]
    %v103 = vld [vmem:[%s3 + $0xa8] sm:$0xff]
    %v104 = vld [vmem:[%s3 + $0xb4] sm:$0xff]
    %v105 = vld [vmem:[%s3 + $0xbc] sm:$0xff]
    %v106 = vld [vmem:[%s3 + $0xc4] sm:$0xff]
    %v107 = vld [vmem:[%s3 + $0xcc] sm:$0xff]
    %v108 = vld [vmem:[%s3 + $0xd8] sm:$0xff]
    %v109 = vld [vmem:[%s3 + $0xe0] sm:$0xff]
    %v110 = vld [vmem:[%s3 + $0xe8] sm:$0xff]
    %v111 = vld [vmem:[%s3 + $0xf0] sm:$0xff]
    %v112 = vld [vmem:[%s3 + $0xfc] sm:$0xff]
    %v113 = vld [vmem:[%s3 + $0x104] sm:$0xff]
    %v114 = vld [vmem:[%s3 + $0x10c] sm:$0xff]
    %v115 = vld [vmem:[%s3 + $0x114] sm:$0xff]
    %v116 = vld [vmem:[%s3 + $0x120] sm:$0xff]
    %v117 = vld [vmem:[%s3 + $0x128] sm:$0xff]
    %v118 = vld [vmem:[%s3 + $0x130] sm:$0xff]
    %v119 = vld [vmem:[%s3 + $0x138] sm:$0xff]
    %v120 = vld [vmem:[%s3 + $0x144] sm:$0xff]
    %v121 = vld [vmem:[%s3 + $0x14c] sm:$0xff]
    %v122 = vld [vmem:[%s3 + $0x154] sm:$0xff]
    %v123 = vld [vmem:[%s3 + $0x15c] sm:$0xff]
    %v124 = vld [vmem:[%s3 + $0x168] sm:$0xff]
    %v125 = vld [vmem:[%s3 + $0x170] sm:$0xff]
    %v126 = vld [vmem:[%s3 + $0x178] sm:$0xff]
    %v127 = vld [vmem:[%s3 + $0x180] sm:$0xff]
    %v128 = vld [vmem:[%s3 + $0x18c] sm:$0xff]
    %v129 = vld [vmem:[%s3 + $0x194] sm:$0xff]
    %v130 = vld [vmem:[%s3 + $0x19c] sm:$0xff]
    %v131 = vld [vmem:[%s3 + $0x1a4] sm:$0xff]
    %v132 = vld [vmem:[%s3 + $0x1b0] sm:$0xff]
    %v133 = vld [vmem:[%s3 + $0x1b8] sm:$0xff]
    %v134 = vld [vmem:[%s3 + $0x1c0] sm:$0xff]
    %v135 = vld [vmem:[%s3 + $0x1c8] sm:$0xff]
    %v136 = vld [vmem:[%s3 + $0x1d4] sm:$0xff]
    %v137 = vld [vmem:[%s3 + $0x1dc] sm:$0xff]
    %v138 = vld [vmem:[%s3 + $0x1e4] sm:$0xff]
    %v139 = vld [vmem:[%s3 + $0x1ec] sm:$0xff]
    %v140 = vld [vmem:[%s3 + $0x1f8] sm:$0xff]
    %v141 = vld [vmem:[%s3 + $0x200] sm:$0xff]
    %v142 = vld [vmem:[%s3 + $0x208] sm:$0xff]
    %v143 = vld [vmem:[%s3 + $0x210] sm:$0xff]
    %v144 = vld [vmem:[%s3 + $0x21c] sm:$0xff]
    %v145 = vld [vmem:[%s3 + $0x224] sm:$0xff]
    %v146 = vld [vmem:[%s3 + $0x22c] sm:$0xff]
    %v147 = vld [vmem:[%s3 + $0x234] sm:$0xff]
    %v148 = vld [vmem:[%s3 + $0x240] sm:$0xff]
    %v149 = vld [vmem:[%s3 + $0x248] sm:$0xff]
    %v150 = vld [vmem:[%s3 + $0x250] sm:$0xff]
    %v151 = vld [vmem:[%s3 + $0x258] sm:$0xff]
    %v152 = vld [vmem:[%s3 + $0x264] sm:$0xff]
    %v153 = vld [vmem:[%s3 + $0x26c] sm:$0xff]
    %v154 = vld [vmem:[%s3 + $0x274] sm:$0xff]
    %v155 = vld [vmem:[%s3 + $0x27c] sm:$0xff]
    %v156 = vld [vmem:[%s3 + $0x288] sm:$0xff]
    %v157 = vld [vmem:[%s3 + $0x290] sm:$0xff]
    %v158 = vld [vmem:[%s3 + $0x298] sm:$0xff]
    %v159 = vld [vmem:[%s3 + $0x2a0] sm:$0xff]
    %v160 = vld [vmem:[%s3 + $0x2ac] sm:$0xff]
    %v161 = vld [vmem:[%s3 + $0x2b4] sm:$0xff]
    %v162 = vld [vmem:[%s3 + $0x2bc] sm:$0xff]
    %v163 = vld [vmem:[%s3 + $0x2c4] sm:$0xff]
    %v164 = vld [vmem:[%s3 + $0x2d0] sm:$0xff]
    %v165 = vld [vmem:[%s3 + $0x2d8] sm:$0xff]
    %v166 = vld [vmem:[%s3 + $0x2e0] sm:$0xff]
    %v167 = vld [vmem:[%s3 + $0x2e8] sm:$0xff]
    %v168 = vld [vmem:[%s3 + $0x2f4] sm:$0xff]
    %v169 = vld [vmem:[%s3 + $0x2fc] sm:$0xff]
    %v170 = vld [vmem:[%s3 + $0x304] sm:$0xff]
    %v171 = vld [vmem:[%s3 + $0x30c] sm:$0xff]
    %v172 = vld [vmem:[%s3 + $0x318] sm:$0xff]
    %v173 = vld [vmem:[%s3 + $0x320] sm:$0xff]
    %v174 = vld [vmem:[%s3 + $0x328] sm:$0xff]
    %v175 = vld [vmem:[%s3 + $0x330] sm:$0xff]
    %v176 = vld [vmem:[%s3 + $0x33c] sm:$0xff]
    %v177 = vld [vmem:[%s3 + $0x344] sm:$0xff]
    %v178 = vld [vmem:[%s3 + $0x34c] sm:$0xff]
    %v179 = vld [vmem:[%s3 + $0x354] sm:$0xff]
    %v180 = vld [vmem:[%s3 + $0x360] sm:$0xff]
    %v181 = vld [vmem:[%s3 + $0x368] sm:$0xff]
    %v182 = vld [vmem:[%s3 + $0x370] sm:$0xff]
    %v183 = vld [vmem:[%s3 + $0x378] sm:$0xff]
    %v184 = vld [vmem:[%s3 + $0x384] sm:$0xff]
    %v185 = vld [vmem:[%s3 + $0x38c] sm:$0xff]
    %v186 = vld [vmem:[%s3 + $0x394] sm:$0xff]
    %v187 = vld [vmem:[%s3 + $0x39c] sm:$0xff]
    %v188 = vld [vmem:[%s3 + $0x3a8] sm:$0xff]
    %v189 = vld [vmem:[%s3 + $0x3b0] sm:$0xff]
    %v190 = vld [vmem:[%s3 + $0x3b8] sm:$0xff]
    %v191 = vld [vmem:[%s3 + $0x3c0] sm:$0xff]
    %v192 = vld [vmem:[%s3 + $0x3cc] sm:$0xff]
    %v193 = vld [vmem:[%s3 + $0x3d4] sm:$0xff]
    %v194 = vld [vmem:[%s3 + $0x3dc] sm:$0xff]
    %v195 = vld [vmem:[%s3 + $0x3e4] sm:$0xff]
    %v196 = vld [vmem:[%s3 + $0x3f0] sm:$0xff]
    %v197 = vld [vmem:[%s3 + $0x3f8] sm:$0xff]
    %v198 = vld [vmem:[%s3 + $0x400] sm:$0xff]
    %v199 = vld [vmem:[%s3 + $0x408] sm:$0xff]
    %v200 = vld [vmem:[%s3 + $0x414] sm:$0xff]
    %v201 = vld [vmem:[%s3 + $0x41c] sm:$0xff]
    %v202 = vld [vmem:[%s3 + $0x424] sm:$0xff]
    %v203 = vld [vmem:[%s3 + $0x42c] sm:$0xff]
    %v204 = vld [vmem:[%s3 + $0x438] sm:$0xff]
    %v205 = vld [vmem:[%s3 + $0x440] sm:$0xff]
    %v206 = vld [vmem:[%s3 + $0x448] sm:$0xff]
    %v207 = vld [vmem:[%s3 + $0x450] sm:$0xff]
    %v208 = vld [vmem:[%s3 + $0x45c] sm:$0xff]
    %v209 = vld [vmem:[%s3 + $0x464] sm:$0xff]
    %v210 = vld [vmem:[%s3 + $0x46c] sm:$0xff]
    %v211 = vld [vmem:[%s3 + $0x474] sm:$0xff]
    %v212 = vld [vmem:[%s6] sm:$0xff]
    %v214 = vlaneseq
    %v215 = vshrl.u32 %v214, 7
    %v216 = vsub.s32 0, %v215
    %v217 = vrot.slane %v212, %v216
    %v218 = vlaneseq
    %v219 = vshrl.u32 %v218, 7
    %v220 = vsub.s32 1, %v219
    %v221 = vrot.slane %v212, %v220
    %v222 = vlaneseq
    %v223 = vshrl.u32 %v222, 7
    %v224 = vsub.s32 2, %v223
    %v225 = vrot.slane %v212, %v224
    %v226 = vlaneseq
    %v227 = vshrl.u32 %v226, 7
    %v228 = vsub.s32 3, %v227
    %v229 = vrot.slane %v212, %v228
    %v230 = vlaneseq
    %v231 = vshrl.u32 %v230, 7
    %v232 = vsub.s32 4, %v231
    %v233 = vrot.slane %v212, %v232
    %v234 = vlaneseq
    %v235 = vshrl.u32 %v234, 7
    %v236 = vsub.s32 5, %v235
    %v237 = vrot.slane %v212, %v236
    %v238 = vlaneseq
    %v239 = vshrl.u32 %v238, 7
    %v240 = vsub.s32 6, %v239
    %v241 = vrot.slane %v212, %v240
    %v242 = vlaneseq
    %v243 = vshrl.u32 %v242, 7
    %v244 = vsub.s32 7, %v243
    %v245 = vrot.slane %v212, %v244
    %v382 = vunpack.c.l.b16 %v84
    %v383 = vunpack.c.h.b16 %v84
    %v384 = vunpack.c.l.b16 %v85
    %v385 = vunpack.c.h.b16 %v85
    %v386 = vunpack.c.l.b16 %v86
    %v387 = vunpack.c.h.b16 %v86
    %v388 = vunpack.c.l.b16 %v87
    %v389 = vunpack.c.h.b16 %v87
    %v390 = vunpack.c.l.b16 %v88
    %v391 = vunpack.c.h.b16 %v88
    %v392 = vunpack.c.l.b16 %v89
    %v393 = vunpack.c.h.b16 %v89
    %v394 = vunpack.c.l.b16 %v90
    %v395 = vunpack.c.h.b16 %v90
    %v396 = vunpack.c.l.b16 %v91
    %v397 = vunpack.c.h.b16 %v91
    %v398 = vunpack.c.l.b16 %v92
    %v399 = vunpack.c.h.b16 %v92
    %v400 = vunpack.c.l.b16 %v93
    %v401 = vunpack.c.h.b16 %v93
    %v402 = vunpack.c.l.b16 %v94
    %v403 = vunpack.c.h.b16 %v94
    %v404 = vunpack.c.l.b16 %v95
    %v405 = vunpack.c.h.b16 %v95
    %v406 = vunpack.c.l.b16 %v96
    %v407 = vunpack.c.h.b16 %v96
    %v408 = vunpack.c.l.b16 %v97
    %v409 = vunpack.c.h.b16 %v97
    %v410 = vunpack.c.l.b16 %v98
    %v411 = vunpack.c.h.b16 %v98
    %v412 = vunpack.c.l.b16 %v99
    %v413 = vunpack.c.h.b16 %v99
    %v414 = vunpack.c.l.b16 %v100
    %v415 = vunpack.c.h.b16 %v100
    %v416 = vunpack.c.l.b16 %v101
    %v417 = vunpack.c.h.b16 %v101
    %v418 = vunpack.c.l.b16 %v102
    %v419 = vunpack.c.h.b16 %v102
    %v420 = vunpack.c.l.b16 %v103
    %v421 = vunpack.c.h.b16 %v103
    %v422 = vunpack.c.l.b16 %v104
    %v423 = vunpack.c.h.b16 %v104
    %v424 = vunpack.c.l.b16 %v105
    %v425 = vunpack.c.h.b16 %v105
    %v426 = vunpack.c.l.b16 %v106
    %v427 = vunpack.c.h.b16 %v106
    %v428 = vunpack.c.l.b16 %v107
    %v429 = vunpack.c.h.b16 %v107
    %v430 = vunpack.c.l.b16 %v108
    %v431 = vunpack.c.h.b16 %v108
    %v432 = vunpack.c.l.b16 %v109
    %v433 = vunpack.c.h.b16 %v109
    %v434 = vunpack.c.l.b16 %v110
    %v435 = vunpack.c.h.b16 %v110
    %v436 = vunpack.c.l.b16 %v111
    %v437 = vunpack.c.h.b16 %v111
    %v438 = vunpack.c.l.b16 %v112
    %v439 = vunpack.c.h.b16 %v112
    %v440 = vunpack.c.l.b16 %v113
    %v441 = vunpack.c.h.b16 %v113
    %v442 = vunpack.c.l.b16 %v114
    %v443 = vunpack.c.h.b16 %v114
    %v444 = vunpack.c.l.b16 %v115
    %v445 = vunpack.c.h.b16 %v115
    %v446 = vunpack.c.l.b16 %v116
    %v447 = vunpack.c.h.b16 %v116
    %v448 = vunpack.c.l.b16 %v117
    %v449 = vunpack.c.h.b16 %v117
    %v450 = vunpack.c.l.b16 %v118
    %v451 = vunpack.c.h.b16 %v118
    %v452 = vunpack.c.l.b16 %v119
    %v453 = vunpack.c.h.b16 %v119
    %v454 = vunpack.c.l.b16 %v120
    %v455 = vunpack.c.h.b16 %v120
    %v456 = vunpack.c.l.b16 %v121
    %v457 = vunpack.c.h.b16 %v121
    %v458 = vunpack.c.l.b16 %v122
    %v459 = vunpack.c.h.b16 %v122
    %v460 = vunpack.c.l.b16 %v123
    %v461 = vunpack.c.h.b16 %v123
    %v462 = vunpack.c.l.b16 %v124
    %v463 = vunpack.c.h.b16 %v124
    %v464 = vunpack.c.l.b16 %v125
    %v465 = vunpack.c.h.b16 %v125
    %v466 = vunpack.c.l.b16 %v126
    %v467 = vunpack.c.h.b16 %v126
    %v468 = vunpack.c.l.b16 %v127
    %v469 = vunpack.c.h.b16 %v127
    %v470 = vunpack.c.l.b16 %v128
    %v471 = vunpack.c.h.b16 %v128
    %v472 = vunpack.c.l.b16 %v129
    %v473 = vunpack.c.h.b16 %v129
    %v474 = vunpack.c.l.b16 %v130
    %v475 = vunpack.c.h.b16 %v130
    %v476 = vunpack.c.l.b16 %v131
    %v477 = vunpack.c.h.b16 %v131
    %v478 = vunpack.c.l.b16 %v132
    %v479 = vunpack.c.h.b16 %v132
    %v480 = vunpack.c.l.b16 %v133
    %v481 = vunpack.c.h.b16 %v133
    %v482 = vunpack.c.l.b16 %v134
    %v483 = vunpack.c.h.b16 %v134
    %v484 = vunpack.c.l.b16 %v135
    %v485 = vunpack.c.h.b16 %v135
    %v486 = vunpack.c.l.b16 %v136
    %v487 = vunpack.c.h.b16 %v136
    %v488 = vunpack.c.l.b16 %v137
    %v489 = vunpack.c.h.b16 %v137
    %v490 = vunpack.c.l.b16 %v138
    %v491 = vunpack.c.h.b16 %v138
    %v492 = vunpack.c.l.b16 %v139
    %v493 = vunpack.c.h.b16 %v139
    %v494 = vunpack.c.l.b16 %v140
    %v495 = vunpack.c.h.b16 %v140
    %v496 = vunpack.c.l.b16 %v141
    %v497 = vunpack.c.h.b16 %v141
    %v498 = vunpack.c.l.b16 %v142
    %v499 = vunpack.c.h.b16 %v142
    %v500 = vunpack.c.l.b16 %v143
    %v501 = vunpack.c.h.b16 %v143
    %v502 = vunpack.c.l.b16 %v144
    %v503 = vunpack.c.h.b16 %v144
    %v504 = vunpack.c.l.b16 %v145
    %v505 = vunpack.c.h.b16 %v145
    %v506 = vunpack.c.l.b16 %v146
    %v507 = vunpack.c.h.b16 %v146
    %v508 = vunpack.c.l.b16 %v147
    %v509 = vunpack.c.h.b16 %v147
    %v510 = vunpack.c.l.b16 %v148
    %v511 = vunpack.c.h.b16 %v148
    %v512 = vunpack.c.l.b16 %v149
    %v513 = vunpack.c.h.b16 %v149
    %v514 = vunpack.c.l.b16 %v150
    %v515 = vunpack.c.h.b16 %v150
    %v516 = vunpack.c.l.b16 %v151
    %v517 = vunpack.c.h.b16 %v151
    %v518 = vunpack.c.l.b16 %v152
    %v519 = vunpack.c.h.b16 %v152
    %v520 = vunpack.c.l.b16 %v153
    %v521 = vunpack.c.h.b16 %v153
    %v522 = vunpack.c.l.b16 %v154
    %v523 = vunpack.c.h.b16 %v154
    %v524 = vunpack.c.l.b16 %v155
    %v525 = vunpack.c.h.b16 %v155
    %v526 = vunpack.c.l.b16 %v156
    %v527 = vunpack.c.h.b16 %v156
    %v528 = vunpack.c.l.b16 %v157
    %v529 = vunpack.c.h.b16 %v157
    %v530 = vunpack.c.l.b16 %v158
    %v531 = vunpack.c.h.b16 %v158
    %v532 = vunpack.c.l.b16 %v159
    %v533 = vunpack.c.h.b16 %v159
    %v534 = vunpack.c.l.b16 %v160
    %v535 = vunpack.c.h.b16 %v160
    %v536 = vunpack.c.l.b16 %v161
    %v537 = vunpack.c.h.b16 %v161
    %v538 = vunpack.c.l.b16 %v162
    %v539 = vunpack.c.h.b16 %v162
    %v540 = vunpack.c.l.b16 %v163
    %v541 = vunpack.c.h.b16 %v163
    %v542 = vunpack.c.l.b16 %v164
    %v543 = vunpack.c.h.b16 %v164
    %v544 = vunpack.c.l.b16 %v165
    %v545 = vunpack.c.h.b16 %v165
    %v546 = vunpack.c.l.b16 %v166
    %v547 = vunpack.c.h.b16 %v166
    %v548 = vunpack.c.l.b16 %v167
    %v549 = vunpack.c.h.b16 %v167
    %v550 = vunpack.c.l.b16 %v168
    %v551 = vunpack.c.h.b16 %v168
    %v552 = vunpack.c.l.b16 %v169
    %v553 = vunpack.c.h.b16 %v169
    %v554 = vunpack.c.l.b16 %v170
    %v555 = vunpack.c.h.b16 %v170
    %v556 = vunpack.c.l.b16 %v171
    %v557 = vunpack.c.h.b16 %v171
    %v558 = vunpack.c.l.b16 %v172
    %v559 = vunpack.c.h.b16 %v172
    %v560 = vunpack.c.l.b16 %v173
    %v561 = vunpack.c.h.b16 %v173
    %v562 = vunpack.c.l.b16 %v174
    %v563 = vunpack.c.h.b16 %v174
    %v564 = vunpack.c.l.b16 %v175
    %v565 = vunpack.c.h.b16 %v175
    %v566 = vunpack.c.l.b16 %v176
    %v567 = vunpack.c.h.b16 %v176
    %v568 = vunpack.c.l.b16 %v177
    %v569 = vunpack.c.h.b16 %v177
    %v570 = vunpack.c.l.b16 %v178
    %v571 = vunpack.c.h.b16 %v178
    %v572 = vunpack.c.l.b16 %v179
    %v573 = vunpack.c.h.b16 %v179
    %v574 = vunpack.c.l.b16 %v180
    %v575 = vunpack.c.h.b16 %v180
    %v576 = vunpack.c.l.b16 %v181
    %v577 = vunpack.c.h.b16 %v181
    %v578 = vunpack.c.l.b16 %v182
    %v579 = vunpack.c.h.b16 %v182
    %v580 = vunpack.c.l.b16 %v183
    %v581 = vunpack.c.h.b16 %v183
    %v582 = vunpack.c.l.b16 %v184
    %v583 = vunpack.c.h.b16 %v184
    %v584 = vunpack.c.l.b16 %v185
    %v585 = vunpack.c.h.b16 %v185
    %v586 = vunpack.c.l.b16 %v186
    %v587 = vunpack.c.h.b16 %v186
    %v588 = vunpack.c.l.b16 %v187
    %v589 = vunpack.c.h.b16 %v187
    %v590 = vunpack.c.l.b16 %v188
    %v591 = vunpack.c.h.b16 %v188
    %v592 = vunpack.c.l.b16 %v189
    %v593 = vunpack.c.h.b16 %v189
    %v594 = vunpack.c.l.b16 %v190
    %v595 = vunpack.c.h.b16 %v190
    %v596 = vunpack.c.l.b16 %v191
    %v597 = vunpack.c.h.b16 %v191
    %v598 = vunpack.c.l.b16 %v192
    %v599 = vunpack.c.h.b16 %v192
    %v600 = vunpack.c.l.b16 %v193
    %v601 = vunpack.c.h.b16 %v193
    %v602 = vunpack.c.l.b16 %v194
    %v603 = vunpack.c.h.b16 %v194
    %v604 = vunpack.c.l.b16 %v195
    %v605 = vunpack.c.h.b16 %v195
    %v606 = vunpack.c.l.b16 %v196
    %v607 = vunpack.c.h.b16 %v196
    %v608 = vunpack.c.l.b16 %v197
    %v609 = vunpack.c.h.b16 %v197
    %v610 = vunpack.c.l.b16 %v198
    %v611 = vunpack.c.h.b16 %v198
    %v612 = vunpack.c.l.b16 %v199
    %v613 = vunpack.c.h.b16 %v199
    %v614 = vunpack.c.l.b16 %v200
    %v615 = vunpack.c.h.b16 %v200
    %v616 = vunpack.c.l.b16 %v201
    %v617 = vunpack.c.h.b16 %v201
    %v618 = vunpack.c.l.b16 %v202
    %v619 = vunpack.c.h.b16 %v202
    %v620 = vunpack.c.l.b16 %v203
    %v621 = vunpack.c.h.b16 %v203
    %v622 = vunpack.c.l.b16 %v204
    %v623 = vunpack.c.h.b16 %v204
    %v624 = vunpack.c.l.b16 %v205
    %v625 = vunpack.c.h.b16 %v205
    %v626 = vunpack.c.l.b16 %v206
    %v627 = vunpack.c.h.b16 %v206
    %v628 = vunpack.c.l.b16 %v207
    %v629 = vunpack.c.h.b16 %v207
    %v630 = vunpack.c.l.b16 %v208
    %v631 = vunpack.c.h.b16 %v208
    %v632 = vunpack.c.l.b16 %v209
    %v633 = vunpack.c.h.b16 %v209
    %v634 = vunpack.c.l.b16 %v210
    %v635 = vunpack.c.h.b16 %v210
    %v636 = vunpack.c.l.b16 %v211
    %v637 = vunpack.c.h.b16 %v211
    %v638 = vpack.c.b16 %v390, %v382
    %v639 = vpack.c.b16 %v391, %v383
    %v640 = vpack.c.b16 %v392, %v384
    %v641 = vpack.c.b16 %v393, %v385
    %v642 = vpack.c.b16 %v394, %v386
    %v643 = vpack.c.b16 %v395, %v387
    %v644 = vpack.c.b16 %v396, %v388
    %v645 = vpack.c.b16 %v397, %v389
    %v646 = vpack.c.b16 %v406, %v398
    %v647 = vpack.c.b16 %v407, %v399
    %v648 = vpack.c.b16 %v408, %v400
    %v649 = vpack.c.b16 %v409, %v401
    %v650 = vpack.c.b16 %v410, %v402
    %v651 = vpack.c.b16 %v411, %v403
    %v652 = vpack.c.b16 %v412, %v404
    %v653 = vpack.c.b16 %v413, %v405
    %v654 = vpack.c.b16 %v422, %v414
    %v655 = vpack.c.b16 %v423, %v415
    %v656 = vpack.c.b16 %v424, %v416
    %v657 = vpack.c.b16 %v425, %v417
    %v658 = vpack.c.b16 %v426, %v418
    %v659 = vpack.c.b16 %v427, %v419
    %v660 = vpack.c.b16 %v428, %v420
    %v661 = vpack.c.b16 %v429, %v421
    %v662 = vpack.c.b16 %v438, %v430
    %v663 = vpack.c.b16 %v439, %v431
    %v664 = vpack.c.b16 %v440, %v432
    %v665 = vpack.c.b16 %v441, %v433
    %v666 = vpack.c.b16 %v442, %v434
    %v667 = vpack.c.b16 %v443, %v435
    %v668 = vpack.c.b16 %v444, %v436
    %v669 = vpack.c.b16 %v445, %v437
    %v670 = vpack.c.b16 %v454, %v446
    %v671 = vpack.c.b16 %v455, %v447
    %v672 = vpack.c.b16 %v456, %v448
    %v673 = vpack.c.b16 %v457, %v449
    %v674 = vpack.c.b16 %v458, %v450
    %v675 = vpack.c.b16 %v459, %v451
    %v676 = vpack.c.b16 %v460, %v452
    %v677 = vpack.c.b16 %v461, %v453
    %v678 = vpack.c.b16 %v470, %v462
    %v679 = vpack.c.b16 %v471, %v463
    %v680 = vpack.c.b16 %v472, %v464
    %v681 = vpack.c.b16 %v473, %v465
    %v682 = vpack.c.b16 %v474, %v466
    %v683 = vpack.c.b16 %v475, %v467
    %v684 = vpack.c.b16 %v476, %v468
    %v685 = vpack.c.b16 %v477, %v469
    %v686 = vpack.c.b16 %v486, %v478
    %v687 = vpack.c.b16 %v487, %v479
    %v688 = vpack.c.b16 %v488, %v480
    %v689 = vpack.c.b16 %v489, %v481
    %v690 = vpack.c.b16 %v490, %v482
    %v691 = vpack.c.b16 %v491, %v483
    %v692 = vpack.c.b16 %v492, %v484
    %v693 = vpack.c.b16 %v493, %v485
    %v694 = vpack.c.b16 %v502, %v494
    %v695 = vpack.c.b16 %v503, %v495
    %v696 = vpack.c.b16 %v504, %v496
    %v697 = vpack.c.b16 %v505, %v497
    %v698 = vpack.c.b16 %v506, %v498
    %v699 = vpack.c.b16 %v507, %v499
    %v700 = vpack.c.b16 %v508, %v500
    %v701 = vpack.c.b16 %v509, %v501
    %v702 = vpack.c.b16 %v518, %v510
    %v703 = vpack.c.b16 %v519, %v511
    %v704 = vpack.c.b16 %v520, %v512
    %v705 = vpack.c.b16 %v521, %v513
    %v706 = vpack.c.b16 %v522, %v514
    %v707 = vpack.c.b16 %v523, %v515
    %v708 = vpack.c.b16 %v524, %v516
    %v709 = vpack.c.b16 %v525, %v517
    %v710 = vpack.c.b16 %v534, %v526
    %v711 = vpack.c.b16 %v535, %v527
    %v712 = vpack.c.b16 %v536, %v528
    %v713 = vpack.c.b16 %v537, %v529
    %v714 = vpack.c.b16 %v538, %v530
    %v715 = vpack.c.b16 %v539, %v531
    %v716 = vpack.c.b16 %v540, %v532
    %v717 = vpack.c.b16 %v541, %v533
    %v718 = vpack.c.b16 %v550, %v542
    %v719 = vpack.c.b16 %v551, %v543
    %v720 = vpack.c.b16 %v552, %v544
    %v721 = vpack.c.b16 %v553, %v545
    %v722 = vpack.c.b16 %v554, %v546
    %v723 = vpack.c.b16 %v555, %v547
    %v724 = vpack.c.b16 %v556, %v548
    %v725 = vpack.c.b16 %v557, %v549
    %v726 = vpack.c.b16 %v566, %v558
    %v727 = vpack.c.b16 %v567, %v559
    %v728 = vpack.c.b16 %v568, %v560
    %v729 = vpack.c.b16 %v569, %v561
    %v730 = vpack.c.b16 %v570, %v562
    %v731 = vpack.c.b16 %v571, %v563
    %v732 = vpack.c.b16 %v572, %v564
    %v733 = vpack.c.b16 %v573, %v565
    %v734 = vpack.c.b16 %v582, %v574
    %v735 = vpack.c.b16 %v583, %v575
    %v736 = vpack.c.b16 %v584, %v576
    %v737 = vpack.c.b16 %v585, %v577
    %v738 = vpack.c.b16 %v586, %v578
    %v739 = vpack.c.b16 %v587, %v579
    %v740 = vpack.c.b16 %v588, %v580
    %v741 = vpack.c.b16 %v589, %v581
    %v742 = vpack.c.b16 %v598, %v590
    %v743 = vpack.c.b16 %v599, %v591
    %v744 = vpack.c.b16 %v600, %v592
    %v745 = vpack.c.b16 %v601, %v593
    %v746 = vpack.c.b16 %v602, %v594
    %v747 = vpack.c.b16 %v603, %v595
    %v748 = vpack.c.b16 %v604, %v596
    %v749 = vpack.c.b16 %v605, %v597
    %v750 = vpack.c.b16 %v614, %v606
    %v751 = vpack.c.b16 %v615, %v607
    %v752 = vpack.c.b16 %v616, %v608
    %v753 = vpack.c.b16 %v617, %v609
    %v754 = vpack.c.b16 %v618, %v610
    %v755 = vpack.c.b16 %v619, %v611
    %v756 = vpack.c.b16 %v620, %v612
    %v757 = vpack.c.b16 %v621, %v613
    %v758 = vpack.c.b16 %v630, %v622
    %v759 = vpack.c.b16 %v631, %v623
    %v760 = vpack.c.b16 %v632, %v624
    %v761 = vpack.c.b16 %v633, %v625
    %v762 = vpack.c.b16 %v634, %v626
    %v763 = vpack.c.b16 %v635, %v627
    %v764 = vpack.c.b16 %v636, %v628
    %v765 = vpack.c.b16 %v637, %v629
    %894 = vmatprep.subr.bf16.mxu0 %v639
    %895 = vmatpush1.bf16.msra.mxu0 %v638
    %896 = vmatprep.subr.bf16.mxu0 %v647
    %897 = vmatpush1.bf16.msra.mxu0 %v646
    %898 = vmatprep.subr.bf16.mxu0 %v655
    %899 = vmatpush1.bf16.msra.mxu0 %v654
    %900 = vmatprep.subr.bf16.mxu0 %v663
    %901 = vmatpush1.bf16.msra.mxu0 %v662
    %902 = vmatprep.subr.bf16.mxu0 %v671
    %903 = vmatpush1.bf16.msra.mxu0 %v670
    %904 = vmatprep.subr.bf16.mxu0 %v679
    %905 = vmatpush1.bf16.msra.mxu0 %v678
    %906 = vmatprep.subr.bf16.mxu0 %v687
    %907 = vmatpush1.bf16.msra.mxu0 %v686
    %908 = vmatprep.subr.bf16.mxu0 %v695
    %909 = vmatpush1.bf16.msra.mxu0 %v694
    %910 = vmatprep.subr.bf16.mxu0 %v703
    %911 = vmatpush1.bf16.msra.mxu0 %v702
    %912 = vmatprep.subr.bf16.mxu0 %v711
    %913 = vmatpush1.bf16.msra.mxu0 %v710
    %914 = vmatprep.subr.bf16.mxu0 %v719
    %915 = vmatpush1.bf16.msra.mxu0 %v718
    %916 = vmatprep.subr.bf16.mxu0 %v727
    %917 = vmatpush1.bf16.msra.mxu0 %v726
    %918 = vmatprep.subr.bf16.mxu0 %v735
    %919 = vmatpush1.bf16.msra.mxu0 %v734
    %920 = vmatprep.subr.bf16.mxu0 %v743
    %921 = vmatpush1.bf16.msra.mxu0 %v742
    %922 = vmatprep.subr.bf16.mxu0 %v751
    %923 = vmatpush1.bf16.msra.mxu0 %v750
    %924 = vmatprep.subr.bf16.mxu0 %v759
    %925 = vmatpush1.bf16.msra.mxu0 %v758
    %926 = vmatprep.mubr.bf16.mxu0 %v83
    %927 = vmatmul.mubr.bf16.gmra.mrb[0].mxu0 %v82
    %v928 = vpop.f32.mrb[0].mxu0
    %v929 = vadd.f32 %v217, %v928
    %v930 = vpop.f32.mrb[0].mxu0
    %v931 = vadd.f32 %v221, %v930
    %v932 = vpop.f32.mrb[0].mxu0
    %v933 = vadd.f32 %v217, %v932
    %v934 = vpop.f32.mrb[0].mxu0
    %v935 = vadd.f32 %v221, %v934
    %936 = vdwg.mxu0
    %937 = vmatprep.subr.bf16.mxu0 %v641
    %938 = vmatpush1.bf16.msra.mxu0 %v640
    %939 = vmatprep.subr.bf16.mxu0 %v649
    %940 = vmatpush1.bf16.msra.mxu0 %v648
    %941 = vmatprep.subr.bf16.mxu0 %v657
    %942 = vmatpush1.bf16.msra.mxu0 %v656
    %943 = vmatprep.subr.bf16.mxu0 %v665
    %944 = vmatpush1.bf16.msra.mxu0 %v664
    %945 = vmatprep.subr.bf16.mxu0 %v673
    %946 = vmatpush1.bf16.msra.mxu0 %v672
    %947 = vmatprep.subr.bf16.mxu0 %v681
    %948 = vmatpush1.bf16.msra.mxu0 %v680
    %949 = vmatprep.subr.bf16.mxu0 %v689
    %950 = vmatpush1.bf16.msra.mxu0 %v688
    %951 = vmatprep.subr.bf16.mxu0 %v697
    %952 = vmatpush1.bf16.msra.mxu0 %v696
    %953 = vmatprep.subr.bf16.mxu0 %v705
    %954 = vmatpush1.bf16.msra.mxu0 %v704
    %955 = vmatprep.subr.bf16.mxu0 %v713
    %956 = vmatpush1.bf16.msra.mxu0 %v712
    %957 = vmatprep.subr.bf16.mxu0 %v721
    %958 = vmatpush1.bf16.msra.mxu0 %v720
    %959 = vmatprep.subr.bf16.mxu0 %v729
    %960 = vmatpush1.bf16.msra.mxu0 %v728
    %961 = vmatprep.subr.bf16.mxu0 %v737
    %962 = vmatpush1.bf16.msra.mxu0 %v736
    %963 = vmatprep.subr.bf16.mxu0 %v745
    %964 = vmatpush1.bf16.msra.mxu0 %v744
    %965 = vmatprep.subr.bf16.mxu0 %v753
    %966 = vmatpush1.bf16.msra.mxu0 %v752
    %967 = vmatprep.subr.bf16.mxu0 %v761
    %968 = vmatpush1.bf16.msra.mxu0 %v760
    %969 = vmatprep.mubr.bf16.mxu0 %v83
    %970 = vmatmul.mubr.bf16.gmra.mrb[0].mxu0 %v82
    %v971 = vpop.f32.mrb[0].mxu0
    %v972 = vadd.f32 %v225, %v971
    %v973 = vpop.f32.mrb[0].mxu0
    %v974 = vadd.f32 %v229, %v973
    %v975 = vpop.f32.mrb[0].mxu0
    %v976 = vadd.f32 %v225, %v975
    %v977 = vpop.f32.mrb[0].mxu0
    %v978 = vadd.f32 %v229, %v977
    %979 = vdwg.mxu0
    %980 = vmatprep.subr.bf16.mxu0 %v643
    %981 = vmatpush1.bf16.msra.mxu0 %v642
    %982 = vmatprep.subr.bf16.mxu0 %v651
    %983 = vmatpush1.bf16.msra.mxu0 %v650
    %984 = vmatprep.subr.bf16.mxu0 %v659
    %985 = vmatpush1.bf16.msra.mxu0 %v658
    %986 = vmatprep.subr.bf16.mxu0 %v667
    %987 = vmatpush1.bf16.msra.mxu0 %v666
    %988 = vmatprep.subr.bf16.mxu0 %v675
    %989 = vmatpush1.bf16.msra.mxu0 %v674
    %990 = vmatprep.subr.bf16.mxu0 %v683
    %991 = vmatpush1.bf16.msra.mxu0 %v682
    %992 = vmatprep.subr.bf16.mxu0 %v691
    %993 = vmatpush1.bf16.msra.mxu0 %v690
    %994 = vmatprep.subr.bf16.mxu0 %v699
    %995 = vmatpush1.bf16.msra.mxu0 %v698
    %996 = vmatprep.subr.bf16.mxu0 %v707
    %997 = vmatpush1.bf16.msra.mxu0 %v706
    %998 = vmatprep.subr.bf16.mxu0 %v715
    %999 = vmatpush1.bf16.msra.mxu0 %v714
    %1000 = vmatprep.subr.bf16.mxu0 %v723
    %1001 = vmatpush1.bf16.msra.mxu0 %v722
    %1002 = vmatprep.subr.bf16.mxu0 %v731
    %1003 = vmatpush1.bf16.msra.mxu0 %v730
    %1004 = vmatprep.subr.bf16.mxu0 %v739
    %1005 = vmatpush1.bf16.msra.mxu0 %v738
    %1006 = vmatprep.subr.bf16.mxu0 %v747
    %1007 = vmatpush1.bf16.msra.mxu0 %v746
    %1008 = vmatprep.subr.bf16.mxu0 %v755
    %1009 = vmatpush1.bf16.msra.mxu0 %v754
    %1010 = vmatprep.subr.bf16.mxu0 %v763
    %1011 = vmatpush1.bf16.msra.mxu0 %v762
    %1012 = vmatprep.mubr.bf16.mxu0 %v83
    %1013 = vmatmul.mubr.bf16.gmra.mrb[0].mxu0 %v82
    %v1014 = vpop.f32.mrb[0].mxu0
    %v1015 = vadd.f32 %v233, %v1014
    %v1016 = vpop.f32.mrb[0].mxu0
    %v1017 = vadd.f32 %v237, %v1016
    %v1018 = vpop.f32.mrb[0].mxu0
    %v1019 = vadd.f32 %v233, %v1018
    %v1020 = vpop.f32.mrb[0].mxu0
    %v1021 = vadd.f32 %v237, %v1020
    %1022 = vdwg.mxu0
    %1023 = vmatprep.subr.bf16.mxu0 %v645
    %1024 = vmatpush1.bf16.msra.mxu0 %v644
    %1025 = vmatprep.subr.bf16.mxu0 %v653
    %1026 = vmatpush1.bf16.msra.mxu0 %v652
    %1027 = vmatprep.subr.bf16.mxu0 %v661
    %1028 = vmatpush1.bf16.msra.mxu0 %v660
    %1029 = vmatprep.subr.bf16.mxu0 %v669
    %1030 = vmatpush1.bf16.msra.mxu0 %v668
    %1031 = vmatprep.subr.bf16.mxu0 %v677
    %1032 = vmatpush1.bf16.msra.mxu0 %v676
    %1033 = vmatprep.subr.bf16.mxu0 %v685
    %1034 = vmatpush1.bf16.msra.mxu0 %v684
    %1035 = vmatprep.subr.bf16.mxu0 %v693
    %1036 = vmatpush1.bf16.msra.mxu0 %v692
    %1037 = vmatprep.subr.bf16.mxu0 %v701
    %1038 = vmatpush1.bf16.msra.mxu0 %v700
    %1039 = vmatprep.subr.bf16.mxu0 %v709
    %1040 = vmatpush1.bf16.msra.mxu0 %v708
    %1041 = vmatprep.subr.bf16.mxu0 %v717
    %1042 = vmatpush1.bf16.msra.mxu0 %v716
    %1043 = vmatprep.subr.bf16.mxu0 %v725
    %1044 = vmatpush1.bf16.msra.mxu0 %v724
    %1045 = vmatprep.subr.bf16.mxu0 %v733
    %1046 = vmatpush1.bf16.msra.mxu0 %v732
    %1047 = vmatprep.subr.bf16.mxu0 %v741
    %1048 = vmatpush1.bf16.msra.mxu0 %v740
    %1049 = vmatprep.subr.bf16.mxu0 %v749
    %1050 = vmatpush1.bf16.msra.mxu0 %v748
    %1051 = vmatprep.subr.bf16.mxu0 %v757
    %1052 = vmatpush1.bf16.msra.mxu0 %v756
    %1053 = vmatprep.subr.bf16.mxu0 %v765
    %1054 = vmatpush1.bf16.msra.mxu0 %v764
    %1055 = vmatprep.mubr.bf16.mxu0 %v83
    %1056 = vmatmul.mubr.bf16.gmra.mrb[0].mxu0 %v82
    %v1057 = vpop.f32.mrb[0].mxu0
    %v1058 = vadd.f32 %v241, %v1057
    %v1059 = vpop.f32.mrb[0].mxu0
    %v1060 = vadd.f32 %v245, %v1059
    %v1061 = vpop.f32.mrb[0].mxu0
    %v1062 = vadd.f32 %v241, %v1061
    %v1063 = vpop.f32.mrb[0].mxu0
    %v1064 = vadd.f32 %v245, %v1063
    %1065 = vdwg.mxu0
    %vm1066 = vcmp.ge.f32.partialorder %v929, 0.0
    %vm1067 = vcmp.ge.f32.partialorder %v931, 0.0
    %vm1068 = vcmp.ge.f32.partialorder %v972, 0.0
    %vm1069 = vcmp.ge.f32.partialorder %v974, 0.0
    %vm1070 = vcmp.ge.f32.partialorder %v1015, 0.0
    %vm1071 = vcmp.ge.f32.partialorder %v1017, 0.0
    %vm1072 = vcmp.ge.f32.partialorder %v1058, 0.0
    %vm1073 = vcmp.ge.f32.partialorder %v1060, 0.0
    %vm1074 = vcmp.ge.f32.partialorder %v933, 0.0
    %vm1075 = vcmp.ge.f32.partialorder %v935, 0.0
    %vm1076 = vcmp.ge.f32.partialorder %v976, 0.0
    %vm1077 = vcmp.ge.f32.partialorder %v978, 0.0
    %vm1078 = vcmp.ge.f32.partialorder %v1019, 0.0
    %vm1079 = vcmp.ge.f32.partialorder %v1021, 0.0
    %vm1080 = vcmp.ge.f32.partialorder %v1062, 0.0
    %vm1081 = vcmp.ge.f32.partialorder %v1064, 0.0
    %v1082 = vstv %s56
    %v1083 = vmul.f32 %v1082, %v929
    %v1084 = vmul.f32 %v1082, %v931
    %v1085 = vmul.f32 %v1082, %v972
    %v1086 = vmul.f32 %v1082, %v974
    %v1087 = vmul.f32 %v1082, %v1015
    %v1088 = vmul.f32 %v1082, %v1017
    %v1089 = vmul.f32 %v1082, %v1058
    %v1090 = vmul.f32 %v1082, %v1060
    %v1091 = vmul.f32 %v1082, %v933
    %v1092 = vmul.f32 %v1082, %v935
    %v1093 = vmul.f32 %v1082, %v976
    %v1094 = vmul.f32 %v1082, %v978
    %v1095 = vmul.f32 %v1082, %v1019
    %v1096 = vmul.f32 %v1082, %v1021
    %v1097 = vmul.f32 %v1082, %v1062
    %v1098 = vmul.f32 %v1082, %v1064
    %v1099 = vsel %vm1066, %v929, %v1083
    %v1100 = vsel %vm1067, %v931, %v1084
    %v1101 = vsel %vm1068, %v972, %v1085
    %v1102 = vsel %vm1069, %v974, %v1086
    %v1103 = vsel %vm1070, %v1015, %v1087
    %v1104 = vsel %vm1071, %v1017, %v1088
    %v1105 = vsel %vm1072, %v1058, %v1089
    %v1106 = vsel %vm1073, %v1060, %v1090
    %v1107 = vsel %vm1074, %v933, %v1091
    %v1108 = vsel %vm1075, %v935, %v1092
    %v1109 = vsel %vm1076, %v976, %v1093
    %v1110 = vsel %vm1077, %v978, %v1094
    %v1111 = vsel %vm1078, %v1019, %v1095
    %v1112 = vsel %vm1079, %v1021, %v1096
    %v1113 = vsel %vm1080, %v1062, %v1097
    %v1114 = vsel %vm1081, %v1064, %v1098
    %v1115 = vpack.c.bf16 %v1107, %v1099
    %v1116 = vpack.c.bf16 %v1108, %v1100
    %v1117 = vpack.c.bf16 %v1109, %v1101
    %v1118 = vpack.c.bf16 %v1110, %v1102
    %v1119 = vpack.c.bf16 %v1111, %v1103
    %v1120 = vpack.c.bf16 %v1112, %v1104
    %v1121 = vpack.c.bf16 %v1113, %v1105
    %v1122 = vpack.c.bf16 %v1114, %v1106
    %v1123 = vld [vmem:[#allocation5] sm:$0xff]
    %v1124 = vld [vmem:[#allocation5 + $0x8] sm:$0xff]
    %v1125 = vld [vmem:[#allocation5 + $0x10] sm:$0xff]
    %v1126 = vld [vmem:[#allocation5 + $0x18] sm:$0xff]
    %v1127 = vld [vmem:[#allocation5 + $0x20] sm:$0xff]
    %v1128 = vld [vmem:[#allocation5 + $0x28] sm:$0xff]
    %v1129 = vld [vmem:[#allocation5 + $0x30] sm:$0xff]
    %v1130 = vld [vmem:[#allocation5 + $0x38] sm:$0xff]
    %v1131 = vld [vmem:[#allocation5 + $0x40] sm:$0xff]
    %v1132 = vld [vmem:[#allocation5 + $0x48] sm:$0xff]
    %v1133 = vld [vmem:[#allocation5 + $0x50] sm:$0xff]
    %v1134 = vld [vmem:[#allocation5 + $0x58] sm:$0xff]
    %v1135 = vld [vmem:[#allocation5 + $0x60] sm:$0xff]
    %v1136 = vld [vmem:[#allocation5 + $0x68] sm:$0xff]
    %v1137 = vld [vmem:[#allocation5 + $0x70] sm:$0xff]
    %v1138 = vld [vmem:[#allocation5 + $0x78] sm:$0xff]
    %v1139 = vld [vmem:[#allocation5 + $0x80] sm:$0xff]
    %v1140 = vld [vmem:[#allocation5 + $0x88] sm:$0xff]
    %v1141 = vld [vmem:[#allocation5 + $0x90] sm:$0xff]
    %v1142 = vld [vmem:[#allocation5 + $0x98] sm:$0xff]
    %v1143 = vld [vmem:[#allocation5 + $0xa0] sm:$0xff]
    %v1144 = vld [vmem:[#allocation5 + $0xa8] sm:$0xff]
    %v1145 = vld [vmem:[#allocation5 + $0xb0] sm:$0xff]
    %v1146 = vld [vmem:[#allocation5 + $0xb8] sm:$0xff]
    %v1147 = vld [vmem:[#allocation5 + $0xc0] sm:$0xff]
    %v1148 = vld [vmem:[#allocation5 + $0xc8] sm:$0xff]
    %v1149 = vld [vmem:[#allocation5 + $0xd0] sm:$0xff]
    %v1150 = vld [vmem:[#allocation5 + $0xd8] sm:$0xff]
    %v1151 = vld [vmem:[#allocation5 + $0xe0] sm:$0xff]
    %v1152 = vld [vmem:[#allocation5 + $0xe8] sm:$0xff]
    %v1153 = vld [vmem:[#allocation5 + $0xf0] sm:$0xff]
    %v1154 = vld [vmem:[#allocation5 + $0xf8] sm:$0xff]
    %v1155 = vld [vmem:[#allocation5 + $0x100] sm:$0xff]
    %v1156 = vld [vmem:[#allocation5 + $0x108] sm:$0xff]
    %v1157 = vld [vmem:[#allocation5 + $0x110] sm:$0xff]
    %v1158 = vld [vmem:[#allocation5 + $0x118] sm:$0xff]
    %v1159 = vld [vmem:[#allocation5 + $0x120] sm:$0xff]
    %v1160 = vld [vmem:[#allocation5 + $0x128] sm:$0xff]
    %v1161 = vld [vmem:[#allocation5 + $0x130] sm:$0xff]
    %v1162 = vld [vmem:[#allocation5 + $0x138] sm:$0xff]
    %v1163 = vld [vmem:[#allocation5 + $0x140] sm:$0xff]
    %v1164 = vld [vmem:[#allocation5 + $0x148] sm:$0xff]
    %v1165 = vld [vmem:[#allocation5 + $0x150] sm:$0xff]
    %v1166 = vld [vmem:[#allocation5 + $0x158] sm:$0xff]
    %v1167 = vld [vmem:[#allocation5 + $0x160] sm:$0xff]
    %v1168 = vld [vmem:[#allocation5 + $0x168] sm:$0xff]
    %v1169 = vld [vmem:[#allocation5 + $0x170] sm:$0xff]
    %v1170 = vld [vmem:[#allocation5 + $0x178] sm:$0xff]
    %v1171 = vld [vmem:[#allocation5 + $0x180] sm:$0xff]
    %v1172 = vld [vmem:[#allocation5 + $0x188] sm:$0xff]
    %v1173 = vld [vmem:[#allocation5 + $0x190] sm:$0xff]
    %v1174 = vld [vmem:[#allocation5 + $0x198] sm:$0xff]
    %v1175 = vld [vmem:[#allocation5 + $0x1a0] sm:$0xff]
    %v1176 = vld [vmem:[#allocation5 + $0x1a8] sm:$0xff]
    %v1177 = vld [vmem:[#allocation5 + $0x1b0] sm:$0xff]
    %v1178 = vld [vmem:[#allocation5 + $0x1b8] sm:$0xff]
    %v1179 = vld [vmem:[#allocation5 + $0x1c0] sm:$0xff]
    %v1180 = vld [vmem:[#allocation5 + $0x1c8] sm:$0xff]
    %v1181 = vld [vmem:[#allocation5 + $0x1d0] sm:$0xff]
    %v1182 = vld [vmem:[#allocation5 + $0x1d8] sm:$0xff]
    %v1183 = vld [vmem:[#allocation5 + $0x1e0] sm:$0xff]
    %v1184 = vld [vmem:[#allocation5 + $0x1e8] sm:$0xff]
    %v1185 = vld [vmem:[#allocation5 + $0x1f0] sm:$0xff]
    %v1186 = vld [vmem:[#allocation5 + $0x1f8] sm:$0xff]
    %v1187 = vld [vmem:[#allocation5 + $0x200] sm:$0xff]
    %v1188 = vld [vmem:[#allocation5 + $0x208] sm:$0xff]
    %v1189 = vld [vmem:[#allocation5 + $0x210] sm:$0xff]
    %v1190 = vld [vmem:[#allocation5 + $0x218] sm:$0xff]
    %v1191 = vld [vmem:[#allocation5 + $0x220] sm:$0xff]
    %v1192 = vld [vmem:[#allocation5 + $0x228] sm:$0xff]
    %v1193 = vld [vmem:[#allocation5 + $0x230] sm:$0xff]
    %v1194 = vld [vmem:[#allocation5 + $0x238] sm:$0xff]
    %v1195 = vld [vmem:[#allocation5 + $0x240] sm:$0xff]
    %v1196 = vld [vmem:[#allocation5 + $0x248] sm:$0xff]
    %v1197 = vld [vmem:[#allocation5 + $0x250] sm:$0xff]
    %v1198 = vld [vmem:[#allocation5 + $0x258] sm:$0xff]
    %v1199 = vld [vmem:[#allocation5 + $0x260] sm:$0xff]
    %v1200 = vld [vmem:[#allocation5 + $0x268] sm:$0xff]
    %v1201 = vld [vmem:[#allocation5 + $0x270] sm:$0xff]
    %v1202 = vld [vmem:[#allocation5 + $0x278] sm:$0xff]
    %v1203 = vld [vmem:[#allocation5 + $0x280] sm:$0xff]
    %v1204 = vld [vmem:[#allocation5 + $0x288] sm:$0xff]
    %v1205 = vld [vmem:[#allocation5 + $0x290] sm:$0xff]
    %v1206 = vld [vmem:[#allocation5 + $0x298] sm:$0xff]
    %v1207 = vld [vmem:[#allocation5 + $0x2a0] sm:$0xff]
    %v1208 = vld [vmem:[#allocation5 + $0x2a8] sm:$0xff]
    %v1209 = vld [vmem:[#allocation5 + $0x2b0] sm:$0xff]
    %v1210 = vld [vmem:[#allocation5 + $0x2b8] sm:$0xff]
    %v1211 = vld [vmem:[#allocation5 + $0x2c0] sm:$0xff]
    %v1212 = vld [vmem:[#allocation5 + $0x2c8] sm:$0xff]
    %v1213 = vld [vmem:[#allocation5 + $0x2d0] sm:$0xff]
    %v1214 = vld [vmem:[#allocation5 + $0x2d8] sm:$0xff]
    %v1215 = vld [vmem:[#allocation5 + $0x2e0] sm:$0xff]
    %v1216 = vld [vmem:[#allocation5 + $0x2e8] sm:$0xff]
    %v1217 = vld [vmem:[#allocation5 + $0x2f0] sm:$0xff]
    %v1218 = vld [vmem:[#allocation5 + $0x2f8] sm:$0xff]
    %v1219 = vld [vmem:[#allocation5 + $0x300] sm:$0xff]
    %v1220 = vld [vmem:[#allocation5 + $0x308] sm:$0xff]
    %v1221 = vld [vmem:[#allocation5 + $0x310] sm:$0xff]
    %v1222 = vld [vmem:[#allocation5 + $0x318] sm:$0xff]
    %v1223 = vld [vmem:[#allocation5 + $0x320] sm:$0xff]
    %v1224 = vld [vmem:[#allocation5 + $0x328] sm:$0xff]
    %v1225 = vld [vmem:[#allocation5 + $0x330] sm:$0xff]
    %v1226 = vld [vmem:[#allocation5 + $0x338] sm:$0xff]
    %v1227 = vld [vmem:[#allocation5 + $0x340] sm:$0xff]
    %v1228 = vld [vmem:[#allocation5 + $0x348] sm:$0xff]
    %v1229 = vld [vmem:[#allocation5 + $0x350] sm:$0xff]
    %v1230 = vld [vmem:[#allocation5 + $0x358] sm:$0xff]
    %v1231 = vld [vmem:[#allocation5 + $0x360] sm:$0xff]
    %v1232 = vld [vmem:[#allocation5 + $0x368] sm:$0xff]
    %v1233 = vld [vmem:[#allocation5 + $0x370] sm:$0xff]
    %v1234 = vld [vmem:[#allocation5 + $0x378] sm:$0xff]
    %v1235 = vld [vmem:[#allocation5 + $0x380] sm:$0xff]
    %v1236 = vld [vmem:[#allocation5 + $0x388] sm:$0xff]
    %v1237 = vld [vmem:[#allocation5 + $0x390] sm:$0xff]
    %v1238 = vld [vmem:[#allocation5 + $0x398] sm:$0xff]
    %v1239 = vld [vmem:[#allocation5 + $0x3a0] sm:$0xff]
    %v1240 = vld [vmem:[#allocation5 + $0x3a8] sm:$0xff]
    %v1241 = vld [vmem:[#allocation5 + $0x3b0] sm:$0xff]
    %v1242 = vld [vmem:[#allocation5 + $0x3b8] sm:$0xff]
    %v1243 = vld [vmem:[#allocation5 + $0x3c0] sm:$0xff]
    %v1244 = vld [vmem:[#allocation5 + $0x3c8] sm:$0xff]
    %v1245 = vld [vmem:[#allocation5 + $0x3d0] sm:$0xff]
    %v1246 = vld [vmem:[#allocation5 + $0x3d8] sm:$0xff]
    %v1247 = vld [vmem:[#allocation5 + $0x3e0] sm:$0xff]
    %v1248 = vld [vmem:[#allocation5 + $0x3e8] sm:$0xff]
    %v1249 = vld [vmem:[#allocation5 + $0x3f0] sm:$0xff]
    %v1250 = vld [vmem:[#allocation5 + $0x3f8] sm:$0xff]
    %v1251 = vld [vmem:[%s6 + $0x8] sm:$0x3]
    %v1253 = vlaneseq
    %v1254 = vshrl.u32 %v1253, 7
    %v1255 = vsub.s32 0, %v1254
    %v1256 = vrot.slane %v1251, %v1255
    %v1257 = vlaneseq
    %v1258 = vshrl.u32 %v1257, 7
    %v1259 = vsub.s32 1, %v1258
    %v1260 = vrot.slane %v1251, %v1259
    %v1391 = vunpack.c.l.b16 %v1123
    %v1392 = vunpack.c.h.b16 %v1123
    %v1393 = vunpack.c.l.b16 %v1124
    %v1394 = vunpack.c.h.b16 %v1124
    %v1395 = vunpack.c.l.b16 %v1125
    %v1396 = vunpack.c.h.b16 %v1125
    %v1397 = vunpack.c.l.b16 %v1126
    %v1398 = vunpack.c.h.b16 %v1126
    %v1399 = vunpack.c.l.b16 %v1127
    %v1400 = vunpack.c.h.b16 %v1127
    %v1401 = vunpack.c.l.b16 %v1128
    %v1402 = vunpack.c.h.b16 %v1128
    %v1403 = vunpack.c.l.b16 %v1129
    %v1404 = vunpack.c.h.b16 %v1129
    %v1405 = vunpack.c.l.b16 %v1130
    %v1406 = vunpack.c.h.b16 %v1130
    %v1407 = vunpack.c.l.b16 %v1131
    %v1408 = vunpack.c.h.b16 %v1131
    %v1409 = vunpack.c.l.b16 %v1132
    %v1410 = vunpack.c.h.b16 %v1132
    %v1411 = vunpack.c.l.b16 %v1133
    %v1412 = vunpack.c.h.b16 %v1133
    %v1413 = vunpack.c.l.b16 %v1134
    %v1414 = vunpack.c.h.b16 %v1134
    %v1415 = vunpack.c.l.b16 %v1135
    %v1416 = vunpack.c.h.b16 %v1135
    %v1417 = vunpack.c.l.b16 %v1136
    %v1418 = vunpack.c.h.b16 %v1136
    %v1419 = vunpack.c.l.b16 %v1137
    %v1420 = vunpack.c.h.b16 %v1137
    %v1421 = vunpack.c.l.b16 %v1138
    %v1422 = vunpack.c.h.b16 %v1138
    %v1423 = vunpack.c.l.b16 %v1139
    %v1424 = vunpack.c.h.b16 %v1139
    %v1425 = vunpack.c.l.b16 %v1140
    %v1426 = vunpack.c.h.b16 %v1140
    %v1427 = vunpack.c.l.b16 %v1141
    %v1428 = vunpack.c.h.b16 %v1141
    %v1429 = vunpack.c.l.b16 %v1142
    %v1430 = vunpack.c.h.b16 %v1142
    %v1431 = vunpack.c.l.b16 %v1143
    %v1432 = vunpack.c.h.b16 %v1143
    %v1433 = vunpack.c.l.b16 %v1144
    %v1434 = vunpack.c.h.b16 %v1144
    %v1435 = vunpack.c.l.b16 %v1145
    %v1436 = vunpack.c.h.b16 %v1145
    %v1437 = vunpack.c.l.b16 %v1146
    %v1438 = vunpack.c.h.b16 %v1146
    %v1439 = vunpack.c.l.b16 %v1147
    %v1440 = vunpack.c.h.b16 %v1147
    %v1441 = vunpack.c.l.b16 %v1148
    %v1442 = vunpack.c.h.b16 %v1148
    %v1443 = vunpack.c.l.b16 %v1149
    %v1444 = vunpack.c.h.b16 %v1149
    %v1445 = vunpack.c.l.b16 %v1150
    %v1446 = vunpack.c.h.b16 %v1150
    %v1447 = vunpack.c.l.b16 %v1151
    %v1448 = vunpack.c.h.b16 %v1151
    %v1449 = vunpack.c.l.b16 %v1152
    %v1450 = vunpack.c.h.b16 %v1152
    %v1451 = vunpack.c.l.b16 %v1153
    %v1452 = vunpack.c.h.b16 %v1153
    %v1453 = vunpack.c.l.b16 %v1154
    %v1454 = vunpack.c.h.b16 %v1154
    %v1455 = vunpack.c.l.b16 %v1155
    %v1456 = vunpack.c.h.b16 %v1155
    %v1457 = vunpack.c.l.b16 %v1156
    %v1458 = vunpack.c.h.b16 %v1156
    %v1459 = vunpack.c.l.b16 %v1157
    %v1460 = vunpack.c.h.b16 %v1157
    %v1461 = vunpack.c.l.b16 %v1158
    %v1462 = vunpack.c.h.b16 %v1158
    %v1463 = vunpack.c.l.b16 %v1159
    %v1464 = vunpack.c.h.b16 %v1159
    %v1465 = vunpack.c.l.b16 %v1160
    %v1466 = vunpack.c.h.b16 %v1160
    %v1467 = vunpack.c.l.b16 %v1161
    %v1468 = vunpack.c.h.b16 %v1161
    %v1469 = vunpack.c.l.b16 %v1162
    %v1470 = vunpack.c.h.b16 %v1162
    %v1471 = vunpack.c.l.b16 %v1163
    %v1472 = vunpack.c.h.b16 %v1163
    %v1473 = vunpack.c.l.b16 %v1164
    %v1474 = vunpack.c.h.b16 %v1164
    %v1475 = vunpack.c.l.b16 %v1165
    %v1476 = vunpack.c.h.b16 %v1165
    %v1477 = vunpack.c.l.b16 %v1166
    %v1478 = vunpack.c.h.b16 %v1166
    %v1479 = vunpack.c.l.b16 %v1167
    %v1480 = vunpack.c.h.b16 %v1167
    %v1481 = vunpack.c.l.b16 %v1168
    %v1482 = vunpack.c.h.b16 %v1168
    %v1483 = vunpack.c.l.b16 %v1169
    %v1484 = vunpack.c.h.b16 %v1169
    %v1485 = vunpack.c.l.b16 %v1170
    %v1486 = vunpack.c.h.b16 %v1170
    %v1487 = vunpack.c.l.b16 %v1171
    %v1488 = vunpack.c.h.b16 %v1171
    %v1489 = vunpack.c.l.b16 %v1172
    %v1490 = vunpack.c.h.b16 %v1172
    %v1491 = vunpack.c.l.b16 %v1173
    %v1492 = vunpack.c.h.b16 %v1173
    %v1493 = vunpack.c.l.b16 %v1174
    %v1494 = vunpack.c.h.b16 %v1174
    %v1495 = vunpack.c.l.b16 %v1175
    %v1496 = vunpack.c.h.b16 %v1175
    %v1497 = vunpack.c.l.b16 %v1176
    %v1498 = vunpack.c.h.b16 %v1176
    %v1499 = vunpack.c.l.b16 %v1177
    %v1500 = vunpack.c.h.b16 %v1177
    %v1501 = vunpack.c.l.b16 %v1178
    %v1502 = vunpack.c.h.b16 %v1178
    %v1503 = vunpack.c.l.b16 %v1179
    %v1504 = vunpack.c.h.b16 %v1179
    %v1505 = vunpack.c.l.b16 %v1180
    %v1506 = vunpack.c.h.b16 %v1180
    %v1507 = vunpack.c.l.b16 %v1181
    %v1508 = vunpack.c.h.b16 %v1181
    %v1509 = vunpack.c.l.b16 %v1182
    %v1510 = vunpack.c.h.b16 %v1182
    %v1511 = vunpack.c.l.b16 %v1183
    %v1512 = vunpack.c.h.b16 %v1183
    %v1513 = vunpack.c.l.b16 %v1184
    %v1514 = vunpack.c.h.b16 %v1184
    %v1515 = vunpack.c.l.b16 %v1185
    %v1516 = vunpack.c.h.b16 %v1185
    %v1517 = vunpack.c.l.b16 %v1186
    %v1518 = vunpack.c.h.b16 %v1186
    %v1519 = vunpack.c.l.b16 %v1187
    %v1520 = vunpack.c.h.b16 %v1187
    %v1521 = vunpack.c.l.b16 %v1188
    %v1522 = vunpack.c.h.b16 %v1188
    %v1523 = vunpack.c.l.b16 %v1189
    %v1524 = vunpack.c.h.b16 %v1189
    %v1525 = vunpack.c.l.b16 %v1190
    %v1526 = vunpack.c.h.b16 %v1190
    %v1527 = vunpack.c.l.b16 %v1191
    %v1528 = vunpack.c.h.b16 %v1191
    %v1529 = vunpack.c.l.b16 %v1192
    %v1530 = vunpack.c.h.b16 %v1192
    %v1531 = vunpack.c.l.b16 %v1193
    %v1532 = vunpack.c.h.b16 %v1193
    %v1533 = vunpack.c.l.b16 %v1194
    %v1534 = vunpack.c.h.b16 %v1194
    %v1535 = vunpack.c.l.b16 %v1195
    %v1536 = vunpack.c.h.b16 %v1195
    %v1537 = vunpack.c.l.b16 %v1196
    %v1538 = vunpack.c.h.b16 %v1196
    %v1539 = vunpack.c.l.b16 %v1197
    %v1540 = vunpack.c.h.b16 %v1197
    %v1541 = vunpack.c.l.b16 %v1198
    %v1542 = vunpack.c.h.b16 %v1198
    %v1543 = vunpack.c.l.b16 %v1199
    %v1544 = vunpack.c.h.b16 %v1199
    %v1545 = vunpack.c.l.b16 %v1200
    %v1546 = vunpack.c.h.b16 %v1200
    %v1547 = vunpack.c.l.b16 %v1201
    %v1548 = vunpack.c.h.b16 %v1201
    %v1549 = vunpack.c.l.b16 %v1202
    %v1550 = vunpack.c.h.b16 %v1202
    %v1551 = vunpack.c.l.b16 %v1203
    %v1552 = vunpack.c.h.b16 %v1203
    %v1553 = vunpack.c.l.b16 %v1204
    %v1554 = vunpack.c.h.b16 %v1204
    %v1555 = vunpack.c.l.b16 %v1205
    %v1556 = vunpack.c.h.b16 %v1205
    %v1557 = vunpack.c.l.b16 %v1206
    %v1558 = vunpack.c.h.b16 %v1206
    %v1559 = vunpack.c.l.b16 %v1207
    %v1560 = vunpack.c.h.b16 %v1207
    %v1561 = vunpack.c.l.b16 %v1208
    %v1562 = vunpack.c.h.b16 %v1208
    %v1563 = vunpack.c.l.b16 %v1209
    %v1564 = vunpack.c.h.b16 %v1209
    %v1565 = vunpack.c.l.b16 %v1210
    %v1566 = vunpack.c.h.b16 %v1210
    %v1567 = vunpack.c.l.b16 %v1211
    %v1568 = vunpack.c.h.b16 %v1211
    %v1569 = vunpack.c.l.b16 %v1212
    %v1570 = vunpack.c.h.b16 %v1212
    %v1571 = vunpack.c.l.b16 %v1213
    %v1572 = vunpack.c.h.b16 %v1213
    %v1573 = vunpack.c.l.b16 %v1214
    %v1574 = vunpack.c.h.b16 %v1214
    %v1575 = vunpack.c.l.b16 %v1215
    %v1576 = vunpack.c.h.b16 %v1215
    %v1577 = vunpack.c.l.b16 %v1216
    %v1578 = vunpack.c.h.b16 %v1216
    %v1579 = vunpack.c.l.b16 %v1217
    %v1580 = vunpack.c.h.b16 %v1217
    %v1581 = vunpack.c.l.b16 %v1218
    %v1582 = vunpack.c.h.b16 %v1218
    %v1583 = vunpack.c.l.b16 %v1219
    %v1584 = vunpack.c.h.b16 %v1219
    %v1585 = vunpack.c.l.b16 %v1220
    %v1586 = vunpack.c.h.b16 %v1220
    %v1587 = vunpack.c.l.b16 %v1221
    %v1588 = vunpack.c.h.b16 %v1221
    %v1589 = vunpack.c.l.b16 %v1222
    %v1590 = vunpack.c.h.b16 %v1222
    %v1591 = vunpack.c.l.b16 %v1223
    %v1592 = vunpack.c.h.b16 %v1223
    %v1593 = vunpack.c.l.b16 %v1224
    %v1594 = vunpack.c.h.b16 %v1224
    %v1595 = vunpack.c.l.b16 %v1225
    %v1596 = vunpack.c.h.b16 %v1225
    %v1597 = vunpack.c.l.b16 %v1226
    %v1598 = vunpack.c.h.b16 %v1226
    %v1599 = vunpack.c.l.b16 %v1227
    %v1600 = vunpack.c.h.b16 %v1227
    %v1601 = vunpack.c.l.b16 %v1228
    %v1602 = vunpack.c.h.b16 %v1228
    %v1603 = vunpack.c.l.b16 %v1229
    %v1604 = vunpack.c.h.b16 %v1229
    %v1605 = vunpack.c.l.b16 %v1230
    %v1606 = vunpack.c.h.b16 %v1230
    %v1607 = vunpack.c.l.b16 %v1231
    %v1608 = vunpack.c.h.b16 %v1231
    %v1609 = vunpack.c.l.b16 %v1232
    %v1610 = vunpack.c.h.b16 %v1232
    %v1611 = vunpack.c.l.b16 %v1233
    %v1612 = vunpack.c.h.b16 %v1233
    %v1613 = vunpack.c.l.b16 %v1234
    %v1614 = vunpack.c.h.b16 %v1234
    %v1615 = vunpack.c.l.b16 %v1235
    %v1616 = vunpack.c.h.b16 %v1235
    %v1617 = vunpack.c.l.b16 %v1236
    %v1618 = vunpack.c.h.b16 %v1236
    %v1619 = vunpack.c.l.b16 %v1237
    %v1620 = vunpack.c.h.b16 %v1237
    %v1621 = vunpack.c.l.b16 %v1238
    %v1622 = vunpack.c.h.b16 %v1238
    %v1623 = vunpack.c.l.b16 %v1239
    %v1624 = vunpack.c.h.b16 %v1239
    %v1625 = vunpack.c.l.b16 %v1240
    %v1626 = vunpack.c.h.b16 %v1240
    %v1627 = vunpack.c.l.b16 %v1241
    %v1628 = vunpack.c.h.b16 %v1241
    %v1629 = vunpack.c.l.b16 %v1242
    %v1630 = vunpack.c.h.b16 %v1242
    %v1631 = vunpack.c.l.b16 %v1243
    %v1632 = vunpack.c.h.b16 %v1243
    %v1633 = vunpack.c.l.b16 %v1244
    %v1634 = vunpack.c.h.b16 %v1244
    %v1635 = vunpack.c.l.b16 %v1245
    %v1636 = vunpack.c.h.b16 %v1245
    %v1637 = vunpack.c.l.b16 %v1246
    %v1638 = vunpack.c.h.b16 %v1246
    %v1639 = vunpack.c.l.b16 %v1247
    %v1640 = vunpack.c.h.b16 %v1247
    %v1641 = vunpack.c.l.b16 %v1248
    %v1642 = vunpack.c.h.b16 %v1248
    %v1643 = vunpack.c.l.b16 %v1249
    %v1644 = vunpack.c.h.b16 %v1249
    %v1645 = vunpack.c.l.b16 %v1250
    %v1646 = vunpack.c.h.b16 %v1250
    %v1647 = vpack.c.b16 %v1393, %v1391
    %v1648 = vpack.c.b16 %v1394, %v1392
    %v1649 = vpack.c.b16 %v1397, %v1395
    %v1650 = vpack.c.b16 %v1398, %v1396
    %v1651 = vpack.c.b16 %v1401, %v1399
    %v1652 = vpack.c.b16 %v1402, %v1400
    %v1653 = vpack.c.b16 %v1405, %v1403
    %v1654 = vpack.c.b16 %v1406, %v1404
    %v1655 = vpack.c.b16 %v1409, %v1407
    %v1656 = vpack.c.b16 %v1410, %v1408
    %v1657 = vpack.c.b16 %v1413, %v1411
    %v1658 = vpack.c.b16 %v1414, %v1412
    %v1659 = vpack.c.b16 %v1417, %v1415
    %v1660 = vpack.c.b16 %v1418, %v1416
    %v1661 = vpack.c.b16 %v1421, %v1419
    %v1662 = vpack.c.b16 %v1422, %v1420
    %v1663 = vpack.c.b16 %v1425, %v1423
    %v1664 = vpack.c.b16 %v1426, %v1424
    %v1665 = vpack.c.b16 %v1429, %v1427
    %v1666 = vpack.c.b16 %v1430, %v1428
    %v1667 = vpack.c.b16 %v1433, %v1431
    %v1668 = vpack.c.b16 %v1434, %v1432
    %v1669 = vpack.c.b16 %v1437, %v1435
    %v1670 = vpack.c.b16 %v1438, %v1436
    %v1671 = vpack.c.b16 %v1441, %v1439
    %v1672 = vpack.c.b16 %v1442, %v1440
    %v1673 = vpack.c.b16 %v1445, %v1443
    %v1674 = vpack.c.b16 %v1446, %v1444
    %v1675 = vpack.c.b16 %v1449, %v1447
    %v1676 = vpack.c.b16 %v1450, %v1448
    %v1677 = vpack.c.b16 %v1453, %v1451
    %v1678 = vpack.c.b16 %v1454, %v1452
    %v1679 = vpack.c.b16 %v1457, %v1455
    %v1680 = vpack.c.b16 %v1458, %v1456
    %v1681 = vpack.c.b16 %v1461, %v1459
    %v1682 = vpack.c.b16 %v1462, %v1460
    %v1683 = vpack.c.b16 %v1465, %v1463
    %v1684 = vpack.c.b16 %v1466, %v1464
    %v1685 = vpack.c.b16 %v1469, %v1467
    %v1686 = vpack.c.b16 %v1470, %v1468
    %v1687 = vpack.c.b16 %v1473, %v1471
    %v1688 = vpack.c.b16 %v1474, %v1472
    %v1689 = vpack.c.b16 %v1477, %v1475
    %v1690 = vpack.c.b16 %v1478, %v1476
    %v1691 = vpack.c.b16 %v1481, %v1479
    %v1692 = vpack.c.b16 %v1482, %v1480
    %v1693 = vpack.c.b16 %v1485, %v1483
    %v1694 = vpack.c.b16 %v1486, %v1484
    %v1695 = vpack.c.b16 %v1489, %v1487
    %v1696 = vpack.c.b16 %v1490, %v1488
    %v1697 = vpack.c.b16 %v1493, %v1491
    %v1698 = vpack.c.b16 %v1494, %v1492
    %v1699 = vpack.c.b16 %v1497, %v1495
    %v1700 = vpack.c.b16 %v1498, %v1496
    %v1701 = vpack.c.b16 %v1501, %v1499
    %v1702 = vpack.c.b16 %v1502, %v1500
    %v1703 = vpack.c.b16 %v1505, %v1503
    %v1704 = vpack.c.b16 %v1506, %v1504
    %v1705 = vpack.c.b16 %v1509, %v1507
    %v1706 = vpack.c.b16 %v1510, %v1508
    %v1707 = vpack.c.b16 %v1513, %v1511
    %v1708 = vpack.c.b16 %v1514, %v1512
    %v1709 = vpack.c.b16 %v1517, %v1515
    %v1710 = vpack.c.b16 %v1518, %v1516
    %v1711 = vpack.c.b16 %v1521, %v1519
    %v1712 = vpack.c.b16 %v1522, %v1520
    %v1713 = vpack.c.b16 %v1525, %v1523
    %v1714 = vpack.c.b16 %v1526, %v1524
    %v1715 = vpack.c.b16 %v1529, %v1527
    %v1716 = vpack.c.b16 %v1530, %v1528
    %v1717 = vpack.c.b16 %v1533, %v1531
    %v1718 = vpack.c.b16 %v1534, %v1532
    %v1719 = vpack.c.b16 %v1537, %v1535
    %v1720 = vpack.c.b16 %v1538, %v1536
    %v1721 = vpack.c.b16 %v1541, %v1539
    %v1722 = vpack.c.b16 %v1542, %v1540
    %v1723 = vpack.c.b16 %v1545, %v1543
    %v1724 = vpack.c.b16 %v1546, %v1544
    %v1725 = vpack.c.b16 %v1549, %v1547
    %v1726 = vpack.c.b16 %v1550, %v1548
    %v1727 = vpack.c.b16 %v1553, %v1551
    %v1728 = vpack.c.b16 %v1554, %v1552
    %v1729 = vpack.c.b16 %v1557, %v1555
    %v1730 = vpack.c.b16 %v1558, %v1556
    %v1731 = vpack.c.b16 %v1561, %v1559
    %v1732 = vpack.c.b16 %v1562, %v1560
    %v1733 = vpack.c.b16 %v1565, %v1563
    %v1734 = vpack.c.b16 %v1566, %v1564
    %v1735 = vpack.c.b16 %v1569, %v1567
    %v1736 = vpack.c.b16 %v1570, %v1568
    %v1737 = vpack.c.b16 %v1573, %v1571
    %v1738 = vpack.c.b16 %v1574, %v1572
    %v1739 = vpack.c.b16 %v1577, %v1575
    %v1740 = vpack.c.b16 %v1578, %v1576
    %v1741 = vpack.c.b16 %v1581, %v1579
    %v1742 = vpack.c.b16 %v1582, %v1580
    %v1743 = vpack.c.b16 %v1585, %v1583
    %v1744 = vpack.c.b16 %v1586, %v1584
    %v1745 = vpack.c.b16 %v1589, %v1587
    %v1746 = vpack.c.b16 %v1590, %v1588
    %v1747 = vpack.c.b16 %v1593, %v1591
    %v1748 = vpack.c.b16 %v1594, %v1592
    %v1749 = vpack.c.b16 %v1597, %v1595
    %v1750 = vpack.c.b16 %v1598, %v1596
    %v1751 = vpack.c.b16 %v1601, %v1599
    %v1752 = vpack.c.b16 %v1602, %v1600
    %v1753 = vpack.c.b16 %v1605, %v1603
    %v1754 = vpack.c.b16 %v1606, %v1604
    %v1755 = vpack.c.b16 %v1609, %v1607
    %v1756 = vpack.c.b16 %v1610, %v1608
    %v1757 = vpack.c.b16 %v1613, %v1611
    %v1758 = vpack.c.b16 %v1614, %v1612
    %v1759 = vpack.c.b16 %v1617, %v1615
    %v1760 = vpack.c.b16 %v1618, %v1616
    %v1761 = vpack.c.b16 %v1621, %v1619
    %v1762 = vpack.c.b16 %v1622, %v1620
    %v1763 = vpack.c.b16 %v1625, %v1623
    %v1764 = vpack.c.b16 %v1626, %v1624
    %v1765 = vpack.c.b16 %v1629, %v1627
    %v1766 = vpack.c.b16 %v1630, %v1628
    %v1767 = vpack.c.b16 %v1633, %v1631
    %v1768 = vpack.c.b16 %v1634, %v1632
    %v1769 = vpack.c.b16 %v1637, %v1635
    %v1770 = vpack.c.b16 %v1638, %v1636
    %v1771 = vpack.c.b16 %v1641, %v1639
    %v1772 = vpack.c.b16 %v1642, %v1640
    %v1773 = vpack.c.b16 %v1645, %v1643
    %v1774 = vpack.c.b16 %v1646, %v1644
    %1903 = vmatprep.subr.bf16.mxu0 %v1648
    %1904 = vmatpush1.bf16.msra.mxu0 %v1647
    %1905 = vmatprep.subr.bf16.mxu0 %v1650
    %1906 = vmatpush1.bf16.msra.mxu0 %v1649
    %1907 = vmatprep.subr.bf16.mxu0 %v1652
    %1908 = vmatpush1.bf16.msra.mxu0 %v1651
    %1909 = vmatprep.subr.bf16.mxu0 %v1654
    %1910 = vmatpush1.bf16.msra.mxu0 %v1653
    %1911 = vmatprep.subr.bf16.mxu0 %v1656
    %1912 = vmatpush1.bf16.msra.mxu0 %v1655
    %1913 = vmatprep.subr.bf16.mxu0 %v1658
    %1914 = vmatpush1.bf16.msra.mxu0 %v1657
    %1915 = vmatprep.subr.bf16.mxu0 %v1660
    %1916 = vmatpush1.bf16.msra.mxu0 %v1659
    %1917 = vmatprep.subr.bf16.mxu0 %v1662
    %1918 = vmatpush1.bf16.msra.mxu0 %v1661
    %1919 = vmatprep.subr.bf16.mxu0 %v1664
    %1920 = vmatpush1.bf16.msra.mxu0 %v1663
    %1921 = vmatprep.subr.bf16.mxu0 %v1666
    %1922 = vmatpush1.bf16.msra.mxu0 %v1665
    %1923 = vmatprep.subr.bf16.mxu0 %v1668
    %1924 = vmatpush1.bf16.msra.mxu0 %v1667
    %1925 = vmatprep.subr.bf16.mxu0 %v1670
    %1926 = vmatpush1.bf16.msra.mxu0 %v1669
    %1927 = vmatprep.subr.bf16.mxu0 %v1672
    %1928 = vmatpush1.bf16.msra.mxu0 %v1671
    %1929 = vmatprep.subr.bf16.mxu0 %v1674
    %1930 = vmatpush1.bf16.msra.mxu0 %v1673
    %1931 = vmatprep.subr.bf16.mxu0 %v1676
    %1932 = vmatpush1.bf16.msra.mxu0 %v1675
    %1933 = vmatprep.subr.bf16.mxu0 %v1678
    %1934 = vmatpush1.bf16.msra.mxu0 %v1677
    %1935 = vmatprep.mubr.bf16.mxu0 %v1116
    %1936 = vmatmul.mubr.bf16.gmra.mrb[0].mxu0 %v1115
    %v1937 = vpop.f32.mrb[0].mxu0
    %v1938 = vadd.f32 %v1256, %v1937
    %v1939 = vpop.f32.mrb[0].mxu0
    %v1940 = vadd.f32 %v1260, %v1939
    %v1941 = vpop.f32.mrb[0].mxu0
    %v1942 = vadd.f32 %v1256, %v1941
    %v1943 = vpop.f32.mrb[0].mxu0
    %v1944 = vadd.f32 %v1260, %v1943
    %1945 = vdwg.mxu0
    %1946 = vmatprep.subr.bf16.mxu0 %v1680
    %1947 = vmatpush1.bf16.msra.mxu0 %v1679
    %1948 = vmatprep.subr.bf16.mxu0 %v1682
    %1949 = vmatpush1.bf16.msra.mxu0 %v1681
    %1950 = vmatprep.subr.bf16.mxu0 %v1684
    %1951 = vmatpush1.bf16.msra.mxu0 %v1683
    %1952 = vmatprep.subr.bf16.mxu0 %v1686
    %1953 = vmatpush1.bf16.msra.mxu0 %v1685
    %1954 = vmatprep.subr.bf16.mxu0 %v1688
    %1955 = vmatpush1.bf16.msra.mxu0 %v1687
    %1956 = vmatprep.subr.bf16.mxu0 %v1690
    %1957 = vmatpush1.bf16.msra.mxu0 %v1689
    %1958 = vmatprep.subr.bf16.mxu0 %v1692
    %1959 = vmatpush1.bf16.msra.mxu0 %v1691
    %1960 = vmatprep.subr.bf16.mxu0 %v1694
    %1961 = vmatpush1.bf16.msra.mxu0 %v1693
    %1962 = vmatprep.subr.bf16.mxu0 %v1696
    %1963 = vmatpush1.bf16.msra.mxu0 %v1695
    %1964 = vmatprep.subr.bf16.mxu0 %v1698
    %1965 = vmatpush1.bf16.msra.mxu0 %v1697
    %1966 = vmatprep.subr.bf16.mxu0 %v1700
    %1967 = vmatpush1.bf16.msra.mxu0 %v1699
    %1968 = vmatprep.subr.bf16.mxu0 %v1702
    %1969 = vmatpush1.bf16.msra.mxu0 %v1701
    %1970 = vmatprep.subr.bf16.mxu0 %v1704
    %1971 = vmatpush1.bf16.msra.mxu0 %v1703
    %1972 = vmatprep.subr.bf16.mxu0 %v1706
    %1973 = vmatpush1.bf16.msra.mxu0 %v1705
    %1974 = vmatprep.subr.bf16.mxu0 %v1708
    %1975 = vmatpush1.bf16.msra.mxu0 %v1707
    %1976 = vmatprep.subr.bf16.mxu0 %v1710
    %1977 = vmatpush1.bf16.msra.mxu0 %v1709
    %1978 = vmatprep.mubr.bf16.mxu0 %v1118
    %1979 = vmatmul.mubr.bf16.gmra.mrb[0].mxu0 %v1117
    %v1980 = vpop.f32.mrb[0].mxu0
    %v1981 = vadd.f32 %v1938, %v1980
    %v1982 = vpop.f32.mrb[0].mxu0
    %v1983 = vadd.f32 %v1940, %v1982
    %v1984 = vpop.f32.mrb[0].mxu0
    %v1985 = vadd.f32 %v1942, %v1984
    %v1986 = vpop.f32.mrb[0].mxu0
    %v1987 = vadd.f32 %v1944, %v1986
    %1988 = vdwg.mxu0
    %1989 = vmatprep.subr.bf16.mxu0 %v1712
    %1990 = vmatpush1.bf16.msra.mxu0 %v1711
    %1991 = vmatprep.subr.bf16.mxu0 %v1714
    %1992 = vmatpush1.bf16.msra.mxu0 %v1713
    %1993 = vmatprep.subr.bf16.mxu0 %v1716
    %1994 = vmatpush1.bf16.msra.mxu0 %v1715
    %1995 = vmatprep.subr.bf16.mxu0 %v1718
    %1996 = vmatpush1.bf16.msra.mxu0 %v1717
    %1997 = vmatprep.subr.bf16.mxu0 %v1720
    %1998 = vmatpush1.bf16.msra.mxu0 %v1719
    %1999 = vmatprep.subr.bf16.mxu0 %v1722
    %2000 = vmatpush1.bf16.msra.mxu0 %v1721
    %2001 = vmatprep.subr.bf16.mxu0 %v1724
    %2002 = vmatpush1.bf16.msra.mxu0 %v1723
    %2003 = vmatprep.subr.bf16.mxu0 %v1726
    %2004 = vmatpush1.bf16.msra.mxu0 %v1725
    %2005 = vmatprep.subr.bf16.mxu0 %v1728
    %2006 = vmatpush1.bf16.msra.mxu0 %v1727
    %2007 = vmatprep.subr.bf16.mxu0 %v1730
    %2008 = vmatpush1.bf16.msra.mxu0 %v1729
    %2009 = vmatprep.subr.bf16.mxu0 %v1732
    %2010 = vmatpush1.bf16.msra.mxu0 %v1731
    %2011 = vmatprep.subr.bf16.mxu0 %v1734
    %2012 = vmatpush1.bf16.msra.mxu0 %v1733
    %2013 = vmatprep.subr.bf16.mxu0 %v1736
    %2014 = vmatpush1.bf16.msra.mxu0 %v1735
    %2015 = vmatprep.subr.bf16.mxu0 %v1738
    %2016 = vmatpush1.bf16.msra.mxu0 %v1737
    %2017 = vmatprep.subr.bf16.mxu0 %v1740
    %2018 = vmatpush1.bf16.msra.mxu0 %v1739
    %2019 = vmatprep.subr.bf16.mxu0 %v1742
    %2020 = vmatpush1.bf16.msra.mxu0 %v1741
    %2021 = vmatprep.mubr.bf16.mxu0 %v1120
    %2022 = vmatmul.mubr.bf16.gmra.mrb[0].mxu0 %v1119
    %v2023 = vpop.f32.mrb[0].mxu0
    %v2024 = vadd.f32 %v1981, %v2023
    %v2025 = vpop.f32.mrb[0].mxu0
    %v2026 = vadd.f32 %v1983, %v2025
    %v2027 = vpop.f32.mrb[0].mxu0
    %v2028 = vadd.f32 %v1985, %v2027
    %v2029 = vpop.f32.mrb[0].mxu0
    %v2030 = vadd.f32 %v1987, %v2029
    %2031 = vdwg.mxu0
    %2032 = vmatprep.subr.bf16.mxu0 %v1744
    %2033 = vmatpush1.bf16.msra.mxu0 %v1743
    %2034 = vmatprep.subr.bf16.mxu0 %v1746
    %2035 = vmatpush1.bf16.msra.mxu0 %v1745
    %2036 = vmatprep.subr.bf16.mxu0 %v1748
    %2037 = vmatpush1.bf16.msra.mxu0 %v1747
    %2038 = vmatprep.subr.bf16.mxu0 %v1750
    %2039 = vmatpush1.bf16.msra.mxu0 %v1749
    %2040 = vmatprep.subr.bf16.mxu0 %v1752
    %2041 = vmatpush1.bf16.msra.mxu0 %v1751
    %2042 = vmatprep.subr.bf16.mxu0 %v1754
    %2043 = vmatpush1.bf16.msra.mxu0 %v1753
    %2044 = vmatprep.subr.bf16.mxu0 %v1756
    %2045 = vmatpush1.bf16.msra.mxu0 %v1755
    %2046 = vmatprep.subr.bf16.mxu0 %v1758
    %2047 = vmatpush1.bf16.msra.mxu0 %v1757
    %2048 = vmatprep.subr.bf16.mxu0 %v1760
    %2049 = vmatpush1.bf16.msra.mxu0 %v1759
    %2050 = vmatprep.subr.bf16.mxu0 %v1762
    %2051 = vmatpush1.bf16.msra.mxu0 %v1761
    %2052 = vmatprep.subr.bf16.mxu0 %v1764
    %2053 = vmatpush1.bf16.msra.mxu0 %v1763
    %2054 = vmatprep.subr.bf16.mxu0 %v1766
    %2055 = vmatpush1.bf16.msra.mxu0 %v1765
    %2056 = vmatprep.subr.bf16.mxu0 %v1768
    %2057 = vmatpush1.bf16.msra.mxu0 %v1767
    %2058 = vmatprep.subr.bf16.mxu0 %v1770
    %2059 = vmatpush1.bf16.msra.mxu0 %v1769
    %2060 = vmatprep.subr.bf16.mxu0 %v1772
    %2061 = vmatpush1.bf16.msra.mxu0 %v1771
    %2062 = vmatprep.subr.bf16.mxu0 %v1774
    %2063 = vmatpush1.bf16.msra.mxu0 %v1773
    %2064 = vmatprep.mubr.bf16.mxu0 %v1122
    %2065 = vmatmul.mubr.bf16.gmra.mrb[0].mxu0 %v1121
    %v2066 = vpop.f32.mrb[0].mxu0
    %v2067 = vadd.f32 %v2024, %v2066
    %v2068 = vpop.f32.mrb[0].mxu0
    %v2069 = vadd.f32 %v2026, %v2068
    %v2070 = vpop.f32.mrb[0].mxu0
    %v2071 = vadd.f32 %v2028, %v2070
    %v2072 = vpop.f32.mrb[0].mxu0
    %v2073 = vadd.f32 %v2030, %v2072
    %2074 = vdwg.mxu0
    %vm2075 = vcmp.ge.f32.partialorder %v2067, 0.0
    %vm2076 = vcmp.ge.f32.partialorder %v2069, 0.0
    %vm2077 = vcmp.ge.f32.partialorder %v2071, 0.0
    %vm2078 = vcmp.ge.f32.partialorder %v2073, 0.0
    %v2079 = vstv %s57
    %v2080 = vmul.f32 %v2079, %v2067
    %v2081 = vmul.f32 %v2079, %v2069
    %v2082 = vmul.f32 %v2079, %v2071
    %v2083 = vmul.f32 %v2079, %v2073
    %v2084 = vsel %vm2075, %v2067, %v2080
    %v2085 = vsel %vm2076, %v2069, %v2081
    %v2086 = vsel %vm2077, %v2071, %v2082
    %v2087 = vsel %vm2078, %v2073, %v2083
    %v2088 = vpack.c.bf16 %v2086, %v2084
    %v2089 = vpack.c.bf16 %v2087, %v2085
    %v2090 = vld [vmem:[%s3 + $0x20] sm:$0xf]
    %v2091 = vld [vmem:[%s3 + $0x44] sm:$0xf]
    %v2092 = vld [vmem:[%s3 + $0x68] sm:$0xf]
    %v2093 = vld [vmem:[%s3 + $0x8c] sm:$0xf]
    %v2094 = vld [vmem:[%s3 + $0xb0] sm:$0xf]
    %v2095 = vld [vmem:[%s3 + $0xd4] sm:$0xf]
    %v2096 = vld [vmem:[%s3 + $0xf8] sm:$0xf]
    %v2097 = vld [vmem:[%s3 + $0x11c] sm:$0xf]
    %v2098 = vld [vmem:[%s3 + $0x140] sm:$0xf]
    %v2099 = vld [vmem:[%s3 + $0x164] sm:$0xf]
    %v2100 = vld [vmem:[%s3 + $0x188] sm:$0xf]
    %v2101 = vld [vmem:[%s3 + $0x1ac] sm:$0xf]
    %v2102 = vld [vmem:[%s3 + $0x1d0] sm:$0xf]
    %v2103 = vld [vmem:[%s3 + $0x1f4] sm:$0xf]
    %v2104 = vld [vmem:[%s3 + $0x218] sm:$0xf]
    %v2105 = vld [vmem:[%s3 + $0x23c] sm:$0xf]
    %v2106 = vld [vmem:[%s3 + $0x260] sm:$0xf]
    %v2107 = vld [vmem:[%s3 + $0x284] sm:$0xf]
    %v2108 = vld [vmem:[%s3 + $0x2a8] sm:$0xf]
    %v2109 = vld [vmem:[%s3 + $0x2cc] sm:$0xf]
    %v2110 = vld [vmem:[%s3 + $0x2f0] sm:$0xf]
    %v2111 = vld [vmem:[%s3 + $0x314] sm:$0xf]
    %v2112 = vld [vmem:[%s3 + $0x338] sm:$0xf]
    %v2113 = vld [vmem:[%s3 + $0x35c] sm:$0xf]
    %v2114 = vld [vmem:[%s3 + $0x380] sm:$0xf]
    %v2115 = vld [vmem:[%s3 + $0x3a4] sm:$0xf]
    %v2116 = vld [vmem:[%s3 + $0x3c8] sm:$0xf]
    %v2117 = vld [vmem:[%s3 + $0x3ec] sm:$0xf]
    %v2118 = vld [vmem:[%s3 + $0x410] sm:$0xf]
    %v2119 = vld [vmem:[%s3 + $0x434] sm:$0xf]
    %v2120 = vld [vmem:[%s3 + $0x458] sm:$0xf]
    %v2121 = vld [vmem:[%s3 + $0x47c] sm:$0xf]
    %vm2122 = vcmp.eq.s32.totalorder %v67, 64
    %v2123 = vstv %s64
    %v2124 = vsub.f32 %v70, %v2123
    %v2125 = vsub.f32 %v73, %v2123
    %v2126 = vstv %s65
    %v2127 = vmul.f32 %v2124, %v2126
    %v2128 = vmul.f32 %v2125, %v2126
    %v2129 = vsel %vm2122, 1, 0
    %vm2130 = vcmp.eq.s32.totalorder %v2129, 1
    %v2131 = vsel %vm2130, %v2127, %v70
    %v2132 = vsel %vm2130, %v2128, %v73
    %v2133 = vpack.c.bf16 %v2132, %v2131
    %v2134 = vld [vmem:[%s5] sm:$0xf]
    %v2135 = vld [vmem:[%s5 + $0x1c] sm:$0xf]
    %v2136 = vld [vmem:[%s5 + $0x38] sm:$0xf]
    %v2137 = vld [vmem:[%s5 + $0x54] sm:$0xf]
    %v2138 = vld [vmem:[%s5 + $0x70] sm:$0xf]
    %v2139 = vld [vmem:[%s5 + $0x8c] sm:$0xf]
    %v2140 = vld [vmem:[%s5 + $0xa8] sm:$0xf]
    %v2141 = vld [vmem:[%s5 + $0xc4] sm:$0xf]
    %v2142 = vld [vmem:[%s5 + $0xe0] sm:$0xf]
    %v2143 = vld [vmem:[%s5 + $0xfc] sm:$0xf]
    %v2144 = vld [vmem:[%s5 + $0x118] sm:$0xf]
    %v2145 = vld [vmem:[%s5 + $0x134] sm:$0xf]
    %v2146 = vld [vmem:[%s5 + $0x150] sm:$0xf]
    %v2147 = vld [vmem:[%s5 + $0x16c] sm:$0xf]
    %v2148 = vld [vmem:[%s5 + $0x188] sm:$0xf]
    %v2149 = vld [vmem:[%s5 + $0x1a4] sm:$0xf]
    %v2166 = vunpack.c.l.b16 %v2134
    %v2167 = vunpack.c.l.b16 %v2135
    %v2168 = vunpack.c.l.b16 %v2136
    %v2169 = vunpack.c.l.b16 %v2137
    %v2170 = vunpack.c.l.b16 %v2138
    %v2171 = vunpack.c.l.b16 %v2139
    %v2172 = vunpack.c.l.b16 %v2140
    %v2173 = vunpack.c.l.b16 %v2141
    %v2174 = vunpack.c.l.b16 %v2142
    %v2175 = vunpack.c.l.b16 %v2143
    %v2176 = vunpack.c.l.b16 %v2144
    %v2177 = vunpack.c.l.b16 %v2145
    %v2178 = vunpack.c.l.b16 %v2146
    %v2179 = vunpack.c.l.b16 %v2147
    %v2180 = vunpack.c.l.b16 %v2148
    %v2181 = vunpack.c.l.b16 %v2149
    %v2182 = vpack.c.b16 %v2167, %v2166
    %v2183 = vpack.c.b16 %v2169, %v2168
    %v2184 = vpack.c.b16 %v2171, %v2170
    %v2185 = vpack.c.b16 %v2173, %v2172
    %v2186 = vpack.c.b16 %v2175, %v2174
    %v2187 = vpack.c.b16 %v2177, %v2176
    %v2188 = vpack.c.b16 %v2179, %v2178
    %v2189 = vpack.c.b16 %v2181, %v2180
    %2198 = vmatprep.subr.bf16.mxu0 0
    %2199 = vmatpush1.bf16.msra.mxu0 %v2182
    %2200 = vmatprep.subr.bf16.mxu0 0
    %2201 = vmatpush1.bf16.msra.mxu0 %v2183
    %2202 = vmatprep.subr.bf16.mxu0 0
    %2203 = vmatpush1.bf16.msra.mxu0 %v2184
    %2204 = vmatprep.subr.bf16.mxu0 0
    %2205 = vmatpush1.bf16.msra.mxu0 %v2185
    %2206 = vmatprep.subr.bf16.mxu0 0
    %2207 = vmatpush1.bf16.msra.mxu0 %v2186
    %2208 = vmatprep.subr.bf16.mxu0 0
    %2209 = vmatpush1.bf16.msra.mxu0 %v2187
    %2210 = vmatprep.subr.bf16.mxu0 0
    %2211 = vmatpush1.bf16.msra.mxu0 %v2188
    %2212 = vmatprep.subr.bf16.mxu0 0
    %2213 = vmatpush1.bf16.msra.mxu0 %v2189
    %2214 = vmatprep.subr.bf16.mxu0 0
    %2215 = vmatpush1.bf16.msra.mxu0 0
    %2216 = vmatprep.subr.bf16.mxu0 0
    %2217 = vmatpush1.bf16.msra.mxu0 0
    %2218 = vmatprep.subr.bf16.mxu0 0
    %2219 = vmatpush1.bf16.msra.mxu0 0
    %2220 = vmatprep.subr.bf16.mxu0 0
    %2221 = vmatpush1.bf16.msra.mxu0 0
    %2222 = vmatprep.subr.bf16.mxu0 0
    %2223 = vmatpush1.bf16.msra.mxu0 0
    %2224 = vmatprep.subr.bf16.mxu0 0
    %2225 = vmatpush1.bf16.msra.mxu0 0
    %2226 = vmatprep.subr.bf16.mxu0 0
    %2227 = vmatpush1.bf16.msra.mxu0 0
    %2228 = vmatprep.subr.bf16.mxu0 0
    %2229 = vmatpush1.bf16.msra.mxu0 0
    %2230 = vmatprep.mubr.bf16.mxu0 0
    %2231 = vmatmul.mubr.bf16.gmra.mrb[0].mxu0 %v2133
    %v2232 = vpop.f32.mrb[0].mxu0
    %v2233 = vadd.f32 0.0, %v2232
    %v2234 = vpop.f32.mrb[0].mxu0
    %v2235 = vpop.f32.mrb[0].mxu0
    %v2236 = vadd.f32 0.0, %v2235
    %v2237 = vpop.f32.mrb[0].mxu0
    %2238 = vdwg.mxu0
    %v2271 = vunpack.c.l.b16 %v2090
    %v2272 = vunpack.c.l.b16 %v2091
    %v2273 = vunpack.c.l.b16 %v2092
    %v2274 = vunpack.c.l.b16 %v2093
    %v2275 = vunpack.c.l.b16 %v2094
    %v2276 = vunpack.c.l.b16 %v2095
    %v2277 = vunpack.c.l.b16 %v2096
    %v2278 = vunpack.c.l.b16 %v2097
    %v2279 = vunpack.c.l.b16 %v2098
    %v2280 = vunpack.c.l.b16 %v2099
    %v2281 = vunpack.c.l.b16 %v2100
    %v2282 = vunpack.c.l.b16 %v2101
    %v2283 = vunpack.c.l.b16 %v2102
    %v2284 = vunpack.c.l.b16 %v2103
    %v2285 = vunpack.c.l.b16 %v2104
    %v2286 = vunpack.c.l.b16 %v2105
    %v2287 = vunpack.c.l.b16 %v2106
    %v2288 = vunpack.c.l.b16 %v2107
    %v2289 = vunpack.c.l.b16 %v2108
    %v2290 = vunpack.c.l.b16 %v2109
    %v2291 = vunpack.c.l.b16 %v2110
    %v2292 = vunpack.c.l.b16 %v2111
    %v2293 = vunpack.c.l.b16 %v2112
    %v2294 = vunpack.c.l.b16 %v2113
    %v2295 = vunpack.c.l.b16 %v2114
    %v2296 = vunpack.c.l.b16 %v2115
    %v2297 = vunpack.c.l.b16 %v2116
    %v2298 = vunpack.c.l.b16 %v2117
    %v2299 = vunpack.c.l.b16 %v2118
    %v2300 = vunpack.c.l.b16 %v2119
    %v2301 = vunpack.c.l.b16 %v2120
    %v2302 = vunpack.c.l.b16 %v2121
    %v2303 = vpack.c.b16 %v2272, %v2271
    %v2304 = vpack.c.b16 %v2274, %v2273
    %v2305 = vpack.c.b16 %v2276, %v2275
    %v2306 = vpack.c.b16 %v2278, %v2277
    %v2307 = vpack.c.b16 %v2280, %v2279
    %v2308 = vpack.c.b16 %v2282, %v2281
    %v2309 = vpack.c.b16 %v2284, %v2283
    %v2310 = vpack.c.b16 %v2286, %v2285
    %v2311 = vpack.c.b16 %v2288, %v2287
    %v2312 = vpack.c.b16 %v2290, %v2289
    %v2313 = vpack.c.b16 %v2292, %v2291
    %v2314 = vpack.c.b16 %v2294, %v2293
    %v2315 = vpack.c.b16 %v2296, %v2295
    %v2316 = vpack.c.b16 %v2298, %v2297
    %v2317 = vpack.c.b16 %v2300, %v2299
    %v2318 = vpack.c.b16 %v2302, %v2301
    %2335 = vmatprep.subr.bf16.mxu0 0
    %2336 = vmatpush1.bf16.msra.mxu0 %v2303
    %2337 = vmatprep.subr.bf16.mxu0 0
    %2338 = vmatpush1.bf16.msra.mxu0 %v2304
    %2339 = vmatprep.subr.bf16.mxu0 0
    %2340 = vmatpush1.bf16.msra.mxu0 %v2305
    %2341 = vmatprep.subr.bf16.mxu0 0
    %2342 = vmatpush1.bf16.msra.mxu0 %v2306
    %2343 = vmatprep.subr.bf16.mxu0 0
    %2344 = vmatpush1.bf16.msra.mxu0 %v2307
    %2345 = vmatprep.subr.bf16.mxu0 0
    %2346 = vmatpush1.bf16.msra.mxu0 %v2308
    %2347 = vmatprep.subr.bf16.mxu0 0
    %2348 = vmatpush1.bf16.msra.mxu0 %v2309
    %2349 = vmatprep.subr.bf16.mxu0 0
    %2350 = vmatpush1.bf16.msra.mxu0 %v2310
    %2351 = vmatprep.subr.bf16.mxu0 0
    %2352 = vmatpush1.bf16.msra.mxu0 %v2311
    %2353 = vmatprep.subr.bf16.mxu0 0
    %2354 = vmatpush1.bf16.msra.mxu0 %v2312
    %2355 = vmatprep.subr.bf16.mxu0 0
    %2356 = vmatpush1.bf16.msra.mxu0 %v2313
    %2357 = vmatprep.subr.bf16.mxu0 0
    %2358 = vmatpush1.bf16.msra.mxu0 %v2314
    %2359 = vmatprep.subr.bf16.mxu0 0
    %2360 = vmatpush1.bf16.msra.mxu0 %v2315
    %2361 = vmatprep.subr.bf16.mxu0 0
    %2362 = vmatpush1.bf16.msra.mxu0 %v2316
    %2363 = vmatprep.subr.bf16.mxu0 0
    %2364 = vmatpush1.bf16.msra.mxu0 %v2317
    %2365 = vmatprep.subr.bf16.mxu0 0
    %2366 = vmatpush1.bf16.msra.mxu0 %v2318
    %2367 = vmatprep.mubr.bf16.mxu0 %v2089
    %2368 = vmatmul.mubr.bf16.gmra.mrb[0].mxu0 %v2088
    %v2369 = vpop.f32.mrb[0].mxu0
    %v2370 = vadd.f32 %v2233, %v2369
    %v2371 = vpop.f32.mrb[0].mxu0
    %v2372 = vpop.f32.mrb[0].mxu0
    %v2373 = vadd.f32 %v2236, %v2372
    %v2374 = vpop.f32.mrb[0].mxu0
    %2375 = vdwg.mxu0
    %v2376 = vld [vmem:[%s6 + $0xa] sm:$0x1]
    %v2378 = vlaneseq
    %v2379 = vshrl.u32 %v2378, 7
    %v2380 = vsub.s32 0, %v2379
    %v2381 = vrot.slane %v2376, %v2380
    %v2383 = vadd.f32 %v2370, %v2381
    %v2384 = vadd.f32 %v2373, %v2381
    %vm2385 = vcmp.lt.s32.totalorder %v67, 32
    %vm2386 = vcmp.lt.s32.totalorder %v67, 64
    %v2387 = vstv %s59
    %v2388 = vstv %s60
    %v2389 = vsel %vm2386, %v2387, %v2388
    %v2390 = vstv %s58
    %v2391 = vsel %vm2385, %v2390, %v2389
    %vm2392 = vcmp.ge.f32.partialorder %v2383, 0.0
    %vm2393 = vcmp.ge.f32.partialorder %v2384, 0.0
    %v2394 = vmul.f32 %v2391, %v2383
    %v2395 = vmul.f32 %v2391, %v2384
    %v2396 = vsel %vm2392, %v2383, %v2394
    %v2397 = vsel %vm2393, %v2384, %v2395
    %v2398 = vpack.c.bf16 %v2397, %v2396
    %v2399 = vld [vmem:[%s5 + $0x4] sm:$0xff]
    %v2400 = vld [vmem:[%s5 + $0x20] sm:$0xff]
    %v2401 = vld [vmem:[%s5 + $0x3c] sm:$0xff]
    %v2402 = vld [vmem:[%s5 + $0x58] sm:$0xff]
    %v2403 = vld [vmem:[%s5 + $0x74] sm:$0xff]
    %v2404 = vld [vmem:[%s5 + $0x90] sm:$0xff]
    %v2405 = vld [vmem:[%s5 + $0xac] sm:$0xff]
    %v2406 = vld [vmem:[%s5 + $0xc8] sm:$0xff]
    %v2407 = vld [vmem:[%s5 + $0xe4] sm:$0xff]
    %v2408 = vld [vmem:[%s5 + $0x100] sm:$0xff]
    %v2409 = vld [vmem:[%s5 + $0x11c] sm:$0xff]
    %v2410 = vld [vmem:[%s5 + $0x138] sm:$0xff]
    %v2411 = vld [vmem:[%s5 + $0x154] sm:$0xff]
    %v2412 = vld [vmem:[%s5 + $0x170] sm:$0xff]
    %v2413 = vld [vmem:[%s5 + $0x18c] sm:$0xff]
    %v2414 = vld [vmem:[%s5 + $0x1a8] sm:$0xff]
    %v2415 = vld [vmem:[%s6 + $0xb] sm:$0x3]
    %v2417 = vlaneseq
    %v2418 = vshrl.u32 %v2417, 7
    %v2419 = vsub.s32 0, %v2418
    %v2420 = vrot.slane %v2415, %v2419
    %v2421 = vlaneseq
    %v2422 = vshrl.u32 %v2421, 7
    %v2423 = vsub.s32 1, %v2422
    %v2424 = vrot.slane %v2415, %v2423
    %v2443 = vunpack.c.l.b16 %v2399
    %v2444 = vunpack.c.h.b16 %v2399
    %v2445 = vunpack.c.l.b16 %v2400
    %v2446 = vunpack.c.h.b16 %v2400
    %v2447 = vunpack.c.l.b16 %v2401
    %v2448 = vunpack.c.h.b16 %v2401
    %v2449 = vunpack.c.l.b16 %v2402
    %v2450 = vunpack.c.h.b16 %v2402
    %v2451 = vunpack.c.l.b16 %v2403
    %v2452 = vunpack.c.h.b16 %v2403
    %v2453 = vunpack.c.l.b16 %v2404
    %v2454 = vunpack.c.h.b16 %v2404
    %v2455 = vunpack.c.l.b16 %v2405
    %v2456 = vunpack.c.h.b16 %v2405
    %v2457 = vunpack.c.l.b16 %v2406
    %v2458 = vunpack.c.h.b16 %v2406
    %v2459 = vunpack.c.l.b16 %v2407
    %v2460 = vunpack.c.h.b16 %v2407
    %v2461 = vunpack.c.l.b16 %v2408
    %v2462 = vunpack.c.h.b16 %v2408
    %v2463 = vunpack.c.l.b16 %v2409
    %v2464 = vunpack.c.h.b16 %v2409
    %v2465 = vunpack.c.l.b16 %v2410
    %v2466 = vunpack.c.h.b16 %v2410
    %v2467 = vunpack.c.l.b16 %v2411
    %v2468 = vunpack.c.h.b16 %v2411
    %v2469 = vunpack.c.l.b16 %v2412
    %v2470 = vunpack.c.h.b16 %v2412
    %v2471 = vunpack.c.l.b16 %v2413
    %v2472 = vunpack.c.h.b16 %v2413
    %v2473 = vunpack.c.l.b16 %v2414
    %v2474 = vunpack.c.h.b16 %v2414
    %v2475 = vpack.c.b16 %v2445, %v2443
    %v2476 = vpack.c.b16 %v2446, %v2444
    %v2477 = vpack.c.b16 %v2449, %v2447
    %v2478 = vpack.c.b16 %v2450, %v2448
    %v2479 = vpack.c.b16 %v2453, %v2451
    %v2480 = vpack.c.b16 %v2454, %v2452
    %v2481 = vpack.c.b16 %v2457, %v2455
    %v2482 = vpack.c.b16 %v2458, %v2456
    %v2483 = vpack.c.b16 %v2461, %v2459
    %v2484 = vpack.c.b16 %v2462, %v2460
    %v2485 = vpack.c.b16 %v2465, %v2463
    %v2486 = vpack.c.b16 %v2466, %v2464
    %v2487 = vpack.c.b16 %v2469, %v2467
    %v2488 = vpack.c.b16 %v2470, %v2468
    %v2489 = vpack.c.b16 %v2473, %v2471
    %v2490 = vpack.c.b16 %v2474, %v2472
    %2507 = vmatprep.subr.bf16.mxu0 %v2476
    %2508 = vmatpush1.bf16.msra.mxu0 %v2475
    %2509 = vmatprep.subr.bf16.mxu0 %v2478
    %2510 = vmatpush1.bf16.msra.mxu0 %v2477
    %2511 = vmatprep.subr.bf16.mxu0 %v2480
    %2512 = vmatpush1.bf16.msra.mxu0 %v2479
    %2513 = vmatprep.subr.bf16.mxu0 %v2482
    %2514 = vmatpush1.bf16.msra.mxu0 %v2481
    %2515 = vmatprep.subr.bf16.mxu0 %v2484
    %2516 = vmatpush1.bf16.msra.mxu0 %v2483
    %2517 = vmatprep.subr.bf16.mxu0 %v2486
    %2518 = vmatpush1.bf16.msra.mxu0 %v2485
    %2519 = vmatprep.subr.bf16.mxu0 %v2488
    %2520 = vmatpush1.bf16.msra.mxu0 %v2487
    %2521 = vmatprep.subr.bf16.mxu0 %v2490
    %2522 = vmatpush1.bf16.msra.mxu0 %v2489
    %2523 = vmatprep.subr.bf16.mxu0 0
    %2524 = vmatpush1.bf16.msra.mxu0 0
    %2525 = vmatprep.subr.bf16.mxu0 0
    %2526 = vmatpush1.bf16.msra.mxu0 0
    %2527 = vmatprep.subr.bf16.mxu0 0
    %2528 = vmatpush1.bf16.msra.mxu0 0
    %2529 = vmatprep.subr.bf16.mxu0 0
    %2530 = vmatpush1.bf16.msra.mxu0 0
    %2531 = vmatprep.subr.bf16.mxu0 0
    %2532 = vmatpush1.bf16.msra.mxu0 0
    %2533 = vmatprep.subr.bf16.mxu0 0
    %2534 = vmatpush1.bf16.msra.mxu0 0
    %2535 = vmatprep.subr.bf16.mxu0 0
    %2536 = vmatpush1.bf16.msra.mxu0 0
    %2537 = vmatprep.subr.bf16.mxu0 0
    %2538 = vmatpush1.bf16.msra.mxu0 0
    %2539 = vmatprep.mubr.bf16.mxu0 0
    %2540 = vmatmul.mubr.bf16.gmra.mrb[0].mxu0 %v2398
    %v2541 = vpop.f32.mrb[0].mxu0
    %v2542 = vadd.f32 %v2420, %v2541
    %v2543 = vpop.f32.mrb[0].mxu0
    %v2544 = vadd.f32 %v2424, %v2543
    %v2545 = vpop.f32.mrb[0].mxu0
    %v2546 = vadd.f32 %v2420, %v2545
    %v2547 = vpop.f32.mrb[0].mxu0
    %v2548 = vadd.f32 %v2424, %v2547
    %2549 = vdwg.mxu0
    %v2550 = vld [vmem:[%s5 + $0xc] sm:$0xff]
    %v2551 = vld [vmem:[%s5 + $0x28] sm:$0xff]
    %v2552 = vld [vmem:[%s5 + $0x44] sm:$0xff]
    %v2553 = vld [vmem:[%s5 + $0x60] sm:$0xff]
    %v2554 = vld [vmem:[%s5 + $0x7c] sm:$0xff]
    %v2555 = vld [vmem:[%s5 + $0x98] sm:$0xff]
    %v2556 = vld [vmem:[%s5 + $0xb4] sm:$0xff]
    %v2557 = vld [vmem:[%s5 + $0xd0] sm:$0xff]
    %v2558 = vld [vmem:[%s5 + $0xec] sm:$0xff]
    %v2559 = vld [vmem:[%s5 + $0x108] sm:$0xff]
    %v2560 = vld [vmem:[%s5 + $0x124] sm:$0xff]
    %v2561 = vld [vmem:[%s5 + $0x140] sm:$0xff]
    %v2562 = vld [vmem:[%s5 + $0x15c] sm:$0xff]
    %v2563 = vld [vmem:[%s5 + $0x178] sm:$0xff]
    %v2564 = vld [vmem:[%s5 + $0x194] sm:$0xff]
    %v2565 = vld [vmem:[%s5 + $0x1b0] sm:$0xff]
    %v2566 = vld [vmem:[%s6 + $0xd] sm:$0x3]
    %v2567 = vld [vmem:[%s2] sm:$0xff]
    %v2568 = vpack.c.bf16 %v2567, %v2567
    %v2570 = vlaneseq
    %v2571 = vshrl.u32 %v2570, 7
    %v2572 = vsub.s32 0, %v2571
    %v2573 = vrot.slane %v2566, %v2572
    %v2574 = vlaneseq
    %v2575 = vshrl.u32 %v2574, 7
    %v2576 = vsub.s32 1, %v2575
    %v2577 = vrot.slane %v2566, %v2576
    %v2596 = vunpack.c.l.b16 %v2550
    %v2597 = vunpack.c.h.b16 %v2550
    %v2598 = vunpack.c.l.b16 %v2551
    %v2599 = vunpack.c.h.b16 %v2551
    %v2600 = vunpack.c.l.b16 %v2552
    %v2601 = vunpack.c.h.b16 %v2552
    %v2602 = vunpack.c.l.b16 %v2553
    %v2603 = vunpack.c.h.b16 %v2553
    %v2604 = vunpack.c.l.b16 %v2554
    %v2605 = vunpack.c.h.b16 %v2554
    %v2606 = vunpack.c.l.b16 %v2555
    %v2607 = vunpack.c.h.b16 %v2555
    %v2608 = vunpack.c.l.b16 %v2556
    %v2609 = vunpack.c.h.b16 %v2556
    %v2610 = vunpack.c.l.b16 %v2557
    %v2611 = vunpack.c.h.b16 %v2557
    %v2612 = vunpack.c.l.b16 %v2558
    %v2613 = vunpack.c.h.b16 %v2558
    %v2614 = vunpack.c.l.b16 %v2559
    %v2615 = vunpack.c.h.b16 %v2559
    %v2616 = vunpack.c.l.b16 %v2560
    %v2617 = vunpack.c.h.b16 %v2560
    %v2618 = vunpack.c.l.b16 %v2561
    %v2619 = vunpack.c.h.b16 %v2561
    %v2620 = vunpack.c.l.b16 %v2562
    %v2621 = vunpack.c.h.b16 %v2562
    %v2622 = vunpack.c.l.b16 %v2563
    %v2623 = vunpack.c.h.b16 %v2563
    %v2624 = vunpack.c.l.b16 %v2564
    %v2625 = vunpack.c.h.b16 %v2564
    %v2626 = vunpack.c.l.b16 %v2565
    %v2627 = vunpack.c.h.b16 %v2565
    %v2628 = vpack.c.b16 %v2598, %v2596
    %v2629 = vpack.c.b16 %v2599, %v2597
    %v2630 = vpack.c.b16 %v2602, %v2600
    %v2631 = vpack.c.b16 %v2603, %v2601
    %v2632 = vpack.c.b16 %v2606, %v2604
    %v2633 = vpack.c.b16 %v2607, %v2605
    %v2634 = vpack.c.b16 %v2610, %v2608
    %v2635 = vpack.c.b16 %v2611, %v2609
    %v2636 = vpack.c.b16 %v2614, %v2612
    %v2637 = vpack.c.b16 %v2615, %v2613
    %v2638 = vpack.c.b16 %v2618, %v2616
    %v2639 = vpack.c.b16 %v2619, %v2617
    %v2640 = vpack.c.b16 %v2622, %v2620
    %v2641 = vpack.c.b16 %v2623, %v2621
    %v2642 = vpack.c.b16 %v2626, %v2624
    %v2643 = vpack.c.b16 %v2627, %v2625
    %2660 = vmatprep.subr.bf16.mxu0 %v2629
    %2661 = vmatpush1.bf16.msra.mxu0 %v2628
    %2662 = vmatprep.subr.bf16.mxu0 %v2631
    %2663 = vmatpush1.bf16.msra.mxu0 %v2630
    %2664 = vmatprep.subr.bf16.mxu0 %v2633
    %2665 = vmatpush1.bf16.msra.mxu0 %v2632
    %2666 = vmatprep.subr.bf16.mxu0 %v2635
    %2667 = vmatpush1.bf16.msra.mxu0 %v2634
    %2668 = vmatprep.subr.bf16.mxu0 %v2637
    %2669 = vmatpush1.bf16.msra.mxu0 %v2636
    %2670 = vmatprep.subr.bf16.mxu0 %v2639
    %2671 = vmatpush1.bf16.msra.mxu0 %v2638
    %2672 = vmatprep.subr.bf16.mxu0 %v2641
    %2673 = vmatpush1.bf16.msra.mxu0 %v2640
    %2674 = vmatprep.subr.bf16.mxu0 %v2643
    %2675 = vmatpush1.bf16.msra.mxu0 %v2642
    %2676 = vmatprep.subr.bf16.mxu0 0
    %2677 = vmatpush1.bf16.msra.mxu0 0
    %2678 = vmatprep.subr.bf16.mxu0 0
    %2679 = vmatpush1.bf16.msra.mxu0 0
    %2680 = vmatprep.subr.bf16.mxu0 0
    %2681 = vmatpush1.bf16.msra.mxu0 0
    %2682 = vmatprep.subr.bf16.mxu0 0
    %2683 = vmatpush1.bf16.msra.mxu0 0
    %2684 = vmatprep.subr.bf16.mxu0 0
    %2685 = vmatpush1.bf16.msra.mxu0 0
    %2686 = vmatprep.subr.bf16.mxu0 0
    %2687 = vmatpush1.bf16.msra.mxu0 0
    %2688 = vmatprep.subr.bf16.mxu0 0
    %2689 = vmatpush1.bf16.msra.mxu0 0
    %2690 = vmatprep.subr.bf16.mxu0 0
    %2691 = vmatpush1.bf16.msra.mxu0 0
    %2692 = vmatprep.mubr.bf16.mxu0 0
    %2693 = vmatmul.mubr.bf16.gmra.mrb[0].mxu0 %v2568
    %v2694 = vpop.f32.mrb[0].mxu0
    %v2695 = vadd.f32 %v2573, %v2694
    %v2696 = vpop.f32.mrb[0].mxu0
    %v2697 = vadd.f32 %v2577, %v2696
    %v2698 = vpop.f32.mrb[0].mxu0
    %v2699 = vpop.f32.mrb[0].mxu0
    %2700 = vdwg.mxu0
    %v2701 = vadd.f32 %v2542, %v2695
    %v2702 = vsub.f32 0.0, %v2701
    %v2703 = vmul.f32 %v2702, 1.442695
    %v2704 = vpow.pop %v2703
    %v2705 = vadd.f32 %v2704, 1.0
    %v2706 = vrcp.pop %v2705
    %v2707 = vadd.f32 %v2544, %v2697
    %v2708 = vsub.f32 0.0, %v2707
    %v2709 = vmul.f32 %v2708, 1.442695
    %v2710 = vpow.pop %v2709
    %v2711 = vadd.f32 %v2710, 1.0
    %v2712 = vrcp.pop %v2711
    %2713 = vrot.lane.b32.xlu0 %v2706, 64
    %v2714 = vpop.permute.xlu0 %2713
    %v2715 = vmul.f32 %v2714, %v2695
    %v2716 = vadd.f32 %v2542, %v2715
    %v2717 = vtanh.pop %v2716
    %2718 = vrot.lane.b32.xlu0 %v2717, 64
    %v2719 = vpop.permute.xlu0 %2718
    %v2720 = vsub.f32 1.0, %v2712
    %v2721 = vmul.f32 %v2720, %v2719
    %v2722 = vmul.f32 %v2712, %v2567
    %v2723 = vadd.f32 %v2721, %v2722
    %v2724 = vsel %vm2385, 1, 0
    %vm2725 = vcmp.eq.s32.totalorder %v2724, 1
    %v2726 = vsel %vm2725, %v2723, 0.0
    %2727 = vst [vmem:[%s8] sm:$0xff] %v2726
    %v2728 = vpack.c.bf16 %v2726, %v2726
    %2729 = vmatprep.subr.bf16.mxu0 %v2629
    %2730 = vmatpush1.bf16.msra.mxu0 %v2628
    %2731 = vmatprep.subr.bf16.mxu0 %v2631
    %2732 = vmatpush1.bf16.msra.mxu0 %v2630
    %2733 = vmatprep.subr.bf16.mxu0 %v2633
    %2734 = vmatpush1.bf16.msra.mxu0 %v2632
    %2735 = vmatprep.subr.bf16.mxu0 %v2635
    %2736 = vmatpush1.bf16.msra.mxu0 %v2634
    %2737 = vmatprep.subr.bf16.mxu0 %v2637
    %2738 = vmatpush1.bf16.msra.mxu0 %v2636
    %2739 = vmatprep.subr.bf16.mxu0 %v2639
    %2740 = vmatpush1.bf16.msra.mxu0 %v2638
    %2741 = vmatprep.subr.bf16.mxu0 %v2641
    %2742 = vmatpush1.bf16.msra.mxu0 %v2640
    %2743 = vmatprep.subr.bf16.mxu0 %v2643
    %2744 = vmatpush1.bf16.msra.mxu0 %v2642
    %2745 = vmatprep.subr.bf16.mxu0 0
    %2746 = vmatpush1.bf16.msra.mxu0 0
    %2747 = vmatprep.subr.bf16.mxu0 0
    %2748 = vmatpush1.bf16.msra.mxu0 0
    %2749 = vmatprep.subr.bf16.mxu0 0
    %2750 = vmatpush1.bf16.msra.mxu0 0
    %2751 = vmatprep.subr.bf16.mxu0 0
    %2752 = vmatpush1.bf16.msra.mxu0 0
    %2753 = vmatprep.subr.bf16.mxu0 0
    %2754 = vmatpush1.bf16.msra.mxu0 0
    %2755 = vmatprep.subr.bf16.mxu0 0
    %2756 = vmatpush1.bf16.msra.mxu0 0
    %2757 = vmatprep.subr.bf16.mxu0 0
    %2758 = vmatpush1.bf16.msra.mxu0 0
    %2759 = vmatprep.subr.bf16.mxu0 0
    %2760 = vmatpush1.bf16.msra.mxu0 0
    %2761 = vmatprep.mubr.bf16.mxu0 0
    %2762 = vmatmul.mubr.bf16.gmra.mrb[0].mxu0 %v2728
    %v2763 = vpop.f32.mrb[0].mxu0
    %v2764 = vadd.f32 %v2573, %v2763
    %v2765 = vpop.f32.mrb[0].mxu0
    %v2766 = vadd.f32 %v2577, %v2765
    %v2767 = vpop.f32.mrb[0].mxu0
    %v2768 = vpop.f32.mrb[0].mxu0
    %2769 = vdwg.mxu0
    %v2770 = vadd.f32 %v2546, %v2764
    %v2771 = vsub.f32 0.0, %v2770
    %v2772 = vmul.f32 %v2771, 1.442695
    %v2773 = vpow.pop %v2772
    %v2774 = vadd.f32 %v2773, 1.0
    %v2775 = vrcp.pop %v2774
    %v2776 = vadd.f32 %v2548, %v2766
    %v2777 = vsub.f32 0.0, %v2776
    %v2778 = vmul.f32 %v2777, 1.442695
    %v2779 = vpow.pop %v2778
    %v2780 = vadd.f32 %v2779, 1.0
    %v2781 = vrcp.pop %v2780
    %2782 = vrot.lane.b32.xlu0 %v2775, 64
    %v2783 = vpop.permute.xlu0 %2782
    %v2784 = vmul.f32 %v2783, %v2764
    %v2785 = vadd.f32 %v2546, %v2784
    %v2786 = vtanh.pop %v2785
    %2787 = vrot.lane.b32.xlu0 %v2786, 64
    %v2788 = vpop.permute.xlu0 %2787
    %v2789 = vsub.f32 1.0, %v2781
    %v2790 = vmul.f32 %v2789, %v2788
    %v2791 = vmul.f32 %v2781, %v2726
    %v2792 = vadd.f32 %v2790, %v2791
    %v2793 = vsel %vm2725, %v2792, 0.0
    %2794 = vst [vmem:[%s8 + $0x8] sm:$0xff] %v2793
    %v2795 = vld [vmem:[%s8] sm:$0xff]
    %v2796 = vld [vmem:[%s8 + $0x8] sm:$0xff]
    %vm2797 = vcmp.ge.f32.partialorder %v2795, 0.0
    %vm2798 = vcmp.ge.f32.partialorder %v2796, 0.0
    %v2799 = vstv %s61
    %v2800 = vmul.f32 %v2799, %v2795
    %v2801 = vmul.f32 %v2799, %v2796
    %v2802 = vsel %vm2797, %v2795, %v2800
    %v2803 = vsel %vm2798, %v2796, %v2801
    %v2804 = vpack.c.bf16 %v2803, %v2802
    %v2805 = vld [vmem:[%s5 + $0x14] sm:$0xff]
    %v2806 = vld [vmem:[%s5 + $0x30] sm:$0xff]
    %v2807 = vld [vmem:[%s5 + $0x4c] sm:$0xff]
    %v2808 = vld [vmem:[%s5 + $0x68] sm:$0xff]
    %v2809 = vld [vmem:[%s5 + $0x84] sm:$0xff]
    %v2810 = vld [vmem:[%s5 + $0xa0] sm:$0xff]
    %v2811 = vld [vmem:[%s5 + $0xbc] sm:$0xff]
    %v2812 = vld [vmem:[%s5 + $0xd8] sm:$0xff]
    %v2813 = vld [vmem:[%s5 + $0xf4] sm:$0xff]
    %v2814 = vld [vmem:[%s5 + $0x110] sm:$0xff]
    %v2815 = vld [vmem:[%s5 + $0x12c] sm:$0xff]
    %v2816 = vld [vmem:[%s5 + $0x148] sm:$0xff]
    %v2817 = vld [vmem:[%s5 + $0x164] sm:$0xff]
    %v2818 = vld [vmem:[%s5 + $0x180] sm:$0xff]
    %v2819 = vld [vmem:[%s5 + $0x19c] sm:$0xff]
    %v2820 = vld [vmem:[%s5 + $0x1b8] sm:$0xff]
    %v2821 = vld [vmem:[%s6 + $0xf] sm:$0x3]
    %v2823 = vlaneseq
    %v2824 = vshrl.u32 %v2823, 7
    %v2825 = vsub.s32 0, %v2824
    %v2826 = vrot.slane %v2821, %v2825
    %v2827 = vlaneseq
    %v2828 = vshrl.u32 %v2827, 7
    %v2829 = vsub.s32 1, %v2828
    %v2830 = vrot.slane %v2821, %v2829
    %v2849 = vunpack.c.l.b16 %v2805
    %v2850 = vunpack.c.h.b16 %v2805
    %v2851 = vunpack.c.l.b16 %v2806
    %v2852 = vunpack.c.h.b16 %v2806
    %v2853 = vunpack.c.l.b16 %v2807
    %v2854 = vunpack.c.h.b16 %v2807
    %v2855 = vunpack.c.l.b16 %v2808
    %v2856 = vunpack.c.h.b16 %v2808
    %v2857 = vunpack.c.l.b16 %v2809
    %v2858 = vunpack.c.h.b16 %v2809
    %v2859 = vunpack.c.l.b16 %v2810
    %v2860 = vunpack.c.h.b16 %v2810
    %v2861 = vunpack.c.l.b16 %v2811
    %v2862 = vunpack.c.h.b16 %v2811
    %v2863 = vunpack.c.l.b16 %v2812
    %v2864 = vunpack.c.h.b16 %v2812
    %v2865 = vunpack.c.l.b16 %v2813
    %v2866 = vunpack.c.h.b16 %v2813
    %v2867 = vunpack.c.l.b16 %v2814
    %v2868 = vunpack.c.h.b16 %v2814
    %v2869 = vunpack.c.l.b16 %v2815
    %v2870 = vunpack.c.h.b16 %v2815
    %v2871 = vunpack.c.l.b16 %v2816
    %v2872 = vunpack.c.h.b16 %v2816
    %v2873 = vunpack.c.l.b16 %v2817
    %v2874 = vunpack.c.h.b16 %v2817
    %v2875 = vunpack.c.l.b16 %v2818
    %v2876 = vunpack.c.h.b16 %v2818
    %v2877 = vunpack.c.l.b16 %v2819
    %v2878 = vunpack.c.h.b16 %v2819
    %v2879 = vunpack.c.l.b16 %v2820
    %v2880 = vunpack.c.h.b16 %v2820
    %v2881 = vpack.c.b16 %v2851, %v2849
    %v2882 = vpack.c.b16 %v2852, %v2850
    %v2883 = vpack.c.b16 %v2855, %v2853
    %v2884 = vpack.c.b16 %v2856, %v2854
    %v2885 = vpack.c.b16 %v2859, %v2857
    %v2886 = vpack.c.b16 %v2860, %v2858
    %v2887 = vpack.c.b16 %v2863, %v2861
    %v2888 = vpack.c.b16 %v2864, %v2862
    %v2889 = vpack.c.b16 %v2867, %v2865
    %v2890 = vpack.c.b16 %v2868, %v2866
    %v2891 = vpack.c.b16 %v2871, %v2869
    %v2892 = vpack.c.b16 %v2872, %v2870
    %v2893 = vpack.c.b16 %v2875, %v2873
    %v2894 = vpack.c.b16 %v2876, %v2874
    %v2895 = vpack.c.b16 %v2879, %v2877
    %v2896 = vpack.c.b16 %v2880, %v2878
    %2913 = vmatprep.subr.bf16.mxu0 %v2882
    %2914 = vmatpush1.bf16.msra.mxu0 %v2881
    %2915 = vmatprep.subr.bf16.mxu0 %v2884
    %2916 = vmatpush1.bf16.msra.mxu0 %v2883
    %2917 = vmatprep.subr.bf16.mxu0 %v2886
    %2918 = vmatpush1.bf16.msra.mxu0 %v2885
    %2919 = vmatprep.subr.bf16.mxu0 %v2888
    %2920 = vmatpush1.bf16.msra.mxu0 %v2887
    %2921 = vmatprep.subr.bf16.mxu0 %v2890
    %2922 = vmatpush1.bf16.msra.mxu0 %v2889
    %2923 = vmatprep.subr.bf16.mxu0 %v2892
    %2924 = vmatpush1.bf16.msra.mxu0 %v2891
    %2925 = vmatprep.subr.bf16.mxu0 %v2894
    %2926 = vmatpush1.bf16.msra.mxu0 %v2893
    %2927 = vmatprep.subr.bf16.mxu0 %v2896
    %2928 = vmatpush1.bf16.msra.mxu0 %v2895
    %2929 = vmatprep.subr.bf16.mxu0 0
    %2930 = vmatpush1.bf16.msra.mxu0 0
    %2931 = vmatprep.subr.bf16.mxu0 0
    %2932 = vmatpush1.bf16.msra.mxu0 0
    %2933 = vmatprep.subr.bf16.mxu0 0
    %2934 = vmatpush1.bf16.msra.mxu0 0
    %2935 = vmatprep.subr.bf16.mxu0 0
    %2936 = vmatpush1.bf16.msra.mxu0 0
    %2937 = vmatprep.subr.bf16.mxu0 0
    %2938 = vmatpush1.bf16.msra.mxu0 0
    %2939 = vmatprep.subr.bf16.mxu0 0
    %2940 = vmatpush1.bf16.msra.mxu0 0
    %2941 = vmatprep.subr.bf16.mxu0 0
    %2942 = vmatpush1.bf16.msra.mxu0 0
    %2943 = vmatprep.subr.bf16.mxu0 0
    %2944 = vmatpush1.bf16.msra.mxu0 0
    %2945 = vmatprep.mubr.bf16.mxu0 0
    %2946 = vmatmul.mubr.bf16.gmra.mrb[0].mxu0 %v2804
    %v2947 = vpop.f32.mrb[0].mxu0
    %v2948 = vadd.f32 %v2826, %v2947
    %v2949 = vpop.f32.mrb[0].mxu0
    %v2950 = vadd.f32 %v2830, %v2949
    %v2951 = vpop.f32.mrb[0].mxu0
    %v2952 = vadd.f32 %v2826, %v2951
    %v2953 = vpop.f32.mrb[0].mxu0
    %v2954 = vadd.f32 %v2830, %v2953
    %2955 = vdwg.mxu0
    %v2956 = vmax.f32 %v2950, 0.0
    %v2957 = vmax.f32 %v2954, 0.0
    %v2958 = vand.u32 2147483647, %v2950
    %v2959 = vand.u32 2147483647, %v2954
    %v2960 = vsub.f32 0.0, %v2958
    %v2961 = vsub.f32 0.0, %v2959
    %v2962 = vmul.f32 %v2960, 1.442695
    %v2963 = vpow.pop %v2962
    %v2964 = vmul.f32 %v2961, 1.442695
    %v2965 = vpow.pop %v2964
    %v2966 = vadd.f32 %v2963, 1.0
    %v2967 = vlog2.pop %v2966
    %v2968 = vmul.f32 %v2967, 0.6931472
    %v2969 = vmul.f32 -0.5, %v2963
    %v2970 = vadd.f32 %v2969, 1.0
    %v2971 = vmul.f32 %v2970, %v2963
    %v2972 = vand.u32 2147483647, %v2963
    %vm2973 = vcmp.lt.f32.partialorder %v2972, 0.0004427343
    %v2974 = vsel %vm2973, %v2971, %v2968
    %v2975 = vadd.f32 %v2965, 1.0
    %v2976 = vlog2.pop %v2975
    %v2977 = vmul.f32 %v2976, 0.6931472
    %v2978 = vmul.f32 -0.5, %v2965
    %v2979 = vadd.f32 %v2978, 1.0
    %v2980 = vmul.f32 %v2979, %v2965
    %v2981 = vand.u32 2147483647, %v2965
    %vm2982 = vcmp.lt.f32.partialorder %v2981, 0.0004427343
    %v2983 = vsel %vm2982, %v2980, %v2977
    %v2984 = vadd.f32 %v2956, %v2974
    %v2985 = vadd.f32 %v2957, %v2983
    %v2986 = vstv %s62
    %v2987 = vmax.f32 %v2986, %v2984
    %v2988 = vmax.f32 %v2986, %v2985
    %v2989 = vstv %s63
    %v2990 = vmin.f32 %v2989, %v2987
    %v2991 = vmin.f32 %v2989, %v2988
    %v2992 = vmul.f32 %v70, %v2990
    %v2993 = vmul.f32 %v73, %v2991
    %v2994 = vadd.f32 %v2948, %v2992
    %v2995 = vadd.f32 %v2952, %v2993
    %v2996 = vtanh.pop %v2994
    %v2997 = vtanh.pop %v2995
    %v2998 = vmul.f32 %v70, -0.5
    %v2999 = vmul.f32 %v73, -0.5
    %v3000 = vmul.f32 %v2998, %v70
    %v3001 = vmul.f32 %v2999, %v73
    %v3002 = vlog2.pop %v2990
    %v3003 = vmul.f32 %v3002, 0.6931472
    %v3004 = vlog2.pop %v2991
    %v3005 = vmul.f32 %v3004, 0.6931472
    %v3006 = vsub.f32 %v3000, %v3003
    %v3007 = vsub.f32 %v3001, %v3005
    %v3008 = vsub.f32 %v3006, 0.9189385
    %v3009 = vsub.f32 %v3007, 0.9189385
    %v3010 = vmul.f32 %v2996, %v2996
    %v3011 = vmul.f32 %v2997, %v2997
    %v3012 = vsub.f32 1.0, %v3010
    %v3013 = vsub.f32 1.0, %v3011
    %v3014 = vadd.f32 %v3012, 1e-06
    %v3015 = vadd.f32 %v3013, 1e-06
    %v3016 = vlog2.pop %v3014
    %v3017 = vmul.f32 %v3016, 0.6931472
    %v3018 = vlog2.pop %v3015
    %v3019 = vmul.f32 %v3018, 0.6931472
    %v3020 = vsub.f32 %v3008, %v3017
    %v3021 = vsub.f32 %v3009, %v3019
    %vm3022 = vcmp.lt.s32.totalorder %v67, 2
    %v3023 = vsel %vm3022, 1, 0
    %vm3024 = vcmp.eq.s32.totalorder %v3023, 1
    %v3025 = vsel %vm3024, %v3020, 0.0
    %v3026 = vsel %vm3024, %v3021, 0.0
    %3027 = vadd.xlane.f32.xlu0 %v3025
    %v3028 = vpop.xlane.xlu0 %3027
    %3029 = vadd.xlane.f32.xlu0 %v3026
    %v3030 = vpop.xlane.xlu0 %3029
    %v3031 = vmul.f32 %v3028, 0.5
    %v3032 = vmul.f32 %v3030, 0.5
    %v3033 = vsel %vm3024, %v2996, %v3031
    %v3034 = vsel %vm3024, %v2997, %v3032
    %3035 = vst [vmem:[%s7] sm:$0xff] %v3033
    %3036 = vst [vmem:[%s7 + $0x8] sm:$0xff] %v3034
    // Predicated region
    $region38: #{actor_forward.1} parent=1 // pred_check
      _
    $region39: #{actor_forward.1} parent=1 // pred_check_branch
      %3038 = sbr.rel (0) target = $region41
    $region40: #{actor_forward.1} parent=1 // pred_region
      _
    $region41: #{actor_forward.1} parent=1 // pred_fallthru
      _
    // Predicated region
    $region42: #{actor_forward.1} parent=1 // pred_check
      _
    $region43: #{actor_forward.1} parent=1 // pred_check_branch
      %3040 = sbr.rel (0) target = $region45
    $region44: #{actor_forward.1} parent=1 // pred_region
      _
    $region45: #{actor_forward.1} parent=1 // pred_fallthru
      _
    // Predicated region
    $region46: #{actor_forward.1} parent=1 // pred_check
      _
    $region47: #{actor_forward.1} parent=1 // pred_check_branch
      %3042 = sbr.rel (0) target = $region49
    $region48: #{actor_forward.1} parent=1 // pred_region
      _
    $region49: #{actor_forward.1} parent=1 // pred_fallthru
      _
    // Predicated region
    $region50: #{actor_forward.1} parent=1 // pred_check
      _
    $region51: #{actor_forward.1} parent=1 // pred_check_branch
      %3044 = sbr.rel (0) target = $region53
    $region52: #{actor_forward.1} parent=1 // pred_region
      _
    $region53: #{actor_forward.1} parent=1 // pred_fallthru
      _
    %3045 = vsyncpa [#allocation3], 1
    %3046 = vsyncpa [#allocation4], 1

</llo_original>
